<compile_context>
chip_gen: v5e
topology: v5e:2x2
jax: 0.10.0
libtpu: 0.0.40
codegen_flags: <defaults>
</compile_context>

<pallas_src>
import functools

import jax
import jax.numpy as jnp
from jax import lax
from jax.experimental import pallas as pl
from jax.experimental.pallas import tpu as pltpu

ALPHA = 0.2          # opt.args.alpha (GAT LeakyReLU slope)
V = 1.0              # student-t dof (self.v)
A_MIX = 0.5          # self.a (Parameter, constant-initialized to 0.5)
B_MIX = 1.0 - A_MIX  # self.b


# ----------------------------------------------------------------------------
# In-kernel helpers (traced inside the single fused kernel body)
# ----------------------------------------------------------------------------
def _linear(x, w, b, relu):
    y = jnp.dot(x, w, preferred_element_type=jnp.float32) + b
    if relu:
        y = jnp.maximum(y, 0.0)
    return y


def _gat_from_wh(wh, a_src, a_dst, adj, alpha, elu):
    """Dense GAT attention given precomputed Wh.

    a_src / a_dst are stored as (1, Fout) rows so the attention logits are
    VPU multiply + lane-reduce (no width-1 MXU matmul); the dst logits are
    materialized directly as a (1, N) row for a broadcasted add.
    """
    e_src = jnp.sum(wh * a_src, axis=-1, keepdims=True)        # (N, 1)
    e_dst = jnp.sum(wh * a_dst, axis=-1)[None, :]              # (1, N)
    e = e_src + e_dst                                          # (N, N)
    e = jnp.where(e > 0, e, alpha * e)                         # LeakyReLU
    e = jnp.where(adj > 0, e, jnp.full_like(e, -9e15))         # mask non-edges
    e = e - jnp.max(e, axis=-1, keepdims=True)                 # stable softmax
    p = jnp.exp(e)
    attn = p * pl.reciprocal(jnp.sum(p, axis=-1, keepdims=True), approx=True)
    out = jnp.dot(attn, wh, preferred_element_type=jnp.float32)
    if elu:
        # exp(min(out, 0)) avoids spurious overflow in the discarded branch.
        out = jnp.where(out > 0, out, jnp.exp(jnp.minimum(out, 0.0)) - 1.0)
    return out


def _gat(h, w, a_src, a_dst, adj, alpha, elu):
    wh = jnp.dot(h, w, preferred_element_type=jnp.float32)
    return _gat_from_wh(wh, a_src, a_dst, adj, alpha, elu)


def _gram_sigmoid(z):
    # z @ z.T without an explicit transpose: contract the feature dims.
    g = lax.dot_general(z, z, (((1,), (1,)), ((), ())),
                        preferred_element_type=jnp.float32)
    return jax.nn.sigmoid(g)


def _soft_assign(z, c, v):
    """Student-t soft assignment, row-normalized."""
    z2 = jnp.sum(z * z, axis=-1, keepdims=True)                # (N, 1)
    c2 = jnp.sum(c * c, axis=-1)[None, :]                      # (1, K)
    zc = lax.dot_general(z, c, (((1,), (1,)), ((), ())),
                         preferred_element_type=jnp.float32)   # (N, K)
    d2 = jnp.maximum(z2 + c2 - 2.0 * zc, 0.0)                  # clamp fp rounding
    q = pl.reciprocal(1.0 + d2 * (1.0 / v), approx=True)
    expo = (v + 1.0) / 2.0
    if expo != 1.0:                                            # v == 1 -> pow is a no-op
        q = q ** expo
    q = q * pl.reciprocal(jnp.sum(q, axis=-1, keepdims=True), approx=True)
    return q


# ----------------------------------------------------------------------------
# Single fused kernel for the whole forward pass
# ----------------------------------------------------------------------------
def _combine_fused_kernel(*refs, n_enc1, alpha, v):
    (x_ref, adj_ref,
     enc1_w_cat_ref, ae_enc1_b_ref,
     ae_enc2_w_ref, ae_enc2_b_ref,
     ae_enc3_w_ref, ae_enc3_b_ref,
     ae_z_w_ref, ae_z_b_ref,
     ae_dec1_w_ref, ae_dec1_b_ref,
     ae_dec2_w_ref, ae_dec2_b_ref,
     ae_dec3_w_ref, ae_dec3_b_ref,
     ae_xbar_w_ref, ae_xbar_b_ref,
     g_e1_as_ref, g_e1_ad_ref,
     g_e2_w_ref, g_e2_as_ref, g_e2_ad_ref,
     g_e3_w_ref, g_e3_as_ref, g_e3_ad_ref,
     g_z_w_ref, g_z_as_ref, g_z_ad_ref,
     g_d1_w_ref, g_d1_as_ref, g_d1_ad_ref,
     g_d2_w_ref, g_d2_as_ref, g_d2_ad_ref,
     g_d3_w_ref, g_d3_as_ref, g_d3_ad_ref,
     g_xb_w_ref, g_xb_as_ref, g_xb_ad_ref,
     cluster_ref,
     h_hat_ref, adj_hat_ae_ref, z_gat_hat_ref, z_gat_adj_ref, adj_hat_ref,
     z_ae_ref, z_gat_ref, z_ref, q_h_ref, q_z_ref) = refs

    x = x_ref[...]
    adj = adj_ref[...]          # loaded into VMEM once, reused by all 8 GAT layers

    # --- fused first layer: one 2*n_enc1-lane matmul feeds both AE-enc1 and
    #     GAT-enc1 (they consume the same input x) -> wider, lane-dense MXU pass.
    wh_cat = jnp.dot(x, enc1_w_cat_ref[...], preferred_element_type=jnp.float32)
    h1 = jnp.maximum(wh_cat[:, :n_enc1] + ae_enc1_b_ref[...], 0.0)
    wh_g1 = wh_cat[:, n_enc1:]

    # --- AE encoder -> z_ae
    h2 = _linear(h1, ae_enc2_w_ref[...], ae_enc2_b_ref[...], relu=True)
    h3 = _linear(h2, ae_enc3_w_ref[...], ae_enc3_b_ref[...], relu=True)
    z_ae = _linear(h3, ae_z_w_ref[...], ae_z_b_ref[...], relu=False)

    # --- GAT encoder -> z_gat
    g1 = _gat_from_wh(wh_g1, g_e1_as_ref[...], g_e1_ad_ref[...], adj, alpha, elu=True)
    g2 = _gat(g1, g_e2_w_ref[...], g_e2_as_ref[...], g_e2_ad_ref[...], adj, alpha, elu=True)
    g3 = _gat(g2, g_e3_w_ref[...], g_e3_as_ref[...], g_e3_ad_ref[...], adj, alpha, elu=True)
    z_gat = _gat(g3, g_z_w_ref[...], g_z_as_ref[...], g_z_ad_ref[...], adj, alpha, elu=False)

    # --- GAT decoder -> z_gat_hat; adjacency decode from z_gat
    d1 = _gat(z_gat, g_d1_w_ref[...], g_d1_as_ref[...], g_d1_ad_ref[...], adj, alpha, elu=True)
    d2 = _gat(d1, g_d2_w_ref[...], g_d2_as_ref[...], g_d2_ad_ref[...], adj, alpha, elu=True)
    d3 = _gat(d2, g_d3_w_ref[...], g_d3_as_ref[...], g_d3_ad_ref[...], adj, alpha, elu=True)
    z_gat_hat = _gat(d3, g_xb_w_ref[...], g_xb_as_ref[...], g_xb_ad_ref[...], adj, alpha,
                     elu=False)
    z_gat_adj = _gram_sigmoid(z_gat)

    # --- embedding fusion: z = a * z_ae + b * z_gat
    z = A_MIX * z_ae + B_MIX * z_gat

    # --- AE decoder on z_ae -> h_hat
    dh1 = _linear(z_ae, ae_dec1_w_ref[...], ae_dec1_b_ref[...], relu=True)
    dh2 = _linear(dh1, ae_dec2_w_ref[...], ae_dec2_b_ref[...], relu=True)
    dh3 = _linear(dh2, ae_dec3_w_ref[...], ae_dec3_b_ref[...], relu=True)
    h_hat = _linear(dh3, ae_xbar_w_ref[...], ae_xbar_b_ref[...], relu=False)

    # --- adjacency reconstructions
    adj_hat_ae = _gram_sigmoid(z_ae)
    adj_hat = _gram_sigmoid(z)

    # --- student-t soft assignments
    c = cluster_ref[...]
    q_h = _soft_assign(z_ae, c, v)
    q_z = _soft_assign(z, c, v)

    # --- write outputs
    h_hat_ref[...] = h_hat
    adj_hat_ae_ref[...] = adj_hat_ae
    z_gat_hat_ref[...] = z_gat_hat
    z_gat_adj_ref[...] = z_gat_adj
    adj_hat_ref[...] = adj_hat
    z_ae_ref[...] = z_ae
    z_gat_ref[...] = z_gat
    z_ref[...] = z
    q_h_ref[...] = q_h
    q_z_ref[...] = q_z


# ----------------------------------------------------------------------------
# Parameters (deterministic, in-script)
# ----------------------------------------------------------------------------
class KeyGen:
    def __init__(self, key):
        self.key = key

    def __call__(self):
        self.key, sub = jax.random.split(self.key)
        return sub


def glorot(key, shape):
    fan_in, fan_out = shape[0], shape[-1]
    scale = jnp.sqrt(2.0 / (fan_in + fan_out))
    return (scale * jax.random.normal(key, shape)).astype(jnp.float32)


def init_params(key, n_input, n_enc, n_dec, n_z, n_clusters):
    kg = KeyGen(key)
    p = {}
    enc_dims = [n_input] + list(n_enc) + [n_z]
    dec_dims = [n_z] + list(n_dec) + [n_input]

    # AE encoder / decoder (Linear + ReLU stacks)
    for i, name in enumerate(["enc1", "enc2", "enc3", "z"]):
        fi, fo = enc_dims[i], enc_dims[i + 1]
        p[f"ae_{name}_w"] = glorot(kg(), (fi, fo))
        p[f"ae_{name}_b"] = jnp.zeros((1, fo), jnp.float32)
    for i, name in enumerate(["dec1", "dec2", "dec3", "xbar"]):
        fi, fo = dec_dims[i], dec_dims[i + 1]
        p[f"ae_{name}_w"] = glorot(kg(), (fi, fo))
        p[f"ae_{name}_b"] = jnp.zeros((1, fo), jnp.float32)

    # GAT autoencoder: weight matrix + attention vector split into src/dst,
    # stored as (1, fo) rows so the kernel can use VPU reductions directly.
    for i, name in enumerate(["enc1", "enc2", "enc3", "z"]):
        fi, fo = enc_dims[i], enc_dims[i + 1]
        p[f"gat_{name}_w"] = glorot(kg(), (fi, fo))
        p[f"gat_{name}_asrc"] = glorot(kg(), (1, fo))
        p[f"gat_{name}_adst"] = glorot(kg(), (1, fo))
    for i, name in enumerate(["dec1", "dec2", "dec3", "xbar"]):
        fi, fo = dec_dims[i], dec_dims[i + 1]
        p[f"gat_{name}_w"] = glorot(kg(), (fi, fo))
        p[f"gat_{name}_asrc"] = glorot(kg(), (1, fo))
        p[f"gat_{name}_adst"] = glorot(kg(), (1, fo))

    # cluster centers (xavier_normal in torch)
    p["cluster_layer"] = glorot(kg(), (n_clusters, n_z))
    return p


# ----------------------------------------------------------------------------
# Combine.forward — one pallas_call for the whole thing
# ----------------------------------------------------------------------------
def combine_forward(params, x, adj):
    p = params
    N, n_input = x.shape
    n_enc1 = p["ae_enc1_w"].shape[1]
    n_z = p["ae_z_w"].shape[1]
    n_clusters = p["cluster_layer"].shape[0]

    # Fuse the two first-layer weight matrices that share input x into one
    # lane-dense matmul operand (sliced back apart inside the kernel).
    enc1_w_cat = jnp.concatenate([p["ae_enc1_w"], p["gat_enc1_w"]], axis=1)

    inputs = (
        x, adj,
        enc1_w_cat, p["ae_enc1_b"],
        p["ae_enc2_w"], p["ae_enc2_b"],
        p["ae_enc3_w"], p["ae_enc3_b"],
        p["ae_z_w"], p["ae_z_b"],
        p["ae_dec1_w"], p["ae_dec1_b"],
        p["ae_dec2_w"], p["ae_dec2_b"],
        p["ae_dec3_w"], p["ae_dec3_b"],
        p["ae_xbar_w"], p["ae_xbar_b"],
        p["gat_enc1_asrc"], p["gat_enc1_adst"],
        p["gat_enc2_w"], p["gat_enc2_asrc"], p["gat_enc2_adst"],
        p["gat_enc3_w"], p["gat_enc3_asrc"], p["gat_enc3_adst"],
        p["gat_z_w"], p["gat_z_asrc"], p["gat_z_adst"],
        p["gat_dec1_w"], p["gat_dec1_asrc"], p["gat_dec1_adst"],
        p["gat_dec2_w"], p["gat_dec2_asrc"], p["gat_dec2_adst"],
        p["gat_dec3_w"], p["gat_dec3_asrc"], p["gat_dec3_adst"],
        p["gat_xbar_w"], p["gat_xbar_asrc"], p["gat_xbar_adst"],
        p["cluster_layer"],
    )

    out_shape = (
        jax.ShapeDtypeStruct((N, n_input), jnp.float32),      # h_hat
        jax.ShapeDtypeStruct((N, N), jnp.float32),            # adj_hat_ae
        jax.ShapeDtypeStruct((N, n_input), jnp.float32),      # z_gat_hat
        jax.ShapeDtypeStruct((N, N), jnp.float32),            # z_gat_adj
        jax.ShapeDtypeStruct((N, N), jnp.float32),            # adj_hat
        jax.ShapeDtypeStruct((N, n_z), jnp.float32),          # z_ae
        jax.ShapeDtypeStruct((N, n_z), jnp.float32),          # z_gat
        jax.ShapeDtypeStruct((N, n_z), jnp.float32),          # z
        jax.ShapeDtypeStruct((N, n_clusters), jnp.float32),   # q_h
        jax.ShapeDtypeStruct((N, n_clusters), jnp.float32),   # q_z
    )

    kernel = functools.partial(_combine_fused_kernel,
                               n_enc1=n_enc1, alpha=ALPHA, v=V)
    outs = pl.pallas_call(
        kernel,
        out_shape=out_shape,
        # No grid: whole arrays resident in VMEM, single kernel invocation,
        # no degenerate pipeline machinery.
        in_specs=[pl.BlockSpec(memory_space=pltpu.MemorySpace.VMEM)
                  for _ in inputs],
        out_specs=tuple(pl.BlockSpec(memory_space=pltpu.MemorySpace.VMEM)
                        for _ in out_shape),
    )(*inputs)

    (h_hat, adj_hat_ae, z_gat_hat, z_gat_adj, adj_hat,
     z_ae, z_gat, z, q_h, q_z) = outs
    return (h_hat, adj_hat_ae, z_gat_hat, z_gat_adj, None, adj_hat,
            z_ae, z_gat, z, q_h, q_z)


# ----------------------------------------------------------------------------
if __name__ == "__main__":
    N = 16          # number of graph nodes
    n_input = 32
    n_enc = (64, 32, 16)
    n_dec = (16, 32, 64)
    n_z = 8
    n_clusters = 4

    root = jax.random.PRNGKey(0)
    k_param, k_x, k_adj = jax.random.split(root, 3)

    x = jax.random.normal(k_x, (N, n_input), dtype=jnp.float32)

    a_rand = jax.random.uniform(k_adj, (N, N))
    adj = ((a_rand + a_rand.T) > 1.0).astype(jnp.float32)
    adj = jnp.minimum(adj + jnp.eye(N, dtype=jnp.float32), 1.0)  # symmetric + self loops

    params = init_params(k_param, n_input, n_enc, n_dec, n_z, n_clusters)

    fwd = jax.jit(combine_forward)
    outs = fwd(params, x, adj)
    jax.block_until_ready([o for o in outs if o is not None])
    print("KERNEL_OK")
</pallas_src>

<mosaic_0001>
module attributes {stable_mosaic.version = 11 : i64} {
  func.func @_combine_fused_kernel(%arg0: memref<16x32xf32, #tpu.memory_space<vmem>>, %arg1: memref<16x16xf32, #tpu.memory_space<vmem>>, %arg2: memref<32x128xf32, #tpu.memory_space<vmem>>, %arg3: memref<1x64xf32, #tpu.memory_space<vmem>>, %arg4: memref<64x32xf32, #tpu.memory_space<vmem>>, %arg5: memref<1x32xf32, #tpu.memory_space<vmem>>, %arg6: memref<32x16xf32, #tpu.memory_space<vmem>>, %arg7: memref<1x16xf32, #tpu.memory_space<vmem>>, %arg8: memref<16x8xf32, #tpu.memory_space<vmem>>, %arg9: memref<1x8xf32, #tpu.memory_space<vmem>>, %arg10: memref<8x16xf32, #tpu.memory_space<vmem>>, %arg11: memref<1x16xf32, #tpu.memory_space<vmem>>, %arg12: memref<16x32xf32, #tpu.memory_space<vmem>>, %arg13: memref<1x32xf32, #tpu.memory_space<vmem>>, %arg14: memref<32x64xf32, #tpu.memory_space<vmem>>, %arg15: memref<1x64xf32, #tpu.memory_space<vmem>>, %arg16: memref<64x32xf32, #tpu.memory_space<vmem>>, %arg17: memref<1x32xf32, #tpu.memory_space<vmem>>, %arg18: memref<1x64xf32, #tpu.memory_space<vmem>>, %arg19: memref<1x64xf32, #tpu.memory_space<vmem>>, %arg20: memref<64x32xf32, #tpu.memory_space<vmem>>, %arg21: memref<1x32xf32, #tpu.memory_space<vmem>>, %arg22: memref<1x32xf32, #tpu.memory_space<vmem>>, %arg23: memref<32x16xf32, #tpu.memory_space<vmem>>, %arg24: memref<1x16xf32, #tpu.memory_space<vmem>>, %arg25: memref<1x16xf32, #tpu.memory_space<vmem>>, %arg26: memref<16x8xf32, #tpu.memory_space<vmem>>, %arg27: memref<1x8xf32, #tpu.memory_space<vmem>>, %arg28: memref<1x8xf32, #tpu.memory_space<vmem>>, %arg29: memref<8x16xf32, #tpu.memory_space<vmem>>, %arg30: memref<1x16xf32, #tpu.memory_space<vmem>>, %arg31: memref<1x16xf32, #tpu.memory_space<vmem>>, %arg32: memref<16x32xf32, #tpu.memory_space<vmem>>, %arg33: memref<1x32xf32, #tpu.memory_space<vmem>>, %arg34: memref<1x32xf32, #tpu.memory_space<vmem>>, %arg35: memref<32x64xf32, #tpu.memory_space<vmem>>, %arg36: memref<1x64xf32, #tpu.memory_space<vmem>>, %arg37: memref<1x64xf32, #tpu.memory_space<vmem>>, %arg38: memref<64x32xf32, #tpu.memory_space<vmem>>, %arg39: memref<1x32xf32, #tpu.memory_space<vmem>>, %arg40: memref<1x32xf32, #tpu.memory_space<vmem>>, %arg41: memref<4x8xf32, #tpu.memory_space<vmem>>, %arg42: memref<16x32xf32, #tpu.memory_space<vmem>>, %arg43: memref<16x16xf32, #tpu.memory_space<vmem>>, %arg44: memref<16x32xf32, #tpu.memory_space<vmem>>, %arg45: memref<16x16xf32, #tpu.memory_space<vmem>>, %arg46: memref<16x16xf32, #tpu.memory_space<vmem>>, %arg47: memref<16x8xf32, #tpu.memory_space<vmem>>, %arg48: memref<16x8xf32, #tpu.memory_space<vmem>>, %arg49: memref<16x8xf32, #tpu.memory_space<vmem>>, %arg50: memref<16x4xf32, #tpu.memory_space<vmem>>, %arg51: memref<16x4xf32, #tpu.memory_space<vmem>>) attributes {dimension_semantics = [], scalar_prefetch = 0 : i64, scratch_operands = 0 : i64, tpu.core_type = #tpu.core_type<tc>} {
    %c0 = arith.constant 0 : index
    %c0_0 = arith.constant 0 : index
    %0 = vector.load %arg0[%c0, %c0_0] : memref<16x32xf32, #tpu.memory_space<vmem>>, vector<16x32xf32>
    %c0_1 = arith.constant 0 : index
    %c0_2 = arith.constant 0 : index
    %1 = vector.load %arg1[%c0_1, %c0_2] : memref<16x16xf32, #tpu.memory_space<vmem>>, vector<16x16xf32>
    %c0_3 = arith.constant 0 : index
    %c0_4 = arith.constant 0 : index
    %2 = vector.load %arg2[%c0_3, %c0_4] : memref<32x128xf32, #tpu.memory_space<vmem>>, vector<32x128xf32>
    %cst = arith.constant dense<0.000000e+00> : vector<16x128xf32>
    %3 = tpu.matmul %0, %2, %cst {dimension_numbers = #tpu.dot_dimension_numbers<[1], [0], [0], [1], [0, 0, 1, 1], [], []>} : vector<16x32xf32>, vector<32x128xf32>, vector<16x128xf32> -> vector<16x128xf32>
    %4 = vector.extract_strided_slice %3 {offsets = [0, 0], sizes = [16, 64], strides = [1, 1]} : vector<16x128xf32> to vector<16x64xf32>
    %c0_5 = arith.constant 0 : index
    %c0_6 = arith.constant 0 : index
    %5 = vector.load %arg3[%c0_5, %c0_6] : memref<1x64xf32, #tpu.memory_space<vmem>>, vector<1x64xf32>
    %6 = vector.broadcast %5 : vector<1x64xf32> to vector<16x64xf32>
    %7 = arith.addf %4, %6 : vector<16x64xf32>
    %cst_7 = arith.constant 0.000000e+00 : f32
    %8 = vector.broadcast %cst_7 : f32 to vector<16x64xf32>
    %9 = arith.maximumf %7, %8 : vector<16x64xf32>
    %10 = vector.extract_strided_slice %3 {offsets = [0, 64], sizes = [16, 64], strides = [1, 1]} : vector<16x128xf32> to vector<16x64xf32>
    %c0_8 = arith.constant 0 : index
    %c0_9 = arith.constant 0 : index
    %11 = vector.load %arg4[%c0_8, %c0_9] : memref<64x32xf32, #tpu.memory_space<vmem>>, vector<64x32xf32>
    %c0_10 = arith.constant 0 : index
    %c0_11 = arith.constant 0 : index
    %12 = vector.load %arg5[%c0_10, %c0_11] : memref<1x32xf32, #tpu.memory_space<vmem>>, vector<1x32xf32>
    %cst_12 = arith.constant dense<0.000000e+00> : vector<16x32xf32>
    %13 = tpu.matmul %9, %11, %cst_12 {dimension_numbers = #tpu.dot_dimension_numbers<[1], [0], [0], [1], [0, 0, 1, 1], [], []>} : vector<16x64xf32>, vector<64x32xf32>, vector<16x32xf32> -> vector<16x32xf32>
    %14 = vector.broadcast %12 : vector<1x32xf32> to vector<16x32xf32>
    %15 = arith.addf %13, %14 : vector<16x32xf32>
    %cst_13 = arith.constant 0.000000e+00 : f32
    %16 = vector.broadcast %cst_13 : f32 to vector<16x32xf32>
    %17 = arith.maximumf %15, %16 : vector<16x32xf32>
    %c0_14 = arith.constant 0 : index
    %c0_15 = arith.constant 0 : index
    %18 = vector.load %arg6[%c0_14, %c0_15] : memref<32x16xf32, #tpu.memory_space<vmem>>, vector<32x16xf32>
    %c0_16 = arith.constant 0 : index
    %c0_17 = arith.constant 0 : index
    %19 = vector.load %arg7[%c0_16, %c0_17] : memref<1x16xf32, #tpu.memory_space<vmem>>, vector<1x16xf32>
    %cst_18 = arith.constant dense<0.000000e+00> : vector<16x16xf32>
    %20 = tpu.matmul %17, %18, %cst_18 {dimension_numbers = #tpu.dot_dimension_numbers<[1], [0], [0], [1], [0, 0, 1, 1], [], []>} : vector<16x32xf32>, vector<32x16xf32>, vector<16x16xf32> -> vector<16x16xf32>
    %21 = vector.broadcast %19 : vector<1x16xf32> to vector<16x16xf32>
    %22 = arith.addf %20, %21 : vector<16x16xf32>
    %cst_19 = arith.constant 0.000000e+00 : f32
    %23 = vector.broadcast %cst_19 : f32 to vector<16x16xf32>
    %24 = arith.maximumf %22, %23 : vector<16x16xf32>
    %c0_20 = arith.constant 0 : index
    %c0_21 = arith.constant 0 : index
    %25 = vector.load %arg8[%c0_20, %c0_21] : memref<16x8xf32, #tpu.memory_space<vmem>>, vector<16x8xf32>
    %c0_22 = arith.constant 0 : index
    %c0_23 = arith.constant 0 : index
    %26 = vector.load %arg9[%c0_22, %c0_23] : memref<1x8xf32, #tpu.memory_space<vmem>>, vector<1x8xf32>
    %cst_24 = arith.constant dense<0.000000e+00> : vector<16x8xf32>
    %27 = tpu.matmul %24, %25, %cst_24 {dimension_numbers = #tpu.dot_dimension_numbers<[1], [0], [0], [1], [0, 0, 1, 1], [], []>} : vector<16x16xf32>, vector<16x8xf32>, vector<16x8xf32> -> vector<16x8xf32>
    %28 = vector.broadcast %26 : vector<1x8xf32> to vector<16x8xf32>
    %29 = arith.addf %27, %28 : vector<16x8xf32>
    %c0_25 = arith.constant 0 : index
    %c0_26 = arith.constant 0 : index
    %30 = vector.load %arg18[%c0_25, %c0_26] : memref<1x64xf32, #tpu.memory_space<vmem>>, vector<1x64xf32>
    %c0_27 = arith.constant 0 : index
    %c0_28 = arith.constant 0 : index
    %31 = vector.load %arg19[%c0_27, %c0_28] : memref<1x64xf32, #tpu.memory_space<vmem>>, vector<1x64xf32>
    %32 = vector.broadcast %30 : vector<1x64xf32> to vector<16x64xf32>
    %33 = arith.mulf %10, %32 : vector<16x64xf32>
    %cst_29 = arith.constant dense<0.000000e+00> : vector<16xf32>
    %34 = vector.multi_reduction <add>, %33, %cst_29 [1] : vector<16x64xf32> to vector<16xf32>
    %35 = vector.shape_cast %34 : vector<16xf32> to vector<16x1xf32>
    %36 = vector.broadcast %31 : vector<1x64xf32> to vector<16x64xf32>
    %37 = arith.mulf %10, %36 : vector<16x64xf32>
    %cst_30 = arith.constant dense<0.000000e+00> : vector<16xf32>
    %38 = vector.multi_reduction <add>, %37, %cst_30 [1] : vector<16x64xf32> to vector<16xf32>
    %39 = vector.shape_cast %38 : vector<16xf32> to vector<1x16xf32>
    %40 = vector.broadcast %35 : vector<16x1xf32> to vector<16x16xf32>
    %41 = vector.broadcast %39 : vector<1x16xf32> to vector<16x16xf32>
    %42 = arith.addf %40, %41 : vector<16x16xf32>
    %cst_31 = arith.constant 0.000000e+00 : f32
    %43 = vector.broadcast %cst_31 : f32 to vector<16x16xf32>
    %44 = arith.cmpf ogt, %42, %43 : vector<16x16xf32>
    %cst_32 = arith.constant 2.000000e-01 : f32
    %45 = vector.broadcast %cst_32 : f32 to vector<16x16xf32>
    %46 = arith.mulf %45, %42 : vector<16x16xf32>
    %47 = arith.select %44, %42, %46 : vector<16x16xi1>, vector<16x16xf32>
    %cst_33 = arith.constant 0.000000e+00 : f32
    %48 = vector.broadcast %cst_33 : f32 to vector<16x16xf32>
    %49 = arith.cmpf ogt, %1, %48 : vector<16x16xf32>
    %cst_34 = arith.constant -9.000000e+15 : f32
    %50 = vector.broadcast %cst_34 : f32 to vector<16x16xf32>
    %51 = arith.select %49, %47, %50 : vector<16x16xi1>, vector<16x16xf32>
    %cst_35 = arith.constant dense<0xFF800000> : vector<16xf32>
    %52 = vector.multi_reduction <maximumf>, %51, %cst_35 [1] : vector<16x16xf32> to vector<16xf32>
    %53 = vector.shape_cast %52 : vector<16xf32> to vector<16x1xf32>
    %54 = vector.broadcast %53 : vector<16x1xf32> to vector<16x16xf32>
    %55 = arith.subf %51, %54 : vector<16x16xf32>
    %56 = math.exp %55 : vector<16x16xf32>
    %cst_36 = arith.constant dense<0.000000e+00> : vector<16xf32>
    %57 = vector.multi_reduction <add>, %56, %cst_36 [1] : vector<16x16xf32> to vector<16xf32>
    %58 = vector.shape_cast %57 : vector<16xf32> to vector<16x1xf32>
    %59 = tpu.reciprocal %58 {approx = true} : vector<16x1xf32> -> vector<16x1xf32>
    %60 = vector.broadcast %59 : vector<16x1xf32> to vector<16x16xf32>
    %61 = arith.mulf %56, %60 : vector<16x16xf32>
    %cst_37 = arith.constant dense<0.000000e+00> : vector<16x64xf32>
    %62 = tpu.matmul %61, %10, %cst_37 {dimension_numbers = #tpu.dot_dimension_numbers<[1], [0], [0], [1], [0, 0, 1, 1], [], []>} : vector<16x16xf32>, vector<16x64xf32>, vector<16x64xf32> -> vector<16x64xf32>
    %cst_38 = arith.constant 0.000000e+00 : f32
    %63 = vector.broadcast %cst_38 : f32 to vector<16x64xf32>
    %64 = arith.cmpf ogt, %62, %63 : vector<16x64xf32>
    %cst_39 = arith.constant 0.000000e+00 : f32
    %65 = vector.broadcast %cst_39 : f32 to vector<16x64xf32>
    %66 = arith.minimumf %62, %65 : vector<16x64xf32>
    %67 = math.exp %66 : vector<16x64xf32>
    %cst_40 = arith.constant 1.000000e+00 : f32
    %68 = vector.broadcast %cst_40 : f32 to vector<16x64xf32>
    %69 = arith.subf %67, %68 : vector<16x64xf32>
    %70 = arith.select %64, %62, %69 : vector<16x64xi1>, vector<16x64xf32>
    %c0_41 = arith.constant 0 : index
    %c0_42 = arith.constant 0 : index
    %71 = vector.load %arg20[%c0_41, %c0_42] : memref<64x32xf32, #tpu.memory_space<vmem>>, vector<64x32xf32>
    %c0_43 = arith.constant 0 : index
    %c0_44 = arith.constant 0 : index
    %72 = vector.load %arg21[%c0_43, %c0_44] : memref<1x32xf32, #tpu.memory_space<vmem>>, vector<1x32xf32>
    %c0_45 = arith.constant 0 : index
    %c0_46 = arith.constant 0 : index
    %73 = vector.load %arg22[%c0_45, %c0_46] : memref<1x32xf32, #tpu.memory_space<vmem>>, vector<1x32xf32>
    %cst_47 = arith.constant dense<0.000000e+00> : vector<16x32xf32>
    %74 = tpu.matmul %70, %71, %cst_47 {dimension_numbers = #tpu.dot_dimension_numbers<[1], [0], [0], [1], [0, 0, 1, 1], [], []>} : vector<16x64xf32>, vector<64x32xf32>, vector<16x32xf32> -> vector<16x32xf32>
    %75 = vector.broadcast %72 : vector<1x32xf32> to vector<16x32xf32>
    %76 = arith.mulf %74, %75 : vector<16x32xf32>
    %cst_48 = arith.constant dense<0.000000e+00> : vector<16xf32>
    %77 = vector.multi_reduction <add>, %76, %cst_48 [1] : vector<16x32xf32> to vector<16xf32>
    %78 = vector.shape_cast %77 : vector<16xf32> to vector<16x1xf32>
    %79 = vector.broadcast %73 : vector<1x32xf32> to vector<16x32xf32>
    %80 = arith.mulf %74, %79 : vector<16x32xf32>
    %cst_49 = arith.constant dense<0.000000e+00> : vector<16xf32>
    %81 = vector.multi_reduction <add>, %80, %cst_49 [1] : vector<16x32xf32> to vector<16xf32>
    %82 = vector.shape_cast %81 : vector<16xf32> to vector<1x16xf32>
    %83 = vector.broadcast %78 : vector<16x1xf32> to vector<16x16xf32>
    %84 = vector.broadcast %82 : vector<1x16xf32> to vector<16x16xf32>
    %85 = arith.addf %83, %84 : vector<16x16xf32>
    %cst_50 = arith.constant 0.000000e+00 : f32
    %86 = vector.broadcast %cst_50 : f32 to vector<16x16xf32>
    %87 = arith.cmpf ogt, %85, %86 : vector<16x16xf32>
    %cst_51 = arith.constant 2.000000e-01 : f32
    %88 = vector.broadcast %cst_51 : f32 to vector<16x16xf32>
    %89 = arith.mulf %88, %85 : vector<16x16xf32>
    %90 = arith.select %87, %85, %89 : vector<16x16xi1>, vector<16x16xf32>
    %cst_52 = arith.constant 0.000000e+00 : f32
    %91 = vector.broadcast %cst_52 : f32 to vector<16x16xf32>
    %92 = arith.cmpf ogt, %1, %91 : vector<16x16xf32>
    %cst_53 = arith.constant -9.000000e+15 : f32
    %93 = vector.broadcast %cst_53 : f32 to vector<16x16xf32>
    %94 = arith.select %92, %90, %93 : vector<16x16xi1>, vector<16x16xf32>
    %cst_54 = arith.constant dense<0xFF800000> : vector<16xf32>
    %95 = vector.multi_reduction <maximumf>, %94, %cst_54 [1] : vector<16x16xf32> to vector<16xf32>
    %96 = vector.shape_cast %95 : vector<16xf32> to vector<16x1xf32>
    %97 = vector.broadcast %96 : vector<16x1xf32> to vector<16x16xf32>
    %98 = arith.subf %94, %97 : vector<16x16xf32>
    %99 = math.exp %98 : vector<16x16xf32>
    %cst_55 = arith.constant dense<0.000000e+00> : vector<16xf32>
    %100 = vector.multi_reduction <add>, %99, %cst_55 [1] : vector<16x16xf32> to vector<16xf32>
    %101 = vector.shape_cast %100 : vector<16xf32> to vector<16x1xf32>
    %102 = tpu.reciprocal %101 {approx = true} : vector<16x1xf32> -> vector<16x1xf32>
    %103 = vector.broadcast %102 : vector<16x1xf32> to vector<16x16xf32>
    %104 = arith.mulf %99, %103 : vector<16x16xf32>
    %cst_56 = arith.constant dense<0.000000e+00> : vector<16x32xf32>
    %105 = tpu.matmul %104, %74, %cst_56 {dimension_numbers = #tpu.dot_dimension_numbers<[1], [0], [0], [1], [0, 0, 1, 1], [], []>} : vector<16x16xf32>, vector<16x32xf32>, vector<16x32xf32> -> vector<16x32xf32>
    %cst_57 = arith.constant 0.000000e+00 : f32
    %106 = vector.broadcast %cst_57 : f32 to vector<16x32xf32>
    %107 = arith.cmpf ogt, %105, %106 : vector<16x32xf32>
    %cst_58 = arith.constant 0.000000e+00 : f32
    %108 = vector.broadcast %cst_58 : f32 to vector<16x32xf32>
    %109 = arith.minimumf %105, %108 : vector<16x32xf32>
    %110 = math.exp %109 : vector<16x32xf32>
    %cst_59 = arith.constant 1.000000e+00 : f32
    %111 = vector.broadcast %cst_59 : f32 to vector<16x32xf32>
    %112 = arith.subf %110, %111 : vector<16x32xf32>
    %113 = arith.select %107, %105, %112 : vector<16x32xi1>, vector<16x32xf32>
    %c0_60 = arith.constant 0 : index
    %c0_61 = arith.constant 0 : index
    %114 = vector.load %arg23[%c0_60, %c0_61] : memref<32x16xf32, #tpu.memory_space<vmem>>, vector<32x16xf32>
    %c0_62 = arith.constant 0 : index
    %c0_63 = arith.constant 0 : index
    %115 = vector.load %arg24[%c0_62, %c0_63] : memref<1x16xf32, #tpu.memory_space<vmem>>, vector<1x16xf32>
    %c0_64 = arith.constant 0 : index
    %c0_65 = arith.constant 0 : index
    %116 = vector.load %arg25[%c0_64, %c0_65] : memref<1x16xf32, #tpu.memory_space<vmem>>, vector<1x16xf32>
    %cst_66 = arith.constant dense<0.000000e+00> : vector<16x16xf32>
    %117 = tpu.matmul %113, %114, %cst_66 {dimension_numbers = #tpu.dot_dimension_numbers<[1], [0], [0], [1], [0, 0, 1, 1], [], []>} : vector<16x32xf32>, vector<32x16xf32>, vector<16x16xf32> -> vector<16x16xf32>
    %118 = vector.broadcast %115 : vector<1x16xf32> to vector<16x16xf32>
    %119 = arith.mulf %117, %118 : vector<16x16xf32>
    %cst_67 = arith.constant dense<0.000000e+00> : vector<16xf32>
    %120 = vector.multi_reduction <add>, %119, %cst_67 [1] : vector<16x16xf32> to vector<16xf32>
    %121 = vector.shape_cast %120 : vector<16xf32> to vector<16x1xf32>
    %122 = vector.broadcast %116 : vector<1x16xf32> to vector<16x16xf32>
    %123 = arith.mulf %117, %122 : vector<16x16xf32>
    %cst_68 = arith.constant dense<0.000000e+00> : vector<16xf32>
    %124 = vector.multi_reduction <add>, %123, %cst_68 [1] : vector<16x16xf32> to vector<16xf32>
    %125 = vector.shape_cast %124 : vector<16xf32> to vector<1x16xf32>
    %126 = vector.broadcast %121 : vector<16x1xf32> to vector<16x16xf32>
    %127 = vector.broadcast %125 : vector<1x16xf32> to vector<16x16xf32>
    %128 = arith.addf %126, %127 : vector<16x16xf32>
    %cst_69 = arith.constant 0.000000e+00 : f32
    %129 = vector.broadcast %cst_69 : f32 to vector<16x16xf32>
    %130 = arith.cmpf ogt, %128, %129 : vector<16x16xf32>
    %cst_70 = arith.constant 2.000000e-01 : f32
    %131 = vector.broadcast %cst_70 : f32 to vector<16x16xf32>
    %132 = arith.mulf %131, %128 : vector<16x16xf32>
    %133 = arith.select %130, %128, %132 : vector<16x16xi1>, vector<16x16xf32>
    %cst_71 = arith.constant 0.000000e+00 : f32
    %134 = vector.broadcast %cst_71 : f32 to vector<16x16xf32>
    %135 = arith.cmpf ogt, %1, %134 : vector<16x16xf32>
    %cst_72 = arith.constant -9.000000e+15 : f32
    %136 = vector.broadcast %cst_72 : f32 to vector<16x16xf32>
    %137 = arith.select %135, %133, %136 : vector<16x16xi1>, vector<16x16xf32>
    %cst_73 = arith.constant dense<0xFF800000> : vector<16xf32>
    %138 = vector.multi_reduction <maximumf>, %137, %cst_73 [1] : vector<16x16xf32> to vector<16xf32>
    %139 = vector.shape_cast %138 : vector<16xf32> to vector<16x1xf32>
    %140 = vector.broadcast %139 : vector<16x1xf32> to vector<16x16xf32>
    %141 = arith.subf %137, %140 : vector<16x16xf32>
    %142 = math.exp %141 : vector<16x16xf32>
    %cst_74 = arith.constant dense<0.000000e+00> : vector<16xf32>
    %143 = vector.multi_reduction <add>, %142, %cst_74 [1] : vector<16x16xf32> to vector<16xf32>
    %144 = vector.shape_cast %143 : vector<16xf32> to vector<16x1xf32>
    %145 = tpu.reciprocal %144 {approx = true} : vector<16x1xf32> -> vector<16x1xf32>
    %146 = vector.broadcast %145 : vector<16x1xf32> to vector<16x16xf32>
    %147 = arith.mulf %142, %146 : vector<16x16xf32>
    %cst_75 = arith.constant dense<0.000000e+00> : vector<16x16xf32>
    %148 = tpu.matmul %147, %117, %cst_75 {dimension_numbers = #tpu.dot_dimension_numbers<[1], [0], [0], [1], [0, 0, 1, 1], [], []>} : vector<16x16xf32>, vector<16x16xf32>, vector<16x16xf32> -> vector<16x16xf32>
    %cst_76 = arith.constant 0.000000e+00 : f32
    %149 = vector.broadcast %cst_76 : f32 to vector<16x16xf32>
    %150 = arith.cmpf ogt, %148, %149 : vector<16x16xf32>
    %cst_77 = arith.constant 0.000000e+00 : f32
    %151 = vector.broadcast %cst_77 : f32 to vector<16x16xf32>
    %152 = arith.minimumf %148, %151 : vector<16x16xf32>
    %153 = math.exp %152 : vector<16x16xf32>
    %cst_78 = arith.constant 1.000000e+00 : f32
    %154 = vector.broadcast %cst_78 : f32 to vector<16x16xf32>
    %155 = arith.subf %153, %154 : vector<16x16xf32>
    %156 = arith.select %150, %148, %155 : vector<16x16xi1>, vector<16x16xf32>
    %c0_79 = arith.constant 0 : index
    %c0_80 = arith.constant 0 : index
    %157 = vector.load %arg26[%c0_79, %c0_80] : memref<16x8xf32, #tpu.memory_space<vmem>>, vector<16x8xf32>
    %c0_81 = arith.constant 0 : index
    %c0_82 = arith.constant 0 : index
    %158 = vector.load %arg27[%c0_81, %c0_82] : memref<1x8xf32, #tpu.memory_space<vmem>>, vector<1x8xf32>
    %c0_83 = arith.constant 0 : index
    %c0_84 = arith.constant 0 : index
    %159 = vector.load %arg28[%c0_83, %c0_84] : memref<1x8xf32, #tpu.memory_space<vmem>>, vector<1x8xf32>
    %cst_85 = arith.constant dense<0.000000e+00> : vector<16x8xf32>
    %160 = tpu.matmul %156, %157, %cst_85 {dimension_numbers = #tpu.dot_dimension_numbers<[1], [0], [0], [1], [0, 0, 1, 1], [], []>} : vector<16x16xf32>, vector<16x8xf32>, vector<16x8xf32> -> vector<16x8xf32>
    %161 = vector.broadcast %158 : vector<1x8xf32> to vector<16x8xf32>
    %162 = arith.mulf %160, %161 : vector<16x8xf32>
    %cst_86 = arith.constant dense<0.000000e+00> : vector<16xf32>
    %163 = vector.multi_reduction <add>, %162, %cst_86 [1] : vector<16x8xf32> to vector<16xf32>
    %164 = vector.shape_cast %163 : vector<16xf32> to vector<16x1xf32>
    %165 = vector.broadcast %159 : vector<1x8xf32> to vector<16x8xf32>
    %166 = arith.mulf %160, %165 : vector<16x8xf32>
    %cst_87 = arith.constant dense<0.000000e+00> : vector<16xf32>
    %167 = vector.multi_reduction <add>, %166, %cst_87 [1] : vector<16x8xf32> to vector<16xf32>
    %168 = vector.shape_cast %167 : vector<16xf32> to vector<1x16xf32>
    %169 = vector.broadcast %164 : vector<16x1xf32> to vector<16x16xf32>
    %170 = vector.broadcast %168 : vector<1x16xf32> to vector<16x16xf32>
    %171 = arith.addf %169, %170 : vector<16x16xf32>
    %cst_88 = arith.constant 0.000000e+00 : f32
    %172 = vector.broadcast %cst_88 : f32 to vector<16x16xf32>
    %173 = arith.cmpf ogt, %171, %172 : vector<16x16xf32>
    %cst_89 = arith.constant 2.000000e-01 : f32
    %174 = vector.broadcast %cst_89 : f32 to vector<16x16xf32>
    %175 = arith.mulf %174, %171 : vector<16x16xf32>
    %176 = arith.select %173, %171, %175 : vector<16x16xi1>, vector<16x16xf32>
    %cst_90 = arith.constant 0.000000e+00 : f32
    %177 = vector.broadcast %cst_90 : f32 to vector<16x16xf32>
    %178 = arith.cmpf ogt, %1, %177 : vector<16x16xf32>
    %cst_91 = arith.constant -9.000000e+15 : f32
    %179 = vector.broadcast %cst_91 : f32 to vector<16x16xf32>
    %180 = arith.select %178, %176, %179 : vector<16x16xi1>, vector<16x16xf32>
    %cst_92 = arith.constant dense<0xFF800000> : vector<16xf32>
    %181 = vector.multi_reduction <maximumf>, %180, %cst_92 [1] : vector<16x16xf32> to vector<16xf32>
    %182 = vector.shape_cast %181 : vector<16xf32> to vector<16x1xf32>
    %183 = vector.broadcast %182 : vector<16x1xf32> to vector<16x16xf32>
    %184 = arith.subf %180, %183 : vector<16x16xf32>
    %185 = math.exp %184 : vector<16x16xf32>
    %cst_93 = arith.constant dense<0.000000e+00> : vector<16xf32>
    %186 = vector.multi_reduction <add>, %185, %cst_93 [1] : vector<16x16xf32> to vector<16xf32>
    %187 = vector.shape_cast %186 : vector<16xf32> to vector<16x1xf32>
    %188 = tpu.reciprocal %187 {approx = true} : vector<16x1xf32> -> vector<16x1xf32>
    %189 = vector.broadcast %188 : vector<16x1xf32> to vector<16x16xf32>
    %190 = arith.mulf %185, %189 : vector<16x16xf32>
    %cst_94 = arith.constant dense<0.000000e+00> : vector<16x8xf32>
    %191 = tpu.matmul %190, %160, %cst_94 {dimension_numbers = #tpu.dot_dimension_numbers<[1], [0], [0], [1], [0, 0, 1, 1], [], []>} : vector<16x16xf32>, vector<16x8xf32>, vector<16x8xf32> -> vector<16x8xf32>
    %c0_95 = arith.constant 0 : index
    %c0_96 = arith.constant 0 : index
    %192 = vector.load %arg29[%c0_95, %c0_96] : memref<8x16xf32, #tpu.memory_space<vmem>>, vector<8x16xf32>
    %c0_97 = arith.constant 0 : index
    %c0_98 = arith.constant 0 : index
    %193 = vector.load %arg30[%c0_97, %c0_98] : memref<1x16xf32, #tpu.memory_space<vmem>>, vector<1x16xf32>
    %c0_99 = arith.constant 0 : index
    %c0_100 = arith.constant 0 : index
    %194 = vector.load %arg31[%c0_99, %c0_100] : memref<1x16xf32, #tpu.memory_space<vmem>>, vector<1x16xf32>
    %cst_101 = arith.constant dense<0.000000e+00> : vector<16x16xf32>
    %195 = tpu.matmul %191, %192, %cst_101 {dimension_numbers = #tpu.dot_dimension_numbers<[1], [0], [0], [1], [0, 0, 1, 1], [], []>} : vector<16x8xf32>, vector<8x16xf32>, vector<16x16xf32> -> vector<16x16xf32>
    %196 = vector.broadcast %193 : vector<1x16xf32> to vector<16x16xf32>
    %197 = arith.mulf %195, %196 : vector<16x16xf32>
    %cst_102 = arith.constant dense<0.000000e+00> : vector<16xf32>
    %198 = vector.multi_reduction <add>, %197, %cst_102 [1] : vector<16x16xf32> to vector<16xf32>
    %199 = vector.shape_cast %198 : vector<16xf32> to vector<16x1xf32>
    %200 = vector.broadcast %194 : vector<1x16xf32> to vector<16x16xf32>
    %201 = arith.mulf %195, %200 : vector<16x16xf32>
    %cst_103 = arith.constant dense<0.000000e+00> : vector<16xf32>
    %202 = vector.multi_reduction <add>, %201, %cst_103 [1] : vector<16x16xf32> to vector<16xf32>
    %203 = vector.shape_cast %202 : vector<16xf32> to vector<1x16xf32>
    %204 = vector.broadcast %199 : vector<16x1xf32> to vector<16x16xf32>
    %205 = vector.broadcast %203 : vector<1x16xf32> to vector<16x16xf32>
    %206 = arith.addf %204, %205 : vector<16x16xf32>
    %cst_104 = arith.constant 0.000000e+00 : f32
    %207 = vector.broadcast %cst_104 : f32 to vector<16x16xf32>
    %208 = arith.cmpf ogt, %206, %207 : vector<16x16xf32>
    %cst_105 = arith.constant 2.000000e-01 : f32
    %209 = vector.broadcast %cst_105 : f32 to vector<16x16xf32>
    %210 = arith.mulf %209, %206 : vector<16x16xf32>
    %211 = arith.select %208, %206, %210 : vector<16x16xi1>, vector<16x16xf32>
    %cst_106 = arith.constant 0.000000e+00 : f32
    %212 = vector.broadcast %cst_106 : f32 to vector<16x16xf32>
    %213 = arith.cmpf ogt, %1, %212 : vector<16x16xf32>
    %cst_107 = arith.constant -9.000000e+15 : f32
    %214 = vector.broadcast %cst_107 : f32 to vector<16x16xf32>
    %215 = arith.select %213, %211, %214 : vector<16x16xi1>, vector<16x16xf32>
    %cst_108 = arith.constant dense<0xFF800000> : vector<16xf32>
    %216 = vector.multi_reduction <maximumf>, %215, %cst_108 [1] : vector<16x16xf32> to vector<16xf32>
    %217 = vector.shape_cast %216 : vector<16xf32> to vector<16x1xf32>
    %218 = vector.broadcast %217 : vector<16x1xf32> to vector<16x16xf32>
    %219 = arith.subf %215, %218 : vector<16x16xf32>
    %220 = math.exp %219 : vector<16x16xf32>
    %cst_109 = arith.constant dense<0.000000e+00> : vector<16xf32>
    %221 = vector.multi_reduction <add>, %220, %cst_109 [1] : vector<16x16xf32> to vector<16xf32>
    %222 = vector.shape_cast %221 : vector<16xf32> to vector<16x1xf32>
    %223 = tpu.reciprocal %222 {approx = true} : vector<16x1xf32> -> vector<16x1xf32>
    %224 = vector.broadcast %223 : vector<16x1xf32> to vector<16x16xf32>
    %225 = arith.mulf %220, %224 : vector<16x16xf32>
    %cst_110 = arith.constant dense<0.000000e+00> : vector<16x16xf32>
    %226 = tpu.matmul %225, %195, %cst_110 {dimension_numbers = #tpu.dot_dimension_numbers<[1], [0], [0], [1], [0, 0, 1, 1], [], []>} : vector<16x16xf32>, vector<16x16xf32>, vector<16x16xf32> -> vector<16x16xf32>
    %cst_111 = arith.constant 0.000000e+00 : f32
    %227 = vector.broadcast %cst_111 : f32 to vector<16x16xf32>
    %228 = arith.cmpf ogt, %226, %227 : vector<16x16xf32>
    %cst_112 = arith.constant 0.000000e+00 : f32
    %229 = vector.broadcast %cst_112 : f32 to vector<16x16xf32>
    %230 = arith.minimumf %226, %229 : vector<16x16xf32>
    %231 = math.exp %230 : vector<16x16xf32>
    %cst_113 = arith.constant 1.000000e+00 : f32
    %232 = vector.broadcast %cst_113 : f32 to vector<16x16xf32>
    %233 = arith.subf %231, %232 : vector<16x16xf32>
    %234 = arith.select %228, %226, %233 : vector<16x16xi1>, vector<16x16xf32>
    %c0_114 = arith.constant 0 : index
    %c0_115 = arith.constant 0 : index
    %235 = vector.load %arg32[%c0_114, %c0_115] : memref<16x32xf32, #tpu.memory_space<vmem>>, vector<16x32xf32>
    %c0_116 = arith.constant 0 : index
    %c0_117 = arith.constant 0 : index
    %236 = vector.load %arg33[%c0_116, %c0_117] : memref<1x32xf32, #tpu.memory_space<vmem>>, vector<1x32xf32>
    %c0_118 = arith.constant 0 : index
    %c0_119 = arith.constant 0 : index
    %237 = vector.load %arg34[%c0_118, %c0_119] : memref<1x32xf32, #tpu.memory_space<vmem>>, vector<1x32xf32>
    %cst_120 = arith.constant dense<0.000000e+00> : vector<16x32xf32>
    %238 = tpu.matmul %234, %235, %cst_120 {dimension_numbers = #tpu.dot_dimension_numbers<[1], [0], [0], [1], [0, 0, 1, 1], [], []>} : vector<16x16xf32>, vector<16x32xf32>, vector<16x32xf32> -> vector<16x32xf32>
    %239 = vector.broadcast %236 : vector<1x32xf32> to vector<16x32xf32>
    %240 = arith.mulf %238, %239 : vector<16x32xf32>
    %cst_121 = arith.constant dense<0.000000e+00> : vector<16xf32>
    %241 = vector.multi_reduction <add>, %240, %cst_121 [1] : vector<16x32xf32> to vector<16xf32>
    %242 = vector.shape_cast %241 : vector<16xf32> to vector<16x1xf32>
    %243 = vector.broadcast %237 : vector<1x32xf32> to vector<16x32xf32>
    %244 = arith.mulf %238, %243 : vector<16x32xf32>
    %cst_122 = arith.constant dense<0.000000e+00> : vector<16xf32>
    %245 = vector.multi_reduction <add>, %244, %cst_122 [1] : vector<16x32xf32> to vector<16xf32>
    %246 = vector.shape_cast %245 : vector<16xf32> to vector<1x16xf32>
    %247 = vector.broadcast %242 : vector<16x1xf32> to vector<16x16xf32>
    %248 = vector.broadcast %246 : vector<1x16xf32> to vector<16x16xf32>
    %249 = arith.addf %247, %248 : vector<16x16xf32>
    %cst_123 = arith.constant 0.000000e+00 : f32
    %250 = vector.broadcast %cst_123 : f32 to vector<16x16xf32>
    %251 = arith.cmpf ogt, %249, %250 : vector<16x16xf32>
    %cst_124 = arith.constant 2.000000e-01 : f32
    %252 = vector.broadcast %cst_124 : f32 to vector<16x16xf32>
    %253 = arith.mulf %252, %249 : vector<16x16xf32>
    %254 = arith.select %251, %249, %253 : vector<16x16xi1>, vector<16x16xf32>
    %cst_125 = arith.constant 0.000000e+00 : f32
    %255 = vector.broadcast %cst_125 : f32 to vector<16x16xf32>
    %256 = arith.cmpf ogt, %1, %255 : vector<16x16xf32>
    %cst_126 = arith.constant -9.000000e+15 : f32
    %257 = vector.broadcast %cst_126 : f32 to vector<16x16xf32>
    %258 = arith.select %256, %254, %257 : vector<16x16xi1>, vector<16x16xf32>
    %cst_127 = arith.constant dense<0xFF800000> : vector<16xf32>
    %259 = vector.multi_reduction <maximumf>, %258, %cst_127 [1] : vector<16x16xf32> to vector<16xf32>
    %260 = vector.shape_cast %259 : vector<16xf32> to vector<16x1xf32>
    %261 = vector.broadcast %260 : vector<16x1xf32> to vector<16x16xf32>
    %262 = arith.subf %258, %261 : vector<16x16xf32>
    %263 = math.exp %262 : vector<16x16xf32>
    %cst_128 = arith.constant dense<0.000000e+00> : vector<16xf32>
    %264 = vector.multi_reduction <add>, %263, %cst_128 [1] : vector<16x16xf32> to vector<16xf32>
    %265 = vector.shape_cast %264 : vector<16xf32> to vector<16x1xf32>
    %266 = tpu.reciprocal %265 {approx = true} : vector<16x1xf32> -> vector<16x1xf32>
    %267 = vector.broadcast %266 : vector<16x1xf32> to vector<16x16xf32>
    %268 = arith.mulf %263, %267 : vector<16x16xf32>
    %cst_129 = arith.constant dense<0.000000e+00> : vector<16x32xf32>
    %269 = tpu.matmul %268, %238, %cst_129 {dimension_numbers = #tpu.dot_dimension_numbers<[1], [0], [0], [1], [0, 0, 1, 1], [], []>} : vector<16x16xf32>, vector<16x32xf32>, vector<16x32xf32> -> vector<16x32xf32>
    %cst_130 = arith.constant 0.000000e+00 : f32
    %270 = vector.broadcast %cst_130 : f32 to vector<16x32xf32>
    %271 = arith.cmpf ogt, %269, %270 : vector<16x32xf32>
    %cst_131 = arith.constant 0.000000e+00 : f32
    %272 = vector.broadcast %cst_131 : f32 to vector<16x32xf32>
    %273 = arith.minimumf %269, %272 : vector<16x32xf32>
    %274 = math.exp %273 : vector<16x32xf32>
    %cst_132 = arith.constant 1.000000e+00 : f32
    %275 = vector.broadcast %cst_132 : f32 to vector<16x32xf32>
    %276 = arith.subf %274, %275 : vector<16x32xf32>
    %277 = arith.select %271, %269, %276 : vector<16x32xi1>, vector<16x32xf32>
    %c0_133 = arith.constant 0 : index
    %c0_134 = arith.constant 0 : index
    %278 = vector.load %arg35[%c0_133, %c0_134] : memref<32x64xf32, #tpu.memory_space<vmem>>, vector<32x64xf32>
    %c0_135 = arith.constant 0 : index
    %c0_136 = arith.constant 0 : index
    %279 = vector.load %arg36[%c0_135, %c0_136] : memref<1x64xf32, #tpu.memory_space<vmem>>, vector<1x64xf32>
    %c0_137 = arith.constant 0 : index
    %c0_138 = arith.constant 0 : index
    %280 = vector.load %arg37[%c0_137, %c0_138] : memref<1x64xf32, #tpu.memory_space<vmem>>, vector<1x64xf32>
    %cst_139 = arith.constant dense<0.000000e+00> : vector<16x64xf32>
    %281 = tpu.matmul %277, %278, %cst_139 {dimension_numbers = #tpu.dot_dimension_numbers<[1], [0], [0], [1], [0, 0, 1, 1], [], []>} : vector<16x32xf32>, vector<32x64xf32>, vector<16x64xf32> -> vector<16x64xf32>
    %282 = vector.broadcast %279 : vector<1x64xf32> to vector<16x64xf32>
    %283 = arith.mulf %281, %282 : vector<16x64xf32>
    %cst_140 = arith.constant dense<0.000000e+00> : vector<16xf32>
    %284 = vector.multi_reduction <add>, %283, %cst_140 [1] : vector<16x64xf32> to vector<16xf32>
    %285 = vector.shape_cast %284 : vector<16xf32> to vector<16x1xf32>
    %286 = vector.broadcast %280 : vector<1x64xf32> to vector<16x64xf32>
    %287 = arith.mulf %281, %286 : vector<16x64xf32>
    %cst_141 = arith.constant dense<0.000000e+00> : vector<16xf32>
    %288 = vector.multi_reduction <add>, %287, %cst_141 [1] : vector<16x64xf32> to vector<16xf32>
    %289 = vector.shape_cast %288 : vector<16xf32> to vector<1x16xf32>
    %290 = vector.broadcast %285 : vector<16x1xf32> to vector<16x16xf32>
    %291 = vector.broadcast %289 : vector<1x16xf32> to vector<16x16xf32>
    %292 = arith.addf %290, %291 : vector<16x16xf32>
    %cst_142 = arith.constant 0.000000e+00 : f32
    %293 = vector.broadcast %cst_142 : f32 to vector<16x16xf32>
    %294 = arith.cmpf ogt, %292, %293 : vector<16x16xf32>
    %cst_143 = arith.constant 2.000000e-01 : f32
    %295 = vector.broadcast %cst_143 : f32 to vector<16x16xf32>
    %296 = arith.mulf %295, %292 : vector<16x16xf32>
    %297 = arith.select %294, %292, %296 : vector<16x16xi1>, vector<16x16xf32>
    %cst_144 = arith.constant 0.000000e+00 : f32
    %298 = vector.broadcast %cst_144 : f32 to vector<16x16xf32>
    %299 = arith.cmpf ogt, %1, %298 : vector<16x16xf32>
    %cst_145 = arith.constant -9.000000e+15 : f32
    %300 = vector.broadcast %cst_145 : f32 to vector<16x16xf32>
    %301 = arith.select %299, %297, %300 : vector<16x16xi1>, vector<16x16xf32>
    %cst_146 = arith.constant dense<0xFF800000> : vector<16xf32>
    %302 = vector.multi_reduction <maximumf>, %301, %cst_146 [1] : vector<16x16xf32> to vector<16xf32>
    %303 = vector.shape_cast %302 : vector<16xf32> to vector<16x1xf32>
    %304 = vector.broadcast %303 : vector<16x1xf32> to vector<16x16xf32>
    %305 = arith.subf %301, %304 : vector<16x16xf32>
    %306 = math.exp %305 : vector<16x16xf32>
    %cst_147 = arith.constant dense<0.000000e+00> : vector<16xf32>
    %307 = vector.multi_reduction <add>, %306, %cst_147 [1] : vector<16x16xf32> to vector<16xf32>
    %308 = vector.shape_cast %307 : vector<16xf32> to vector<16x1xf32>
    %309 = tpu.reciprocal %308 {approx = true} : vector<16x1xf32> -> vector<16x1xf32>
    %310 = vector.broadcast %309 : vector<16x1xf32> to vector<16x16xf32>
    %311 = arith.mulf %306, %310 : vector<16x16xf32>
    %cst_148 = arith.constant dense<0.000000e+00> : vector<16x64xf32>
    %312 = tpu.matmul %311, %281, %cst_148 {dimension_numbers = #tpu.dot_dimension_numbers<[1], [0], [0], [1], [0, 0, 1, 1], [], []>} : vector<16x16xf32>, vector<16x64xf32>, vector<16x64xf32> -> vector<16x64xf32>
    %cst_149 = arith.constant 0.000000e+00 : f32
    %313 = vector.broadcast %cst_149 : f32 to vector<16x64xf32>
    %314 = arith.cmpf ogt, %312, %313 : vector<16x64xf32>
    %cst_150 = arith.constant 0.000000e+00 : f32
    %315 = vector.broadcast %cst_150 : f32 to vector<16x64xf32>
    %316 = arith.minimumf %312, %315 : vector<16x64xf32>
    %317 = math.exp %316 : vector<16x64xf32>
    %cst_151 = arith.constant 1.000000e+00 : f32
    %318 = vector.broadcast %cst_151 : f32 to vector<16x64xf32>
    %319 = arith.subf %317, %318 : vector<16x64xf32>
    %320 = arith.select %314, %312, %319 : vector<16x64xi1>, vector<16x64xf32>
    %c0_152 = arith.constant 0 : index
    %c0_153 = arith.constant 0 : index
    %321 = vector.load %arg38[%c0_152, %c0_153] : memref<64x32xf32, #tpu.memory_space<vmem>>, vector<64x32xf32>
    %c0_154 = arith.constant 0 : index
    %c0_155 = arith.constant 0 : index
    %322 = vector.load %arg39[%c0_154, %c0_155] : memref<1x32xf32, #tpu.memory_space<vmem>>, vector<1x32xf32>
    %c0_156 = arith.constant 0 : index
    %c0_157 = arith.constant 0 : index
    %323 = vector.load %arg40[%c0_156, %c0_157] : memref<1x32xf32, #tpu.memory_space<vmem>>, vector<1x32xf32>
    %cst_158 = arith.constant dense<0.000000e+00> : vector<16x32xf32>
    %324 = tpu.matmul %320, %321, %cst_158 {dimension_numbers = #tpu.dot_dimension_numbers<[1], [0], [0], [1], [0, 0, 1, 1], [], []>} : vector<16x64xf32>, vector<64x32xf32>, vector<16x32xf32> -> vector<16x32xf32>
    %325 = vector.broadcast %322 : vector<1x32xf32> to vector<16x32xf32>
    %326 = arith.mulf %324, %325 : vector<16x32xf32>
    %cst_159 = arith.constant dense<0.000000e+00> : vector<16xf32>
    %327 = vector.multi_reduction <add>, %326, %cst_159 [1] : vector<16x32xf32> to vector<16xf32>
    %328 = vector.shape_cast %327 : vector<16xf32> to vector<16x1xf32>
    %329 = vector.broadcast %323 : vector<1x32xf32> to vector<16x32xf32>
    %330 = arith.mulf %324, %329 : vector<16x32xf32>
    %cst_160 = arith.constant dense<0.000000e+00> : vector<16xf32>
    %331 = vector.multi_reduction <add>, %330, %cst_160 [1] : vector<16x32xf32> to vector<16xf32>
    %332 = vector.shape_cast %331 : vector<16xf32> to vector<1x16xf32>
    %333 = vector.broadcast %328 : vector<16x1xf32> to vector<16x16xf32>
    %334 = vector.broadcast %332 : vector<1x16xf32> to vector<16x16xf32>
    %335 = arith.addf %333, %334 : vector<16x16xf32>
    %cst_161 = arith.constant 0.000000e+00 : f32
    %336 = vector.broadcast %cst_161 : f32 to vector<16x16xf32>
    %337 = arith.cmpf ogt, %335, %336 : vector<16x16xf32>
    %cst_162 = arith.constant 2.000000e-01 : f32
    %338 = vector.broadcast %cst_162 : f32 to vector<16x16xf32>
    %339 = arith.mulf %338, %335 : vector<16x16xf32>
    %340 = arith.select %337, %335, %339 : vector<16x16xi1>, vector<16x16xf32>
    %cst_163 = arith.constant 0.000000e+00 : f32
    %341 = vector.broadcast %cst_163 : f32 to vector<16x16xf32>
    %342 = arith.cmpf ogt, %1, %341 : vector<16x16xf32>
    %cst_164 = arith.constant -9.000000e+15 : f32
    %343 = vector.broadcast %cst_164 : f32 to vector<16x16xf32>
    %344 = arith.select %342, %340, %343 : vector<16x16xi1>, vector<16x16xf32>
    %cst_165 = arith.constant dense<0xFF800000> : vector<16xf32>
    %345 = vector.multi_reduction <maximumf>, %344, %cst_165 [1] : vector<16x16xf32> to vector<16xf32>
    %346 = vector.shape_cast %345 : vector<16xf32> to vector<16x1xf32>
    %347 = vector.broadcast %346 : vector<16x1xf32> to vector<16x16xf32>
    %348 = arith.subf %344, %347 : vector<16x16xf32>
    %349 = math.exp %348 : vector<16x16xf32>
    %cst_166 = arith.constant dense<0.000000e+00> : vector<16xf32>
    %350 = vector.multi_reduction <add>, %349, %cst_166 [1] : vector<16x16xf32> to vector<16xf32>
    %351 = vector.shape_cast %350 : vector<16xf32> to vector<16x1xf32>
    %352 = tpu.reciprocal %351 {approx = true} : vector<16x1xf32> -> vector<16x1xf32>
    %353 = vector.broadcast %352 : vector<16x1xf32> to vector<16x16xf32>
    %354 = arith.mulf %349, %353 : vector<16x16xf32>
    %cst_167 = arith.constant dense<0.000000e+00> : vector<16x32xf32>
    %355 = tpu.matmul %354, %324, %cst_167 {dimension_numbers = #tpu.dot_dimension_numbers<[1], [0], [0], [1], [0, 0, 1, 1], [], []>} : vector<16x16xf32>, vector<16x32xf32>, vector<16x32xf32> -> vector<16x32xf32>
    %cst_168 = arith.constant dense<0.000000e+00> : vector<16x16xf32>
    %356 = tpu.matmul %191, %191, %cst_168 {dimension_numbers = #tpu.dot_dimension_numbers<[1], [1], [0], [0], [0, 0, 1, 0], [], []>} : vector<16x8xf32>, vector<16x8xf32>, vector<16x16xf32> -> vector<16x16xf32>
    %357 = arith.negf %356 : vector<16x16xf32>
    %358 = math.exp %357 : vector<16x16xf32>
    %cst_169 = arith.constant 1.000000e+00 : f32
    %359 = vector.broadcast %cst_169 : f32 to vector<16x16xf32>
    %360 = arith.addf %359, %358 : vector<16x16xf32>
    %361 = arith.divf %359, %360 : vector<16x16xf32>
    %cst_170 = arith.constant 5.000000e-01 : f32
    %362 = vector.broadcast %cst_170 : f32 to vector<16x8xf32>
    %363 = arith.mulf %362, %29 : vector<16x8xf32>
    %cst_171 = arith.constant 5.000000e-01 : f32
    %364 = vector.broadcast %cst_171 : f32 to vector<16x8xf32>
    %365 = arith.mulf %364, %191 : vector<16x8xf32>
    %366 = arith.addf %363, %365 : vector<16x8xf32>
    %c0_172 = arith.constant 0 : index
    %c0_173 = arith.constant 0 : index
    %367 = vector.load %arg10[%c0_172, %c0_173] : memref<8x16xf32, #tpu.memory_space<vmem>>, vector<8x16xf32>
    %c0_174 = arith.constant 0 : index
    %c0_175 = arith.constant 0 : index
    %368 = vector.load %arg11[%c0_174, %c0_175] : memref<1x16xf32, #tpu.memory_space<vmem>>, vector<1x16xf32>
    %cst_176 = arith.constant dense<0.000000e+00> : vector<16x16xf32>
    %369 = tpu.matmul %29, %367, %cst_176 {dimension_numbers = #tpu.dot_dimension_numbers<[1], [0], [0], [1], [0, 0, 1, 1], [], []>} : vector<16x8xf32>, vector<8x16xf32>, vector<16x16xf32> -> vector<16x16xf32>
    %370 = vector.broadcast %368 : vector<1x16xf32> to vector<16x16xf32>
    %371 = arith.addf %369, %370 : vector<16x16xf32>
    %cst_177 = arith.constant 0.000000e+00 : f32
    %372 = vector.broadcast %cst_177 : f32 to vector<16x16xf32>
    %373 = arith.maximumf %371, %372 : vector<16x16xf32>
    %c0_178 = arith.constant 0 : index
    %c0_179 = arith.constant 0 : index
    %374 = vector.load %arg12[%c0_178, %c0_179] : memref<16x32xf32, #tpu.memory_space<vmem>>, vector<16x32xf32>
    %c0_180 = arith.constant 0 : index
    %c0_181 = arith.constant 0 : index
    %375 = vector.load %arg13[%c0_180, %c0_181] : memref<1x32xf32, #tpu.memory_space<vmem>>, vector<1x32xf32>
    %cst_182 = arith.constant dense<0.000000e+00> : vector<16x32xf32>
    %376 = tpu.matmul %373, %374, %cst_182 {dimension_numbers = #tpu.dot_dimension_numbers<[1], [0], [0], [1], [0, 0, 1, 1], [], []>} : vector<16x16xf32>, vector<16x32xf32>, vector<16x32xf32> -> vector<16x32xf32>
    %377 = vector.broadcast %375 : vector<1x32xf32> to vector<16x32xf32>
    %378 = arith.addf %376, %377 : vector<16x32xf32>
    %cst_183 = arith.constant 0.000000e+00 : f32
    %379 = vector.broadcast %cst_183 : f32 to vector<16x32xf32>
    %380 = arith.maximumf %378, %379 : vector<16x32xf32>
    %c0_184 = arith.constant 0 : index
    %c0_185 = arith.constant 0 : index
    %381 = vector.load %arg14[%c0_184, %c0_185] : memref<32x64xf32, #tpu.memory_space<vmem>>, vector<32x64xf32>
    %c0_186 = arith.constant 0 : index
    %c0_187 = arith.constant 0 : index
    %382 = vector.load %arg15[%c0_186, %c0_187] : memref<1x64xf32, #tpu.memory_space<vmem>>, vector<1x64xf32>
    %cst_188 = arith.constant dense<0.000000e+00> : vector<16x64xf32>
    %383 = tpu.matmul %380, %381, %cst_188 {dimension_numbers = #tpu.dot_dimension_numbers<[1], [0], [0], [1], [0, 0, 1, 1], [], []>} : vector<16x32xf32>, vector<32x64xf32>, vector<16x64xf32> -> vector<16x64xf32>
    %384 = vector.broadcast %382 : vector<1x64xf32> to vector<16x64xf32>
    %385 = arith.addf %383, %384 : vector<16x64xf32>
    %cst_189 = arith.constant 0.000000e+00 : f32
    %386 = vector.broadcast %cst_189 : f32 to vector<16x64xf32>
    %387 = arith.maximumf %385, %386 : vector<16x64xf32>
    %c0_190 = arith.constant 0 : index
    %c0_191 = arith.constant 0 : index
    %388 = vector.load %arg16[%c0_190, %c0_191] : memref<64x32xf32, #tpu.memory_space<vmem>>, vector<64x32xf32>
    %c0_192 = arith.constant 0 : index
    %c0_193 = arith.constant 0 : index
    %389 = vector.load %arg17[%c0_192, %c0_193] : memref<1x32xf32, #tpu.memory_space<vmem>>, vector<1x32xf32>
    %cst_194 = arith.constant dense<0.000000e+00> : vector<16x32xf32>
    %390 = tpu.matmul %387, %388, %cst_194 {dimension_numbers = #tpu.dot_dimension_numbers<[1], [0], [0], [1], [0, 0, 1, 1], [], []>} : vector<16x64xf32>, vector<64x32xf32>, vector<16x32xf32> -> vector<16x32xf32>
    %391 = vector.broadcast %389 : vector<1x32xf32> to vector<16x32xf32>
    %392 = arith.addf %390, %391 : vector<16x32xf32>
    %cst_195 = arith.constant dense<0.000000e+00> : vector<16x16xf32>
    %393 = tpu.matmul %29, %29, %cst_195 {dimension_numbers = #tpu.dot_dimension_numbers<[1], [1], [0], [0], [0, 0, 1, 0], [], []>} : vector<16x8xf32>, vector<16x8xf32>, vector<16x16xf32> -> vector<16x16xf32>
    %394 = arith.negf %393 : vector<16x16xf32>
    %395 = math.exp %394 : vector<16x16xf32>
    %cst_196 = arith.constant 1.000000e+00 : f32
    %396 = vector.broadcast %cst_196 : f32 to vector<16x16xf32>
    %397 = arith.addf %396, %395 : vector<16x16xf32>
    %398 = arith.divf %396, %397 : vector<16x16xf32>
    %cst_197 = arith.constant dense<0.000000e+00> : vector<16x16xf32>
    %399 = tpu.matmul %366, %366, %cst_197 {dimension_numbers = #tpu.dot_dimension_numbers<[1], [1], [0], [0], [0, 0, 1, 0], [], []>} : vector<16x8xf32>, vector<16x8xf32>, vector<16x16xf32> -> vector<16x16xf32>
    %400 = arith.negf %399 : vector<16x16xf32>
    %401 = math.exp %400 : vector<16x16xf32>
    %cst_198 = arith.constant 1.000000e+00 : f32
    %402 = vector.broadcast %cst_198 : f32 to vector<16x16xf32>
    %403 = arith.addf %402, %401 : vector<16x16xf32>
    %404 = arith.divf %402, %403 : vector<16x16xf32>
    %c0_199 = arith.constant 0 : index
    %c0_200 = arith.constant 0 : index
    %405 = vector.load %arg41[%c0_199, %c0_200] : memref<4x8xf32, #tpu.memory_space<vmem>>, vector<4x8xf32>
    %406 = arith.mulf %29, %29 : vector<16x8xf32>
    %cst_201 = arith.constant dense<0.000000e+00> : vector<16xf32>
    %407 = vector.multi_reduction <add>, %406, %cst_201 [1] : vector<16x8xf32> to vector<16xf32>
    %408 = vector.shape_cast %407 : vector<16xf32> to vector<16x1xf32>
    %409 = arith.mulf %405, %405 : vector<4x8xf32>
    %cst_202 = arith.constant dense<0.000000e+00> : vector<4xf32>
    %410 = vector.multi_reduction <add>, %409, %cst_202 [1] : vector<4x8xf32> to vector<4xf32>
    %411 = vector.shape_cast %410 : vector<4xf32> to vector<1x4xf32>
    %cst_203 = arith.constant dense<0.000000e+00> : vector<16x4xf32>
    %412 = tpu.matmul %29, %405, %cst_203 {dimension_numbers = #tpu.dot_dimension_numbers<[1], [1], [0], [0], [0, 0, 1, 0], [], []>} : vector<16x8xf32>, vector<4x8xf32>, vector<16x4xf32> -> vector<16x4xf32>
    %413 = vector.broadcast %408 : vector<16x1xf32> to vector<16x4xf32>
    %414 = vector.broadcast %411 : vector<1x4xf32> to vector<16x4xf32>
    %415 = arith.addf %413, %414 : vector<16x4xf32>
    %cst_204 = arith.constant 2.000000e+00 : f32
    %416 = vector.broadcast %cst_204 : f32 to vector<16x4xf32>
    %417 = arith.mulf %416, %412 : vector<16x4xf32>
    %418 = arith.subf %415, %417 : vector<16x4xf32>
    %cst_205 = arith.constant 0.000000e+00 : f32
    %419 = vector.broadcast %cst_205 : f32 to vector<16x4xf32>
    %420 = arith.maximumf %418, %419 : vector<16x4xf32>
    %cst_206 = arith.constant 1.000000e+00 : f32
    %421 = vector.broadcast %cst_206 : f32 to vector<16x4xf32>
    %422 = arith.mulf %420, %421 : vector<16x4xf32>
    %cst_207 = arith.constant 1.000000e+00 : f32
    %423 = vector.broadcast %cst_207 : f32 to vector<16x4xf32>
    %424 = arith.addf %423, %422 : vector<16x4xf32>
    %425 = tpu.reciprocal %424 {approx = true} : vector<16x4xf32> -> vector<16x4xf32>
    %cst_208 = arith.constant dense<0.000000e+00> : vector<16xf32>
    %426 = vector.multi_reduction <add>, %425, %cst_208 [1] : vector<16x4xf32> to vector<16xf32>
    %427 = vector.shape_cast %426 : vector<16xf32> to vector<16x1xf32>
    %428 = tpu.reciprocal %427 {approx = true} : vector<16x1xf32> -> vector<16x1xf32>
    %429 = vector.broadcast %428 : vector<16x1xf32> to vector<16x4xf32>
    %430 = arith.mulf %425, %429 : vector<16x4xf32>
    %431 = arith.mulf %366, %366 : vector<16x8xf32>
    %cst_209 = arith.constant dense<0.000000e+00> : vector<16xf32>
    %432 = vector.multi_reduction <add>, %431, %cst_209 [1] : vector<16x8xf32> to vector<16xf32>
    %433 = vector.shape_cast %432 : vector<16xf32> to vector<16x1xf32>
    %434 = arith.mulf %405, %405 : vector<4x8xf32>
    %cst_210 = arith.constant dense<0.000000e+00> : vector<4xf32>
    %435 = vector.multi_reduction <add>, %434, %cst_210 [1] : vector<4x8xf32> to vector<4xf32>
    %436 = vector.shape_cast %435 : vector<4xf32> to vector<1x4xf32>
    %cst_211 = arith.constant dense<0.000000e+00> : vector<16x4xf32>
    %437 = tpu.matmul %366, %405, %cst_211 {dimension_numbers = #tpu.dot_dimension_numbers<[1], [1], [0], [0], [0, 0, 1, 0], [], []>} : vector<16x8xf32>, vector<4x8xf32>, vector<16x4xf32> -> vector<16x4xf32>
    %438 = vector.broadcast %433 : vector<16x1xf32> to vector<16x4xf32>
    %439 = vector.broadcast %436 : vector<1x4xf32> to vector<16x4xf32>
    %440 = arith.addf %438, %439 : vector<16x4xf32>
    %cst_212 = arith.constant 2.000000e+00 : f32
    %441 = vector.broadcast %cst_212 : f32 to vector<16x4xf32>
    %442 = arith.mulf %441, %437 : vector<16x4xf32>
    %443 = arith.subf %440, %442 : vector<16x4xf32>
    %cst_213 = arith.constant 0.000000e+00 : f32
    %444 = vector.broadcast %cst_213 : f32 to vector<16x4xf32>
    %445 = arith.maximumf %443, %444 : vector<16x4xf32>
    %cst_214 = arith.constant 1.000000e+00 : f32
    %446 = vector.broadcast %cst_214 : f32 to vector<16x4xf32>
    %447 = arith.mulf %445, %446 : vector<16x4xf32>
    %cst_215 = arith.constant 1.000000e+00 : f32
    %448 = vector.broadcast %cst_215 : f32 to vector<16x4xf32>
    %449 = arith.addf %448, %447 : vector<16x4xf32>
    %450 = tpu.reciprocal %449 {approx = true} : vector<16x4xf32> -> vector<16x4xf32>
    %cst_216 = arith.constant dense<0.000000e+00> : vector<16xf32>
    %451 = vector.multi_reduction <add>, %450, %cst_216 [1] : vector<16x4xf32> to vector<16xf32>
    %452 = vector.shape_cast %451 : vector<16xf32> to vector<16x1xf32>
    %453 = tpu.reciprocal %452 {approx = true} : vector<16x1xf32> -> vector<16x1xf32>
    %454 = vector.broadcast %453 : vector<16x1xf32> to vector<16x4xf32>
    %455 = arith.mulf %450, %454 : vector<16x4xf32>
    %c0_217 = arith.constant 0 : index
    %c0_218 = arith.constant 0 : index
    %456 = vector.load %arg42[%c0_217, %c0_218] : memref<16x32xf32, #tpu.memory_space<vmem>>, vector<16x32xf32>
    tpu.vector_store %arg42[%c0_217, %c0_218], %392 {strides = array<i32>} : memref<16x32xf32, #tpu.memory_space<vmem>>, vector<16x32xf32>,
    %c0_219 = arith.constant 0 : index
    %c0_220 = arith.constant 0 : index
    %457 = vector.load %arg43[%c0_219, %c0_220] : memref<16x16xf32, #tpu.memory_space<vmem>>, vector<16x16xf32>
    tpu.vector_store %arg43[%c0_219, %c0_220], %398 {strides = array<i32>} : memref<16x16xf32, #tpu.memory_space<vmem>>, vector<16x16xf32>,
    %c0_221 = arith.constant 0 : index
    %c0_222 = arith.constant 0 : index
    %458 = vector.load %arg44[%c0_221, %c0_222] : memref<16x32xf32, #tpu.memory_space<vmem>>, vector<16x32xf32>
    tpu.vector_store %arg44[%c0_221, %c0_222], %355 {strides = array<i32>} : memref<16x32xf32, #tpu.memory_space<vmem>>, vector<16x32xf32>,
    %c0_223 = arith.constant 0 : index
    %c0_224 = arith.constant 0 : index
    %459 = vector.load %arg45[%c0_223, %c0_224] : memref<16x16xf32, #tpu.memory_space<vmem>>, vector<16x16xf32>
    tpu.vector_store %arg45[%c0_223, %c0_224], %361 {strides = array<i32>} : memref<16x16xf32, #tpu.memory_space<vmem>>, vector<16x16xf32>,
    %c0_225 = arith.constant 0 : index
    %c0_226 = arith.constant 0 : index
    %460 = vector.load %arg46[%c0_225, %c0_226] : memref<16x16xf32, #tpu.memory_space<vmem>>, vector<16x16xf32>
    tpu.vector_store %arg46[%c0_225, %c0_226], %404 {strides = array<i32>} : memref<16x16xf32, #tpu.memory_space<vmem>>, vector<16x16xf32>,
    %c0_227 = arith.constant 0 : index
    %c0_228 = arith.constant 0 : index
    %461 = vector.load %arg47[%c0_227, %c0_228] : memref<16x8xf32, #tpu.memory_space<vmem>>, vector<16x8xf32>
    tpu.vector_store %arg47[%c0_227, %c0_228], %29 {strides = array<i32>} : memref<16x8xf32, #tpu.memory_space<vmem>>, vector<16x8xf32>,
    %c0_229 = arith.constant 0 : index
    %c0_230 = arith.constant 0 : index
    %462 = vector.load %arg48[%c0_229, %c0_230] : memref<16x8xf32, #tpu.memory_space<vmem>>, vector<16x8xf32>
    tpu.vector_store %arg48[%c0_229, %c0_230], %191 {strides = array<i32>} : memref<16x8xf32, #tpu.memory_space<vmem>>, vector<16x8xf32>,
    %c0_231 = arith.constant 0 : index
    %c0_232 = arith.constant 0 : index
    %463 = vector.load %arg49[%c0_231, %c0_232] : memref<16x8xf32, #tpu.memory_space<vmem>>, vector<16x8xf32>
    tpu.vector_store %arg49[%c0_231, %c0_232], %366 {strides = array<i32>} : memref<16x8xf32, #tpu.memory_space<vmem>>, vector<16x8xf32>,
    %c0_233 = arith.constant 0 : index
    %c0_234 = arith.constant 0 : index
    %464 = vector.load %arg50[%c0_233, %c0_234] : memref<16x4xf32, #tpu.memory_space<vmem>>, vector<16x4xf32>
    tpu.vector_store %arg50[%c0_233, %c0_234], %430 {strides = array<i32>} : memref<16x4xf32, #tpu.memory_space<vmem>>, vector<16x4xf32>,
    %c0_235 = arith.constant 0 : index
    %c0_236 = arith.constant 0 : index
    %465 = vector.load %arg51[%c0_235, %c0_236] : memref<16x4xf32, #tpu.memory_space<vmem>>, vector<16x4xf32>
    tpu.vector_store %arg51[%c0_235, %c0_236], %455 {strides = array<i32>} : memref<16x4xf32, #tpu.memory_space<vmem>>, vector<16x4xf32>,
    return
  }
}

</mosaic_0001>

<llo_original>
// kernel: combine_forward.1
$region0: #{combine_forward.1}
  #allocation0 [shape = 'u32[]', space=smem, size = 0x4, offset = 0x4, fixed_abs, tag = 'smem constant byte address 0x4 - core index']
  #allocation1 [shape = 'u32[72,128]{1,0:T(1,128)}', space=vmem, size = 0x9000, scoped, tag = 'internal scratch']
  %s0 = inlined_call_operand.smem [shape: u32[52], index: -1, kind: input, shape index: {}]
  %s1 = sld [smem:[%s0]]
  %s2 = scalar_lea.smem %s0, 1
  %s3 = sld [smem:[%s2]]
  %s4 = scalar_lea.smem %s0, 2
  %s5 = sld [smem:[%s4]]
  %s6 = scalar_lea.smem %s0, 3
  %s7 = sld [smem:[%s6]]
  %s8 = scalar_lea.smem %s0, 4
  %s9 = sld [smem:[%s8]]
  %s10 = scalar_lea.smem %s0, 5
  %s11 = sld [smem:[%s10]]
  %s12 = scalar_lea.smem %s0, 6
  %s13 = sld [smem:[%s12]]
  %s14 = scalar_lea.smem %s0, 7
  %s15 = sld [smem:[%s14]]
  %s16 = scalar_lea.smem %s0, 8
  %s17 = sld [smem:[%s16]]
  %s18 = scalar_lea.smem %s0, 9
  %s19 = sld [smem:[%s18]]
  %s20 = scalar_lea.smem %s0, 10
  %s21 = sld [smem:[%s20]]
  %s22 = scalar_lea.smem %s0, 11
  %s23 = sld [smem:[%s22]]
  %s24 = scalar_lea.smem %s0, 12
  %s25 = sld [smem:[%s24]]
  %s26 = scalar_lea.smem %s0, 13
  %s27 = sld [smem:[%s26]]
  %s28 = scalar_lea.smem %s0, 14
  %s29 = sld [smem:[%s28]]
  %s30 = scalar_lea.smem %s0, 15
  %s31 = sld [smem:[%s30]]
  %s32 = scalar_lea.smem %s0, 16
  %s33 = sld [smem:[%s32]]
  %s34 = scalar_lea.smem %s0, 17
  %s35 = sld [smem:[%s34]]
  %s36 = scalar_lea.smem %s0, 18
  %s37 = sld [smem:[%s36]]
  %s38 = scalar_lea.smem %s0, 19
  %s39 = sld [smem:[%s38]]
  %s40 = scalar_lea.smem %s0, 20
  %s41 = sld [smem:[%s40]]
  %s42 = scalar_lea.smem %s0, 21
  %s43 = sld [smem:[%s42]]
  %s44 = scalar_lea.smem %s0, 22
  %s45 = sld [smem:[%s44]]
  %s46 = scalar_lea.smem %s0, 23
  %s47 = sld [smem:[%s46]]
  %s48 = scalar_lea.smem %s0, 24
  %s49 = sld [smem:[%s48]]
  %s50 = scalar_lea.smem %s0, 25
  %s51 = sld [smem:[%s50]]
  %s52 = scalar_lea.smem %s0, 26
  %s53 = sld [smem:[%s52]]
  %s54 = scalar_lea.smem %s0, 27
  %s55 = sld [smem:[%s54]]
  %s56 = scalar_lea.smem %s0, 28
  %s57 = sld [smem:[%s56]]
  %s58 = scalar_lea.smem %s0, 29
  %s59 = sld [smem:[%s58]]
  %s60 = scalar_lea.smem %s0, 30
  %s61 = sld [smem:[%s60]]
  %s62 = scalar_lea.smem %s0, 31
  %s63 = sld [smem:[%s62]]
  %s64 = scalar_lea.smem %s0, 32
  %s65 = sld [smem:[%s64]]
  %s66 = scalar_lea.smem %s0, 33
  %s67 = sld [smem:[%s66]]
  %s68 = scalar_lea.smem %s0, 34
  %s69 = sld [smem:[%s68]]
  %s70 = scalar_lea.smem %s0, 35
  %s71 = sld [smem:[%s70]]
  %s72 = scalar_lea.smem %s0, 36
  %s73 = sld [smem:[%s72]]
  %s74 = scalar_lea.smem %s0, 37
  %s75 = sld [smem:[%s74]]
  %s76 = scalar_lea.smem %s0, 38
  %s77 = sld [smem:[%s76]]
  %s78 = scalar_lea.smem %s0, 39
  %s79 = sld [smem:[%s78]]
  %s80 = scalar_lea.smem %s0, 40
  %s81 = sld [smem:[%s80]]
  %s82 = scalar_lea.smem %s0, 41
  %s83 = sld [smem:[%s82]]
  %s84 = scalar_lea.smem %s0, 42
  %s85 = sld [smem:[%s84]]
  %s86 = scalar_lea.smem %s0, 43
  %s87 = sld [smem:[%s86]]
  %s88 = scalar_lea.smem %s0, 44
  %s89 = sld [smem:[%s88]]
  %s90 = scalar_lea.smem %s0, 45
  %s91 = sld [smem:[%s90]]
  %s92 = scalar_lea.smem %s0, 46
  %s93 = sld [smem:[%s92]]
  %s94 = scalar_lea.smem %s0, 47
  %s95 = sld [smem:[%s94]]
  %s96 = scalar_lea.smem %s0, 48
  %s97 = sld [smem:[%s96]]
  %s98 = scalar_lea.smem %s0, 49
  %s99 = sld [smem:[%s98]]
  %s100 = scalar_lea.smem %s0, 50
  %s101 = sld [smem:[%s100]]
  %s102 = scalar_lea.smem %s0, 51
  %s103 = sld [smem:[%s102]]
  %104 = xla_tuple %s85, %s87, %s89, %s91, %s93, %s95, %s97, %s99, %s101, %s103
  %s105 = sld [smem:[#allocation0]]
  $region250: #{combine_forward.1} parent=0
    _
  %s107 = ssub.s32 1, %s105
  %s108 = scalar_select 0, %s107, %s105
  $region1: #{combine_forward.1} parent=0
    #allocation2 [shape = 'u8[8192]{0}', space=vmem, size = 0x2000, scoped, tag = 'output window, operand 0, single buffered']
    #allocation3 [shape = 's32[1]{0}', space=sflag, size = 0x4, scoped, tag = 'scoped memory for combine_forward.1']
    #allocation4 [shape = 'u8[8192]{0}', space=vmem, size = 0x2000, scoped, tag = 'output window, operand 1, single buffered']
    #allocation5 [shape = 's32[1]{0}', space=sflag, size = 0x4, scoped, tag = 'scoped memory for combine_forward.1']
    #allocation6 [shape = 'u8[8192]{0}', space=vmem, size = 0x2000, scoped, tag = 'output window, operand 2, single buffered']
    #allocation7 [shape = 'u8[8192]{0}', space=vmem, size = 0x2000, scoped, tag = 'output window, operand 3, single buffered']
    #allocation8 [shape = 's32[1]{0}', space=sflag, size = 0x4, scoped, tag = 'scoped memory for combine_forward.1']
    #allocation9 [shape = 'u8[8192]{0}', space=vmem, size = 0x2000, scoped, tag = 'output window, operand 4, single buffered']
    %109 = vsyncpa [#allocation3], 0
    %110 = vsyncpa [#allocation5], 0
    %111 = vsyncpa [#allocation8], 0
    // Predicated region
    $region2: #{combine_forward.1} parent=1 // pred_check
      _
    $region3: #{combine_forward.1} parent=1 // pred_check_branch
      %113 = sbr.rel (0) target = $region5
    $region4: #{combine_forward.1} parent=1 // pred_region
      _
    $region5: #{combine_forward.1} parent=1 // pred_fallthru
      _
    // Predicated region
    $region6: #{combine_forward.1} parent=1 // pred_check
      _
    $region7: #{combine_forward.1} parent=1 // pred_check_branch
      %115 = sbr.rel (0) target = $region9
    $region8: #{combine_forward.1} parent=1 // pred_region
      _
    $region9: #{combine_forward.1} parent=1 // pred_fallthru
      _
    // Predicated region
    $region10: #{combine_forward.1} parent=1 // pred_check
      _
    $region11: #{combine_forward.1} parent=1 // pred_check_branch
      %117 = sbr.rel (0) target = $region13
    $region12: #{combine_forward.1} parent=1 // pred_region
      _
    $region13: #{combine_forward.1} parent=1 // pred_fallthru
      _
    // Predicated region
    $region14: #{combine_forward.1} parent=1 // pred_check
      _
    $region15: #{combine_forward.1} parent=1 // pred_check_branch
      %119 = sbr.rel (0) target = $region17
    $region16: #{combine_forward.1} parent=1 // pred_region
      _
    $region17: #{combine_forward.1} parent=1 // pred_fallthru
      _
    // Predicated region
    $region18: #{combine_forward.1} parent=1 // pred_check
      _
    $region19: #{combine_forward.1} parent=1 // pred_check_branch
      %121 = sbr.rel (0) target = $region21
    $region20: #{combine_forward.1} parent=1 // pred_region
      _
    $region21: #{combine_forward.1} parent=1 // pred_fallthru
      _
    // Predicated region
    $region22: #{combine_forward.1} parent=1 // pred_check
      _
    $region23: #{combine_forward.1} parent=1 // pred_check_branch
      %123 = sbr.rel (0) target = $region25
    $region24: #{combine_forward.1} parent=1 // pred_region
      _
    $region25: #{combine_forward.1} parent=1 // pred_fallthru
      _
    // Predicated region
    $region26: #{combine_forward.1} parent=1 // pred_check
      _
    $region27: #{combine_forward.1} parent=1 // pred_check_branch
      %125 = sbr.rel (0) target = $region29
    $region28: #{combine_forward.1} parent=1 // pred_region
      _
    $region29: #{combine_forward.1} parent=1 // pred_fallthru
      _
    // Predicated region
    $region30: #{combine_forward.1} parent=1 // pred_check
      _
    $region31: #{combine_forward.1} parent=1 // pred_check_branch
      %127 = sbr.rel (0) target = $region33
    $region32: #{combine_forward.1} parent=1 // pred_region
      _
    $region33: #{combine_forward.1} parent=1 // pred_fallthru
      _
    // Predicated region
    $region34: #{combine_forward.1} parent=1 // pred_check
      _
    $region35: #{combine_forward.1} parent=1 // pred_check_branch
      %129 = sbr.rel (0) target = $region37
    $region36: #{combine_forward.1} parent=1 // pred_region
      _
    $region37: #{combine_forward.1} parent=1 // pred_fallthru
      _
    // Predicated region
    $region38: #{combine_forward.1} parent=1 // pred_check
      _
    $region39: #{combine_forward.1} parent=1 // pred_check_branch
      %131 = sbr.rel (0) target = $region41
    $region40: #{combine_forward.1} parent=1 // pred_region
      _
    $region41: #{combine_forward.1} parent=1 // pred_fallthru
      _
    // Predicated region
    $region42: #{combine_forward.1} parent=1 // pred_check
      _
    $region43: #{combine_forward.1} parent=1 // pred_check_branch
      %133 = sbr.rel (0) target = $region45
    $region44: #{combine_forward.1} parent=1 // pred_region
      _
    $region45: #{combine_forward.1} parent=1 // pred_fallthru
      _
    // Predicated region
    $region46: #{combine_forward.1} parent=1 // pred_check
      _
    $region47: #{combine_forward.1} parent=1 // pred_check_branch
      %135 = sbr.rel (0) target = $region49
    $region48: #{combine_forward.1} parent=1 // pred_region
      _
    $region49: #{combine_forward.1} parent=1 // pred_fallthru
      _
    // Predicated region
    $region50: #{combine_forward.1} parent=1 // pred_check
      _
    $region51: #{combine_forward.1} parent=1 // pred_check_branch
      %137 = sbr.rel (0) target = $region53
    $region52: #{combine_forward.1} parent=1 // pred_region
      _
    $region53: #{combine_forward.1} parent=1 // pred_fallthru
      _
    // Predicated region
    $region54: #{combine_forward.1} parent=1 // pred_check
      _
    $region55: #{combine_forward.1} parent=1 // pred_check_branch
      %139 = sbr.rel (0) target = $region57
    $region56: #{combine_forward.1} parent=1 // pred_region
      _
    $region57: #{combine_forward.1} parent=1 // pred_fallthru
      _
    // Predicated region
    $region58: #{combine_forward.1} parent=1 // pred_check
      _
    $region59: #{combine_forward.1} parent=1 // pred_check_branch
      %141 = sbr.rel (0) target = $region61
    $region60: #{combine_forward.1} parent=1 // pred_region
      _
    $region61: #{combine_forward.1} parent=1 // pred_fallthru
      _
    // Predicated region
    $region62: #{combine_forward.1} parent=1 // pred_check
      _
    $region63: #{combine_forward.1} parent=1 // pred_check_branch
      %143 = sbr.rel (0) target = $region65
    $region64: #{combine_forward.1} parent=1 // pred_region
      _
    $region65: #{combine_forward.1} parent=1 // pred_fallthru
      _
    // Predicated region
    $region66: #{combine_forward.1} parent=1 // pred_check
      _
    $region67: #{combine_forward.1} parent=1 // pred_check_branch
      %145 = sbr.rel (0) target = $region69
    $region68: #{combine_forward.1} parent=1 // pred_region
      _
    $region69: #{combine_forward.1} parent=1 // pred_fallthru
      _
    // Predicated region
    $region70: #{combine_forward.1} parent=1 // pred_check
      _
    $region71: #{combine_forward.1} parent=1 // pred_check_branch
      %147 = sbr.rel (0) target = $region73
    $region72: #{combine_forward.1} parent=1 // pred_region
      _
    $region73: #{combine_forward.1} parent=1 // pred_fallthru
      _
    // Predicated region
    $region74: #{combine_forward.1} parent=1 // pred_check
      _
    $region75: #{combine_forward.1} parent=1 // pred_check_branch
      %149 = sbr.rel (0) target = $region77
    $region76: #{combine_forward.1} parent=1 // pred_region
      _
    $region77: #{combine_forward.1} parent=1 // pred_fallthru
      _
    // Predicated region
    $region78: #{combine_forward.1} parent=1 // pred_check
      _
    $region79: #{combine_forward.1} parent=1 // pred_check_branch
      %151 = sbr.rel (0) target = $region81
    $region80: #{combine_forward.1} parent=1 // pred_region
      _
    $region81: #{combine_forward.1} parent=1 // pred_fallthru
      _
    // Predicated region
    $region82: #{combine_forward.1} parent=1 // pred_check
      _
    $region83: #{combine_forward.1} parent=1 // pred_check_branch
      %153 = sbr.rel (0) target = $region85
    $region84: #{combine_forward.1} parent=1 // pred_region
      _
    $region85: #{combine_forward.1} parent=1 // pred_fallthru
      _
    // Predicated region
    $region86: #{combine_forward.1} parent=1 // pred_check
      _
    $region87: #{combine_forward.1} parent=1 // pred_check_branch
      %155 = sbr.rel (0) target = $region89
    $region88: #{combine_forward.1} parent=1 // pred_region
      _
    $region89: #{combine_forward.1} parent=1 // pred_fallthru
      _
    // Predicated region
    $region90: #{combine_forward.1} parent=1 // pred_check
      _
    $region91: #{combine_forward.1} parent=1 // pred_check_branch
      %157 = sbr.rel (0) target = $region93
    $region92: #{combine_forward.1} parent=1 // pred_region
      _
    $region93: #{combine_forward.1} parent=1 // pred_fallthru
      _
    // Predicated region
    $region94: #{combine_forward.1} parent=1 // pred_check
      _
    $region95: #{combine_forward.1} parent=1 // pred_check_branch
      %159 = sbr.rel (0) target = $region97
    $region96: #{combine_forward.1} parent=1 // pred_region
      _
    $region97: #{combine_forward.1} parent=1 // pred_fallthru
      _
    // Predicated region
    $region98: #{combine_forward.1} parent=1 // pred_check
      _
    $region99: #{combine_forward.1} parent=1 // pred_check_branch
      %161 = sbr.rel (0) target = $region101
    $region100: #{combine_forward.1} parent=1 // pred_region
      _
    $region101: #{combine_forward.1} parent=1 // pred_fallthru
      _
    // Predicated region
    $region102: #{combine_forward.1} parent=1 // pred_check
      _
    $region103: #{combine_forward.1} parent=1 // pred_check_branch
      %163 = sbr.rel (0) target = $region105
    $region104: #{combine_forward.1} parent=1 // pred_region
      _
    $region105: #{combine_forward.1} parent=1 // pred_fallthru
      _
    // Predicated region
    $region106: #{combine_forward.1} parent=1 // pred_check
      _
    $region107: #{combine_forward.1} parent=1 // pred_check_branch
      %165 = sbr.rel (0) target = $region109
    $region108: #{combine_forward.1} parent=1 // pred_region
      _
    $region109: #{combine_forward.1} parent=1 // pred_fallthru
      _
    // Predicated region
    $region110: #{combine_forward.1} parent=1 // pred_check
      _
    $region111: #{combine_forward.1} parent=1 // pred_check_branch
      %167 = sbr.rel (0) target = $region113
    $region112: #{combine_forward.1} parent=1 // pred_region
      _
    $region113: #{combine_forward.1} parent=1 // pred_fallthru
      _
    // Predicated region
    $region114: #{combine_forward.1} parent=1 // pred_check
      _
    $region115: #{combine_forward.1} parent=1 // pred_check_branch
      %169 = sbr.rel (0) target = $region117
    $region116: #{combine_forward.1} parent=1 // pred_region
      _
    $region117: #{combine_forward.1} parent=1 // pred_fallthru
      _
    // Predicated region
    $region118: #{combine_forward.1} parent=1 // pred_check
      _
    $region119: #{combine_forward.1} parent=1 // pred_check_branch
      %171 = sbr.rel (0) target = $region121
    $region120: #{combine_forward.1} parent=1 // pred_region
      _
    $region121: #{combine_forward.1} parent=1 // pred_fallthru
      _
    // Predicated region
    $region122: #{combine_forward.1} parent=1 // pred_check
      _
    $region123: #{combine_forward.1} parent=1 // pred_check_branch
      %173 = sbr.rel (0) target = $region125
    $region124: #{combine_forward.1} parent=1 // pred_region
      _
    $region125: #{combine_forward.1} parent=1 // pred_fallthru
      _
    // Predicated region
    $region126: #{combine_forward.1} parent=1 // pred_check
      _
    $region127: #{combine_forward.1} parent=1 // pred_check_branch
      %175 = sbr.rel (0) target = $region129
    $region128: #{combine_forward.1} parent=1 // pred_region
      _
    $region129: #{combine_forward.1} parent=1 // pred_fallthru
      _
    // Predicated region
    $region130: #{combine_forward.1} parent=1 // pred_check
      _
    $region131: #{combine_forward.1} parent=1 // pred_check_branch
      %177 = sbr.rel (0) target = $region133
    $region132: #{combine_forward.1} parent=1 // pred_region
      _
    $region133: #{combine_forward.1} parent=1 // pred_fallthru
      _
    // Predicated region
    $region134: #{combine_forward.1} parent=1 // pred_check
      _
    $region135: #{combine_forward.1} parent=1 // pred_check_branch
      %179 = sbr.rel (0) target = $region137
    $region136: #{combine_forward.1} parent=1 // pred_region
      _
    $region137: #{combine_forward.1} parent=1 // pred_fallthru
      _
    // Predicated region
    $region138: #{combine_forward.1} parent=1 // pred_check
      _
    $region139: #{combine_forward.1} parent=1 // pred_check_branch
      %181 = sbr.rel (0) target = $region141
    $region140: #{combine_forward.1} parent=1 // pred_region
      _
    $region141: #{combine_forward.1} parent=1 // pred_fallthru
      _
    // Predicated region
    $region142: #{combine_forward.1} parent=1 // pred_check
      _
    $region143: #{combine_forward.1} parent=1 // pred_check_branch
      %183 = sbr.rel (0) target = $region145
    $region144: #{combine_forward.1} parent=1 // pred_region
      _
    $region145: #{combine_forward.1} parent=1 // pred_fallthru
      _
    // Predicated region
    $region146: #{combine_forward.1} parent=1 // pred_check
      _
    $region147: #{combine_forward.1} parent=1 // pred_check_branch
      %185 = sbr.rel (0) target = $region149
    $region148: #{combine_forward.1} parent=1 // pred_region
      _
    $region149: #{combine_forward.1} parent=1 // pred_fallthru
      _
    // Predicated region
    $region150: #{combine_forward.1} parent=1 // pred_check
      _
    $region151: #{combine_forward.1} parent=1 // pred_check_branch
      %187 = sbr.rel (0) target = $region153
    $region152: #{combine_forward.1} parent=1 // pred_region
      _
    $region153: #{combine_forward.1} parent=1 // pred_fallthru
      _
    // Predicated region
    $region154: #{combine_forward.1} parent=1 // pred_check
      _
    $region155: #{combine_forward.1} parent=1 // pred_check_branch
      %189 = sbr.rel (0) target = $region157
    $region156: #{combine_forward.1} parent=1 // pred_region
      _
    $region157: #{combine_forward.1} parent=1 // pred_fallthru
      _
    // Predicated region
    $region158: #{combine_forward.1} parent=1 // pred_check
      _
    $region159: #{combine_forward.1} parent=1 // pred_check_branch
      %191 = sbr.rel (0) target = $region161
    $region160: #{combine_forward.1} parent=1 // pred_region
      _
    $region161: #{combine_forward.1} parent=1 // pred_fallthru
      _
    // Predicated region
    $region162: #{combine_forward.1} parent=1 // pred_check
      _
    $region163: #{combine_forward.1} parent=1 // pred_check_branch
      %193 = sbr.rel (0) target = $region165
    $region164: #{combine_forward.1} parent=1 // pred_region
      _
    $region165: #{combine_forward.1} parent=1 // pred_fallthru
      _
    // Predicated region
    $region166: #{combine_forward.1} parent=1 // pred_check
      _
    $region167: #{combine_forward.1} parent=1 // pred_check_branch
      %195 = sbr.rel (0) target = $region169
    $region168: #{combine_forward.1} parent=1 // pred_region
      _
    $region169: #{combine_forward.1} parent=1 // pred_fallthru
      _
    %v196 = vld [vmem:[%s1] sm:$0xff]
    %v197 = vld [vmem:[%s1 + $0x8] sm:$0xff]
    %v198 = vld [vmem:[%s3] sm:$0xff]
    %v199 = vld [vmem:[%s3 + $0x8] sm:$0xff]
    %v200 = vld [vmem:[%s5] sm:$0xff]
    %v201 = vld [vmem:[%s5 + $0x8] sm:$0xff]
    %v202 = vld [vmem:[%s5 + $0x10] sm:$0xff]
    %v203 = vld [vmem:[%s5 + $0x18] sm:$0xff]
    %vm204 = vcmask 261120
    %v206 = vsel %vm204, %v196, 0
    %v209 = vsel %vm204, %v197, 0
    %211 = vmatpush.msra.mxu0 0.0
    %212 = vmatpush.msra.mxu0 0.0
    %213 = vmatpush.msra.mxu0 0.0
    %214 = vmatpush.msra.mxu0 0.0
    %215 = vmatpush.msra.mxu0 0.0
    %216 = vmatpush.msra.mxu0 0.0
    %217 = vmatpush.msra.mxu0 0.0
    %218 = vmatpush.msra.mxu0 0.0
    %219 = vmatpush.msra.mxu0 0.0
    %220 = vmatpush.msra.mxu0 0.0
    %221 = vmatpush.msra.mxu0 0.0
    %222 = vmatpush.msra.mxu0 0.0
    %223 = vmatpush.msra.mxu0 %v203
    %224 = vmatpush.msra.mxu0 %v202
    %225 = vmatpush.msra.mxu0 %v201
    %226 = vmatpush.msra.mxu0 %v200
    %227 = vmatmul.f32.gmra.mxu0 %v206
    %v228 = vpop.f32.mrf.mxu0
    %v229 = vadd.f32 0.0, %v228
    %230 = vmatmul.f32.gmra.mxu0 %v209
    %v231 = vpop.f32.mrf.mxu0
    %v232 = vadd.f32 0.0, %v231
    %233 = vdwg.mxu0
    %v234 = vld [vmem:[%s7] sm:$0x1]
    %v236 = vperm.slane %v234, 0
    %v238 = vadd.f32 %v229, %v236
    %v239 = vadd.f32 %v232, %v236
    %v240 = vmax.f32 %v238, 0.0
    %v241 = vmax.f32 %v239, 0.0
    %v242 = vld [vmem:[%s9] sm:$0xff]
    %v243 = vld [vmem:[%s9 + $0x8] sm:$0xff]
    %v244 = vld [vmem:[%s9 + $0x10] sm:$0xff]
    %v245 = vld [vmem:[%s9 + $0x18] sm:$0xff]
    %v246 = vld [vmem:[%s9 + $0x20] sm:$0xff]
    %v247 = vld [vmem:[%s9 + $0x28] sm:$0xff]
    %v248 = vld [vmem:[%s9 + $0x30] sm:$0xff]
    %v249 = vld [vmem:[%s9 + $0x38] sm:$0xff]
    %v250 = vld [vmem:[%s11] sm:$0x1]
    %v252 = vperm.slane %v250, 0
    %vm254 = vcmask 523264
    %v256 = vsel %vm254, %v240, 0
    %v259 = vsel %vm254, %v241, 0
    %261 = vmatpush.msra.mxu0 0.0
    %262 = vmatpush.msra.mxu0 0.0
    %263 = vmatpush.msra.mxu0 0.0
    %264 = vmatpush.msra.mxu0 0.0
    %265 = vmatpush.msra.mxu0 0.0
    %266 = vmatpush.msra.mxu0 0.0
    %267 = vmatpush.msra.mxu0 0.0
    %268 = vmatpush.msra.mxu0 0.0
    %269 = vmatpush.msra.mxu0 %v249
    %270 = vmatpush.msra.mxu0 %v248
    %271 = vmatpush.msra.mxu0 %v247
    %272 = vmatpush.msra.mxu0 %v246
    %273 = vmatpush.msra.mxu0 %v245
    %274 = vmatpush.msra.mxu0 %v244
    %275 = vmatpush.msra.mxu0 %v243
    %276 = vmatpush.msra.mxu0 %v242
    %277 = vmatmul.f32.gmra.mxu0 %v256
    %v278 = vpop.f32.mrf.mxu0
    %v279 = vadd.f32 %v252, %v278
    %280 = vmatmul.f32.gmra.mxu0 %v259
    %v281 = vpop.f32.mrf.mxu0
    %v282 = vadd.f32 %v252, %v281
    %283 = vdwg.mxu0
    %v284 = vmax.f32 %v279, 0.0
    %v285 = vmax.f32 %v282, 0.0
    %v286 = vld [vmem:[%s13] sm:$0xff]
    %v287 = vld [vmem:[%s13 + $0x8] sm:$0xff]
    %v288 = vld [vmem:[%s13 + $0x10] sm:$0xff]
    %v289 = vld [vmem:[%s13 + $0x18] sm:$0xff]
    %v290 = vld [vmem:[%s15] sm:$0x1]
    %v292 = vperm.slane %v290, 0
    %v295 = vsel %vm204, %v284, 0
    %v298 = vsel %vm204, %v285, 0
    %300 = vmatpush.msra.mxu0 0.0
    %301 = vmatpush.msra.mxu0 0.0
    %302 = vmatpush.msra.mxu0 0.0
    %303 = vmatpush.msra.mxu0 0.0
    %304 = vmatpush.msra.mxu0 0.0
    %305 = vmatpush.msra.mxu0 0.0
    %306 = vmatpush.msra.mxu0 0.0
    %307 = vmatpush.msra.mxu0 0.0
    %308 = vmatpush.msra.mxu0 0.0
    %309 = vmatpush.msra.mxu0 0.0
    %310 = vmatpush.msra.mxu0 0.0
    %311 = vmatpush.msra.mxu0 0.0
    %312 = vmatpush.msra.mxu0 %v289
    %313 = vmatpush.msra.mxu0 %v288
    %314 = vmatpush.msra.mxu0 %v287
    %315 = vmatpush.msra.mxu0 %v286
    %316 = vmatmul.f32.gmra.mxu0 %v295
    %v317 = vpop.f32.mrf.mxu0
    %v318 = vadd.f32 %v292, %v317
    %319 = vmatmul.f32.gmra.mxu0 %v298
    %v320 = vpop.f32.mrf.mxu0
    %v321 = vadd.f32 %v292, %v320
    %322 = vdwg.mxu0
    %v323 = vmax.f32 %v318, 0.0
    %v324 = vmax.f32 %v321, 0.0
    %v325 = vld [vmem:[%s17] sm:$0xff]
    %v326 = vld [vmem:[%s17 + $0x8] sm:$0xff]
    %v327 = vld [vmem:[%s19] sm:$0x1]
    %v329 = vperm.slane %v327, 0
    %vm331 = vcmask 130048
    %v333 = vsel %vm331, %v323, 0
    %v336 = vsel %vm331, %v324, 0
    %338 = vmatpush.msra.mxu0 0.0
    %339 = vmatpush.msra.mxu0 0.0
    %340 = vmatpush.msra.mxu0 0.0
    %341 = vmatpush.msra.mxu0 0.0
    %342 = vmatpush.msra.mxu0 0.0
    %343 = vmatpush.msra.mxu0 0.0
    %344 = vmatpush.msra.mxu0 0.0
    %345 = vmatpush.msra.mxu0 0.0
    %346 = vmatpush.msra.mxu0 0.0
    %347 = vmatpush.msra.mxu0 0.0
    %348 = vmatpush.msra.mxu0 0.0
    %349 = vmatpush.msra.mxu0 0.0
    %350 = vmatpush.msra.mxu0 0.0
    %351 = vmatpush.msra.mxu0 0.0
    %352 = vmatpush.msra.mxu0 %v326
    %353 = vmatpush.msra.mxu0 %v325
    %354 = vmatmul.f32.gmra.mxu0 %v333
    %v355 = vpop.f32.mrf.mxu0
    %v356 = vadd.f32 %v329, %v355
    %357 = vmatmul.f32.gmra.mxu0 %v336
    %v358 = vpop.f32.mrf.mxu0
    %v359 = vadd.f32 %v329, %v358
    %360 = vdwg.mxu0
    %v361 = vld [vmem:[%s37] sm:$0x1]
    %v362 = vld [vmem:[%s39] sm:$0x1]
    %v364 = vperm.slane %v361, 0
    %365 = vrot.lane.b32.xlu0 %v364, 64
    %v366 = vpop.permute.xlu0 %365
    %v368 = vmul.f32 %v229, %v366
    %v369 = vmul.f32 %v232, %v366
    %372 = vrot.lane.b32.xlu0 %v368, 64
    %v373 = vpop.permute.xlu0 %372
    %374 = vrot.lane.b32.xlu0 %v369, 64
    %v375 = vpop.permute.xlu0 %374
    %v378 = vsel %vm254, %v373, 0.0
    %379 = vadd.xlane.f32.xlu0 %v378
    %v380 = vpop.xlane.xlu0 %379
    %v381 = vsel %vm254, %v375, 0.0
    %382 = vadd.xlane.f32.xlu0 %v381
    %v383 = vpop.xlane.xlu0 %382
    %v385 = vperm.slane %v362, 0
    %386 = vrot.lane.b32.xlu0 %v385, 64
    %v387 = vpop.permute.xlu0 %386
    %v389 = vmul.f32 %v229, %v387
    %v390 = vmul.f32 %v232, %v387
    %393 = vrot.lane.b32.xlu0 %v389, 64
    %v394 = vpop.permute.xlu0 %393
    %395 = vrot.lane.b32.xlu0 %v390, 64
    %v396 = vpop.permute.xlu0 %395
    %v399 = vsel %vm254, %v394, 0.0
    %400 = vadd.xlane.f32.xlu0 %v399
    %v401 = vpop.xlane.xlu0 %400
    %v402 = vsel %vm254, %v396, 0.0
    %403 = vadd.xlane.f32.xlu0 %v402
    %v404 = vpop.xlane.xlu0 %403
    %v407 = vlaneseq
    %v408 = vand.u32 %v407, 127
    %v409 = vperm.slane %v401, %v408
    %v410 = vadd.s32 %v408, 4294967288
    %v411 = vperm.slane %v404, %v410
    %vm412 = vcmask 130112
    %v413 = vsel %vm412, %v411, %v409
    %vm414 = vcmask 1042434
    %v415 = vsel %vm414, %v413, %v413
    %vm416 = vcmask 1043459
    %v417 = vsel %vm416, %v413, %v415
    %vm418 = vcmask 1044484
    %v419 = vsel %vm418, %v413, %v417
    %vm420 = vcmask 1045509
    %v421 = vsel %vm420, %v413, %v419
    %vm422 = vcmask 1046534
    %v423 = vsel %vm422, %v413, %v421
    %vm424 = vcmask 1047559
    %v425 = vsel %vm424, %v413, %v423
    %v427 = vadd.f32 %v380, %v425
    %v428 = vadd.f32 %v383, %v425
    %vm429 = vcmp.gt.f32.partialorder %v427, 0.0
    %vm430 = vcmp.gt.f32.partialorder %v428, 0.0
    %v431 = vmul.f32 %v427, 0.2
    %v432 = vmul.f32 %v428, 0.2
    %v433 = vsel %vm429, %v427, %v431
    %v434 = vsel %vm430, %v428, %v432
    %vm435 = vcmp.gt.f32.partialorder %v198, 0.0
    %vm436 = vcmp.gt.f32.partialorder %v199, 0.0
    %v437 = vsel %vm435, %v433, -9e+15
    %v438 = vsel %vm436, %v434, -9e+15
    %v439 = vsel %vm331, %v437, -inf
    %440 = vmax.xlane.f32.xlu0 %v439
    %v441 = vpop.xlane.xlu0 %440
    %v442 = vsel %vm331, %v438, -inf
    %443 = vmax.xlane.f32.xlu0 %v442
    %v444 = vpop.xlane.xlu0 %443
    %v445 = vsub.f32 %v437, %v441
    %v446 = vsub.f32 %v438, %v444
    %v447 = vmul.f32 %v445, 1.442695
    %v448 = vpow.pop %v447
    %v449 = vmul.f32 %v446, 1.442695
    %v450 = vpow.pop %v449
    %v451 = vsel %vm331, %v448, 0.0
    %452 = vadd.xlane.f32.xlu0 %v451
    %v453 = vpop.xlane.xlu0 %452
    %v454 = vsel %vm331, %v450, 0.0
    %455 = vadd.xlane.f32.xlu0 %v454
    %v456 = vpop.xlane.xlu0 %455
    %v457 = vrcp.pop %v453
    %v458 = vrcp.pop %v456
    %v459 = vmul.f32 %v448, %v457
    %v460 = vmul.f32 %v450, %v458
    %463 = vrot.lane.b32.xlu0 %v229, 64
    %v464 = vpop.permute.xlu0 %463
    %465 = vrot.lane.b32.xlu0 %v232, 64
    %v466 = vpop.permute.xlu0 %465
    %v470 = vsel %vm331, %v459, 0
    %v473 = vsel %vm331, %v460, 0
    %475 = vmatpush.msra.mxu0 0.0
    %476 = vmatpush.msra.mxu0 0.0
    %477 = vmatpush.msra.mxu0 0.0
    %478 = vmatpush.msra.mxu0 0.0
    %479 = vmatpush.msra.mxu0 0.0
    %480 = vmatpush.msra.mxu0 0.0
    %481 = vmatpush.msra.mxu0 0.0
    %482 = vmatpush.msra.mxu0 0.0
    %483 = vmatpush.msra.mxu0 0.0
    %484 = vmatpush.msra.mxu0 0.0
    %485 = vmatpush.msra.mxu0 0.0
    %486 = vmatpush.msra.mxu0 0.0
    %487 = vmatpush.msra.mxu0 0.0
    %488 = vmatpush.msra.mxu0 0.0
    %489 = vmatpush.msra.mxu0 %v466
    %490 = vmatpush.msra.mxu0 %v464
    %491 = vmatmul.f32.gmra.mxu0 %v470
    %v492 = vpop.f32.mrf.mxu0
    %v493 = vadd.f32 0.0, %v492
    %494 = vmatmul.f32.gmra.mxu0 %v473
    %v495 = vpop.f32.mrf.mxu0
    %v496 = vadd.f32 0.0, %v495
    %497 = vdwg.mxu0
    %vm498 = vcmp.gt.f32.partialorder %v493, 0.0
    %vm499 = vcmp.gt.f32.partialorder %v496, 0.0
    %v500 = vmin.f32 %v493, 0.0
    %v501 = vmin.f32 %v496, 0.0
    %v502 = vmul.f32 %v500, 1.442695
    %v503 = vpow.pop %v502
    %v504 = vmul.f32 %v501, 1.442695
    %v505 = vpow.pop %v504
    %v506 = vsub.f32 %v503, 1.0
    %v507 = vsub.f32 %v505, 1.0
    %v508 = vsel %vm498, %v493, %v506
    %v509 = vsel %vm499, %v496, %v507
    %v510 = vld [vmem:[%s41] sm:$0xff]
    %v511 = vld [vmem:[%s41 + $0x8] sm:$0xff]
    %v512 = vld [vmem:[%s41 + $0x10] sm:$0xff]
    %v513 = vld [vmem:[%s41 + $0x18] sm:$0xff]
    %v514 = vld [vmem:[%s41 + $0x20] sm:$0xff]
    %v515 = vld [vmem:[%s41 + $0x28] sm:$0xff]
    %v516 = vld [vmem:[%s41 + $0x30] sm:$0xff]
    %v517 = vld [vmem:[%s41 + $0x38] sm:$0xff]
    %v518 = vld [vmem:[%s43] sm:$0x1]
    %v519 = vld [vmem:[%s45] sm:$0x1]
    %v521 = vsel %vm254, %v508, 0
    %v524 = vsel %vm254, %v509, 0
    %526 = vmatpush.msra.mxu0 0.0
    %527 = vmatpush.msra.mxu0 0.0
    %528 = vmatpush.msra.mxu0 0.0
    %529 = vmatpush.msra.mxu0 0.0
    %530 = vmatpush.msra.mxu0 0.0
    %531 = vmatpush.msra.mxu0 0.0
    %532 = vmatpush.msra.mxu0 0.0
    %533 = vmatpush.msra.mxu0 0.0
    %534 = vmatpush.msra.mxu0 %v517
    %535 = vmatpush.msra.mxu0 %v516
    %536 = vmatpush.msra.mxu0 %v515
    %537 = vmatpush.msra.mxu0 %v514
    %538 = vmatpush.msra.mxu0 %v513
    %539 = vmatpush.msra.mxu0 %v512
    %540 = vmatpush.msra.mxu0 %v511
    %541 = vmatpush.msra.mxu0 %v510
    %542 = vmatmul.f32.gmra.mxu0 %v521
    %v543 = vpop.f32.mrf.mxu0
    %v544 = vadd.f32 0.0, %v543
    %545 = vmatmul.f32.gmra.mxu0 %v524
    %v546 = vpop.f32.mrf.mxu0
    %v547 = vadd.f32 0.0, %v546
    %548 = vdwg.mxu0
    %v550 = vperm.slane %v518, 0
    %v552 = vmul.f32 %v544, %v550
    %v553 = vmul.f32 %v547, %v550
    %v554 = vsel %vm204, %v552, 0.0
    %555 = vadd.xlane.f32.xlu0 %v554
    %v556 = vpop.xlane.xlu0 %555
    %v557 = vsel %vm204, %v553, 0.0
    %558 = vadd.xlane.f32.xlu0 %v557
    %v559 = vpop.xlane.xlu0 %558
    %v561 = vperm.slane %v519, 0
    %v563 = vmul.f32 %v544, %v561
    %v564 = vmul.f32 %v547, %v561
    %v565 = vsel %vm204, %v563, 0.0
    %566 = vadd.xlane.f32.xlu0 %v565
    %v567 = vpop.xlane.xlu0 %566
    %v568 = vsel %vm204, %v564, 0.0
    %569 = vadd.xlane.f32.xlu0 %v568
    %v570 = vpop.xlane.xlu0 %569
    %v573 = vperm.slane %v567, %v408
    %v574 = vperm.slane %v570, %v410
    %v575 = vsel %vm412, %v574, %v573
    %v576 = vsel %vm414, %v575, %v575
    %v577 = vsel %vm416, %v575, %v576
    %v578 = vsel %vm418, %v575, %v577
    %v579 = vsel %vm420, %v575, %v578
    %v580 = vsel %vm422, %v575, %v579
    %v581 = vsel %vm424, %v575, %v580
    %v583 = vadd.f32 %v556, %v581
    %v584 = vadd.f32 %v559, %v581
    %vm585 = vcmp.gt.f32.partialorder %v583, 0.0
    %vm586 = vcmp.gt.f32.partialorder %v584, 0.0
    %v587 = vmul.f32 %v583, 0.2
    %v588 = vmul.f32 %v584, 0.2
    %v589 = vsel %vm585, %v583, %v587
    %v590 = vsel %vm586, %v584, %v588
    %v591 = vsel %vm435, %v589, -9e+15
    %v592 = vsel %vm436, %v590, -9e+15
    %v593 = vsel %vm331, %v591, -inf
    %594 = vmax.xlane.f32.xlu0 %v593
    %v595 = vpop.xlane.xlu0 %594
    %v596 = vsel %vm331, %v592, -inf
    %597 = vmax.xlane.f32.xlu0 %v596
    %v598 = vpop.xlane.xlu0 %597
    %v599 = vsub.f32 %v591, %v595
    %v600 = vsub.f32 %v592, %v598
    %v601 = vmul.f32 %v599, 1.442695
    %v602 = vpow.pop %v601
    %v603 = vmul.f32 %v600, 1.442695
    %v604 = vpow.pop %v603
    %v605 = vsel %vm331, %v602, 0.0
    %606 = vadd.xlane.f32.xlu0 %v605
    %v607 = vpop.xlane.xlu0 %606
    %v608 = vsel %vm331, %v604, 0.0
    %609 = vadd.xlane.f32.xlu0 %v608
    %v610 = vpop.xlane.xlu0 %609
    %v611 = vrcp.pop %v607
    %v612 = vrcp.pop %v610
    %v613 = vmul.f32 %v602, %v611
    %v614 = vmul.f32 %v604, %v612
    %v616 = vsel %vm331, %v613, 0
    %v619 = vsel %vm331, %v614, 0
    %621 = vmatpush.msra.mxu0 0.0
    %622 = vmatpush.msra.mxu0 0.0
    %623 = vmatpush.msra.mxu0 0.0
    %624 = vmatpush.msra.mxu0 0.0
    %625 = vmatpush.msra.mxu0 0.0
    %626 = vmatpush.msra.mxu0 0.0
    %627 = vmatpush.msra.mxu0 0.0
    %628 = vmatpush.msra.mxu0 0.0
    %629 = vmatpush.msra.mxu0 0.0
    %630 = vmatpush.msra.mxu0 0.0
    %631 = vmatpush.msra.mxu0 0.0
    %632 = vmatpush.msra.mxu0 0.0
    %633 = vmatpush.msra.mxu0 0.0
    %634 = vmatpush.msra.mxu0 0.0
    %635 = vmatpush.msra.mxu0 %v547
    %636 = vmatpush.msra.mxu0 %v544
    %637 = vmatmul.f32.gmra.mxu0 %v616
    %v638 = vpop.f32.mrf.mxu0
    %v639 = vadd.f32 0.0, %v638
    %640 = vmatmul.f32.gmra.mxu0 %v619
    %v641 = vpop.f32.mrf.mxu0
    %v642 = vadd.f32 0.0, %v641
    %643 = vdwg.mxu0
    %vm644 = vcmp.gt.f32.partialorder %v639, 0.0
    %vm645 = vcmp.gt.f32.partialorder %v642, 0.0
    %v646 = vmin.f32 %v639, 0.0
    %v647 = vmin.f32 %v642, 0.0
    %v648 = vmul.f32 %v646, 1.442695
    %v649 = vpow.pop %v648
    %v650 = vmul.f32 %v647, 1.442695
    %v651 = vpow.pop %v650
    %v652 = vsub.f32 %v649, 1.0
    %v653 = vsub.f32 %v651, 1.0
    %v654 = vsel %vm644, %v639, %v652
    %v655 = vsel %vm645, %v642, %v653
    %v656 = vld [vmem:[%s47] sm:$0xff]
    %v657 = vld [vmem:[%s47 + $0x8] sm:$0xff]
    %v658 = vld [vmem:[%s47 + $0x10] sm:$0xff]
    %v659 = vld [vmem:[%s47 + $0x18] sm:$0xff]
    %v660 = vld [vmem:[%s49] sm:$0x1]
    %v661 = vld [vmem:[%s51] sm:$0x1]
    %v663 = vsel %vm204, %v654, 0
    %v666 = vsel %vm204, %v655, 0
    %668 = vmatpush.msra.mxu0 0.0
    %669 = vmatpush.msra.mxu0 0.0
    %670 = vmatpush.msra.mxu0 0.0
    %671 = vmatpush.msra.mxu0 0.0
    %672 = vmatpush.msra.mxu0 0.0
    %673 = vmatpush.msra.mxu0 0.0
    %674 = vmatpush.msra.mxu0 0.0
    %675 = vmatpush.msra.mxu0 0.0
    %676 = vmatpush.msra.mxu0 0.0
    %677 = vmatpush.msra.mxu0 0.0
    %678 = vmatpush.msra.mxu0 0.0
    %679 = vmatpush.msra.mxu0 0.0
    %680 = vmatpush.msra.mxu0 %v659
    %681 = vmatpush.msra.mxu0 %v658
    %682 = vmatpush.msra.mxu0 %v657
    %683 = vmatpush.msra.mxu0 %v656
    %684 = vmatmul.f32.gmra.mxu0 %v663
    %v685 = vpop.f32.mrf.mxu0
    %v686 = vadd.f32 0.0, %v685
    %687 = vmatmul.f32.gmra.mxu0 %v666
    %v688 = vpop.f32.mrf.mxu0
    %v689 = vadd.f32 0.0, %v688
    %690 = vdwg.mxu0
    %v692 = vperm.slane %v660, 0
    %v694 = vmul.f32 %v686, %v692
    %v695 = vmul.f32 %v689, %v692
    %v696 = vsel %vm331, %v694, 0.0
    %697 = vadd.xlane.f32.xlu0 %v696
    %v698 = vpop.xlane.xlu0 %697
    %v699 = vsel %vm331, %v695, 0.0
    %700 = vadd.xlane.f32.xlu0 %v699
    %v701 = vpop.xlane.xlu0 %700
    %v703 = vperm.slane %v661, 0
    %v705 = vmul.f32 %v686, %v703
    %v706 = vmul.f32 %v689, %v703
    %v707 = vsel %vm331, %v705, 0.0
    %708 = vadd.xlane.f32.xlu0 %v707
    %v709 = vpop.xlane.xlu0 %708
    %v710 = vsel %vm331, %v706, 0.0
    %711 = vadd.xlane.f32.xlu0 %v710
    %v712 = vpop.xlane.xlu0 %711
    %v715 = vperm.slane %v709, %v408
    %v716 = vperm.slane %v712, %v410
    %v717 = vsel %vm412, %v716, %v715
    %v718 = vsel %vm414, %v717, %v717
    %v719 = vsel %vm416, %v717, %v718
    %v720 = vsel %vm418, %v717, %v719
    %v721 = vsel %vm420, %v717, %v720
    %v722 = vsel %vm422, %v717, %v721
    %v723 = vsel %vm424, %v717, %v722
    %v725 = vadd.f32 %v698, %v723
    %v726 = vadd.f32 %v701, %v723
    %vm727 = vcmp.gt.f32.partialorder %v725, 0.0
    %vm728 = vcmp.gt.f32.partialorder %v726, 0.0
    %v729 = vmul.f32 %v725, 0.2
    %v730 = vmul.f32 %v726, 0.2
    %v731 = vsel %vm727, %v725, %v729
    %v732 = vsel %vm728, %v726, %v730
    %v733 = vsel %vm435, %v731, -9e+15
    %v734 = vsel %vm436, %v732, -9e+15
    %v735 = vsel %vm331, %v733, -inf
    %736 = vmax.xlane.f32.xlu0 %v735
    %v737 = vpop.xlane.xlu0 %736
    %v738 = vsel %vm331, %v734, -inf
    %739 = vmax.xlane.f32.xlu0 %v738
    %v740 = vpop.xlane.xlu0 %739
    %v741 = vsub.f32 %v733, %v737
    %v742 = vsub.f32 %v734, %v740
    %v743 = vmul.f32 %v741, 1.442695
    %v744 = vpow.pop %v743
    %v745 = vmul.f32 %v742, 1.442695
    %v746 = vpow.pop %v745
    %v747 = vsel %vm331, %v744, 0.0
    %748 = vadd.xlane.f32.xlu0 %v747
    %v749 = vpop.xlane.xlu0 %748
    %v750 = vsel %vm331, %v746, 0.0
    %751 = vadd.xlane.f32.xlu0 %v750
    %v752 = vpop.xlane.xlu0 %751
    %v753 = vrcp.pop %v749
    %v754 = vrcp.pop %v752
    %v755 = vmul.f32 %v744, %v753
    %v756 = vmul.f32 %v746, %v754
    %v758 = vsel %vm331, %v755, 0
    %v761 = vsel %vm331, %v756, 0
    %763 = vmatpush.msra.mxu0 0.0
    %764 = vmatpush.msra.mxu0 0.0
    %765 = vmatpush.msra.mxu0 0.0
    %766 = vmatpush.msra.mxu0 0.0
    %767 = vmatpush.msra.mxu0 0.0
    %768 = vmatpush.msra.mxu0 0.0
    %769 = vmatpush.msra.mxu0 0.0
    %770 = vmatpush.msra.mxu0 0.0
    %771 = vmatpush.msra.mxu0 0.0
    %772 = vmatpush.msra.mxu0 0.0
    %773 = vmatpush.msra.mxu0 0.0
    %774 = vmatpush.msra.mxu0 0.0
    %775 = vmatpush.msra.mxu0 0.0
    %776 = vmatpush.msra.mxu0 0.0
    %777 = vmatpush.msra.mxu0 %v689
    %778 = vmatpush.msra.mxu0 %v686
    %779 = vmatmul.f32.gmra.mxu0 %v758
    %v780 = vpop.f32.mrf.mxu0
    %v781 = vadd.f32 0.0, %v780
    %782 = vmatmul.f32.gmra.mxu0 %v761
    %v783 = vpop.f32.mrf.mxu0
    %v784 = vadd.f32 0.0, %v783
    %785 = vdwg.mxu0
    %vm786 = vcmp.gt.f32.partialorder %v781, 0.0
    %vm787 = vcmp.gt.f32.partialorder %v784, 0.0
    %v788 = vmin.f32 %v781, 0.0
    %v789 = vmin.f32 %v784, 0.0
    %v790 = vmul.f32 %v788, 1.442695
    %v791 = vpow.pop %v790
    %v792 = vmul.f32 %v789, 1.442695
    %v793 = vpow.pop %v792
    %v794 = vsub.f32 %v791, 1.0
    %v795 = vsub.f32 %v793, 1.0
    %v796 = vsel %vm786, %v781, %v794
    %v797 = vsel %vm787, %v784, %v795
    %v798 = vld [vmem:[%s53] sm:$0xff]
    %v799 = vld [vmem:[%s53 + $0x8] sm:$0xff]
    %v800 = vld [vmem:[%s55] sm:$0x1]
    %v801 = vld [vmem:[%s57] sm:$0x1]
    %v803 = vsel %vm331, %v796, 0
    %v806 = vsel %vm331, %v797, 0
    %808 = vmatpush.msra.mxu0 0.0
    %809 = vmatpush.msra.mxu0 0.0
    %810 = vmatpush.msra.mxu0 0.0
    %811 = vmatpush.msra.mxu0 0.0
    %812 = vmatpush.msra.mxu0 0.0
    %813 = vmatpush.msra.mxu0 0.0
    %814 = vmatpush.msra.mxu0 0.0
    %815 = vmatpush.msra.mxu0 0.0
    %816 = vmatpush.msra.mxu0 0.0
    %817 = vmatpush.msra.mxu0 0.0
    %818 = vmatpush.msra.mxu0 0.0
    %819 = vmatpush.msra.mxu0 0.0
    %820 = vmatpush.msra.mxu0 0.0
    %821 = vmatpush.msra.mxu0 0.0
    %822 = vmatpush.msra.mxu0 %v799
    %823 = vmatpush.msra.mxu0 %v798
    %824 = vmatmul.f32.gmra.mxu0 %v803
    %v825 = vpop.f32.mrf.mxu0
    %v826 = vadd.f32 0.0, %v825
    %827 = vmatmul.f32.gmra.mxu0 %v806
    %v828 = vpop.f32.mrf.mxu0
    %v829 = vadd.f32 0.0, %v828
    %830 = vdwg.mxu0
    %v832 = vperm.slane %v800, 0
    %v834 = vmul.f32 %v826, %v832
    %v835 = vmul.f32 %v829, %v832
    %vm836 = vcmask 64512
    %v837 = vsel %vm836, %v834, 0.0
    %838 = vadd.xlane.f32.xlu0 %v837
    %v839 = vpop.xlane.xlu0 %838
    %v840 = vsel %vm836, %v835, 0.0
    %841 = vadd.xlane.f32.xlu0 %v840
    %v842 = vpop.xlane.xlu0 %841
    %v844 = vperm.slane %v801, 0
    %v846 = vmul.f32 %v826, %v844
    %v847 = vmul.f32 %v829, %v844
    %v848 = vsel %vm836, %v846, 0.0
    %849 = vadd.xlane.f32.xlu0 %v848
    %v850 = vpop.xlane.xlu0 %849
    %v851 = vsel %vm836, %v847, 0.0
    %852 = vadd.xlane.f32.xlu0 %v851
    %v853 = vpop.xlane.xlu0 %852
    %v856 = vperm.slane %v850, %v408
    %v857 = vperm.slane %v853, %v410
    %v858 = vsel %vm412, %v857, %v856
    %v859 = vsel %vm414, %v858, %v858
    %v860 = vsel %vm416, %v858, %v859
    %v861 = vsel %vm418, %v858, %v860
    %v862 = vsel %vm420, %v858, %v861
    %v863 = vsel %vm422, %v858, %v862
    %v864 = vsel %vm424, %v858, %v863
    %v866 = vadd.f32 %v839, %v864
    %v867 = vadd.f32 %v842, %v864
    %vm868 = vcmp.gt.f32.partialorder %v866, 0.0
    %vm869 = vcmp.gt.f32.partialorder %v867, 0.0
    %v870 = vmul.f32 %v866, 0.2
    %v871 = vmul.f32 %v867, 0.2
    %v872 = vsel %vm868, %v866, %v870
    %v873 = vsel %vm869, %v867, %v871
    %v874 = vsel %vm435, %v872, -9e+15
    %v875 = vsel %vm436, %v873, -9e+15
    %v876 = vsel %vm331, %v874, -inf
    %877 = vmax.xlane.f32.xlu0 %v876
    %v878 = vpop.xlane.xlu0 %877
    %v879 = vsel %vm331, %v875, -inf
    %880 = vmax.xlane.f32.xlu0 %v879
    %v881 = vpop.xlane.xlu0 %880
    %v882 = vsub.f32 %v874, %v878
    %v883 = vsub.f32 %v875, %v881
    %v884 = vmul.f32 %v882, 1.442695
    %v885 = vpow.pop %v884
    %v886 = vmul.f32 %v883, 1.442695
    %v887 = vpow.pop %v886
    %v888 = vsel %vm331, %v885, 0.0
    %889 = vadd.xlane.f32.xlu0 %v888
    %v890 = vpop.xlane.xlu0 %889
    %v891 = vsel %vm331, %v887, 0.0
    %892 = vadd.xlane.f32.xlu0 %v891
    %v893 = vpop.xlane.xlu0 %892
    %v894 = vrcp.pop %v890
    %v895 = vrcp.pop %v893
    %v896 = vmul.f32 %v885, %v894
    %v897 = vmul.f32 %v887, %v895
    %v899 = vsel %vm331, %v896, 0
    %v902 = vsel %vm331, %v897, 0
    %904 = vmatpush.msra.mxu0 0.0
    %905 = vmatpush.msra.mxu0 0.0
    %906 = vmatpush.msra.mxu0 0.0
    %907 = vmatpush.msra.mxu0 0.0
    %908 = vmatpush.msra.mxu0 0.0
    %909 = vmatpush.msra.mxu0 0.0
    %910 = vmatpush.msra.mxu0 0.0
    %911 = vmatpush.msra.mxu0 0.0
    %912 = vmatpush.msra.mxu0 0.0
    %913 = vmatpush.msra.mxu0 0.0
    %914 = vmatpush.msra.mxu0 0.0
    %915 = vmatpush.msra.mxu0 0.0
    %916 = vmatpush.msra.mxu0 0.0
    %917 = vmatpush.msra.mxu0 0.0
    %918 = vmatpush.msra.mxu0 %v829
    %919 = vmatpush.msra.mxu0 %v826
    %920 = vmatmul.f32.gmra.mxu0 %v899
    %v921 = vpop.f32.mrf.mxu0
    %v922 = vadd.f32 0.0, %v921
    %923 = vmatmul.f32.gmra.mxu0 %v902
    %v924 = vpop.f32.mrf.mxu0
    %v925 = vadd.f32 0.0, %v924
    %926 = vdwg.mxu0
    %v927 = vld [vmem:[%s59] sm:$0xff]
    %v928 = vld [vmem:[%s61] sm:$0x1]
    %v929 = vld [vmem:[%s63] sm:$0x1]
    %v931 = vsel %vm836, %v922, 0
    %v934 = vsel %vm836, %v925, 0
    %936 = vmatpush.msra.mxu0 0.0
    %937 = vmatpush.msra.mxu0 0.0
    %938 = vmatpush.msra.mxu0 0.0
    %939 = vmatpush.msra.mxu0 0.0
    %940 = vmatpush.msra.mxu0 0.0
    %941 = vmatpush.msra.mxu0 0.0
    %942 = vmatpush.msra.mxu0 0.0
    %943 = vmatpush.msra.mxu0 0.0
    %944 = vmatpush.msra.mxu0 0.0
    %945 = vmatpush.msra.mxu0 0.0
    %946 = vmatpush.msra.mxu0 0.0
    %947 = vmatpush.msra.mxu0 0.0
    %948 = vmatpush.msra.mxu0 0.0
    %949 = vmatpush.msra.mxu0 0.0
    %950 = vmatpush.msra.mxu0 0.0
    %951 = vmatpush.msra.mxu0 %v927
    %952 = vmatmul.f32.gmra.mxu0 %v931
    %v953 = vpop.f32.mrf.mxu0
    %v954 = vadd.f32 0.0, %v953
    %955 = vmatmul.f32.gmra.mxu0 %v934
    %v956 = vpop.f32.mrf.mxu0
    %v957 = vadd.f32 0.0, %v956
    %958 = vdwg.mxu0
    %v960 = vperm.slane %v928, 0
    %v962 = vmul.f32 %v954, %v960
    %v963 = vmul.f32 %v957, %v960
    %v964 = vsel %vm331, %v962, 0.0
    %965 = vadd.xlane.f32.xlu0 %v964
    %v966 = vpop.xlane.xlu0 %965
    %v967 = vsel %vm331, %v963, 0.0
    %968 = vadd.xlane.f32.xlu0 %v967
    %v969 = vpop.xlane.xlu0 %968
    %v971 = vperm.slane %v929, 0
    %v973 = vmul.f32 %v954, %v971
    %v974 = vmul.f32 %v957, %v971
    %v975 = vsel %vm331, %v973, 0.0
    %976 = vadd.xlane.f32.xlu0 %v975
    %v977 = vpop.xlane.xlu0 %976
    %v978 = vsel %vm331, %v974, 0.0
    %979 = vadd.xlane.f32.xlu0 %v978
    %v980 = vpop.xlane.xlu0 %979
    %v983 = vperm.slane %v977, %v408
    %v984 = vperm.slane %v980, %v410
    %v985 = vsel %vm412, %v984, %v983
    %v986 = vsel %vm414, %v985, %v985
    %v987 = vsel %vm416, %v985, %v986
    %v988 = vsel %vm418, %v985, %v987
    %v989 = vsel %vm420, %v985, %v988
    %v990 = vsel %vm422, %v985, %v989
    %v991 = vsel %vm424, %v985, %v990
    %v993 = vadd.f32 %v966, %v991
    %v994 = vadd.f32 %v969, %v991
    %vm995 = vcmp.gt.f32.partialorder %v993, 0.0
    %vm996 = vcmp.gt.f32.partialorder %v994, 0.0
    %v997 = vmul.f32 %v993, 0.2
    %v998 = vmul.f32 %v994, 0.2
    %v999 = vsel %vm995, %v993, %v997
    %v1000 = vsel %vm996, %v994, %v998
    %v1001 = vsel %vm435, %v999, -9e+15
    %v1002 = vsel %vm436, %v1000, -9e+15
    %v1003 = vsel %vm331, %v1001, -inf
    %1004 = vmax.xlane.f32.xlu0 %v1003
    %v1005 = vpop.xlane.xlu0 %1004
    %v1006 = vsel %vm331, %v1002, -inf
    %1007 = vmax.xlane.f32.xlu0 %v1006
    %v1008 = vpop.xlane.xlu0 %1007
    %v1009 = vsub.f32 %v1001, %v1005
    %v1010 = vsub.f32 %v1002, %v1008
    %v1011 = vmul.f32 %v1009, 1.442695
    %v1012 = vpow.pop %v1011
    %v1013 = vmul.f32 %v1010, 1.442695
    %v1014 = vpow.pop %v1013
    %v1015 = vsel %vm331, %v1012, 0.0
    %1016 = vadd.xlane.f32.xlu0 %v1015
    %v1017 = vpop.xlane.xlu0 %1016
    %v1018 = vsel %vm331, %v1014, 0.0
    %1019 = vadd.xlane.f32.xlu0 %v1018
    %v1020 = vpop.xlane.xlu0 %1019
    %v1021 = vrcp.pop %v1017
    %v1022 = vrcp.pop %v1020
    %v1023 = vmul.f32 %v1012, %v1021
    %v1024 = vmul.f32 %v1014, %v1022
    %v1026 = vsel %vm331, %v1023, 0
    %v1029 = vsel %vm331, %v1024, 0
    %1031 = vmatpush.msra.mxu0 0.0
    %1032 = vmatpush.msra.mxu0 0.0
    %1033 = vmatpush.msra.mxu0 0.0
    %1034 = vmatpush.msra.mxu0 0.0
    %1035 = vmatpush.msra.mxu0 0.0
    %1036 = vmatpush.msra.mxu0 0.0
    %1037 = vmatpush.msra.mxu0 0.0
    %1038 = vmatpush.msra.mxu0 0.0
    %1039 = vmatpush.msra.mxu0 0.0
    %1040 = vmatpush.msra.mxu0 0.0
    %1041 = vmatpush.msra.mxu0 0.0
    %1042 = vmatpush.msra.mxu0 0.0
    %1043 = vmatpush.msra.mxu0 0.0
    %1044 = vmatpush.msra.mxu0 0.0
    %1045 = vmatpush.msra.mxu0 %v957
    %1046 = vmatpush.msra.mxu0 %v954
    %1047 = vmatmul.f32.gmra.mxu0 %v1026
    %v1048 = vpop.f32.mrf.mxu0
    %v1049 = vadd.f32 0.0, %v1048
    %1050 = vmatmul.f32.gmra.mxu0 %v1029
    %v1051 = vpop.f32.mrf.mxu0
    %v1052 = vadd.f32 0.0, %v1051
    %1053 = vdwg.mxu0
    %vm1054 = vcmp.gt.f32.partialorder %v1049, 0.0
    %vm1055 = vcmp.gt.f32.partialorder %v1052, 0.0
    %v1056 = vmin.f32 %v1049, 0.0
    %v1057 = vmin.f32 %v1052, 0.0
    %v1058 = vmul.f32 %v1056, 1.442695
    %v1059 = vpow.pop %v1058
    %v1060 = vmul.f32 %v1057, 1.442695
    %v1061 = vpow.pop %v1060
    %v1062 = vsub.f32 %v1059, 1.0
    %v1063 = vsub.f32 %v1061, 1.0
    %v1064 = vsel %vm1054, %v1049, %v1062
    %v1065 = vsel %vm1055, %v1052, %v1063
    %v1066 = vld [vmem:[%s65] sm:$0xff]
    %v1067 = vld [vmem:[%s65 + $0x8] sm:$0xff]
    %v1068 = vld [vmem:[%s67] sm:$0x1]
    %v1069 = vld [vmem:[%s69] sm:$0x1]
    %v1071 = vsel %vm331, %v1064, 0
    %v1074 = vsel %vm331, %v1065, 0
    %1076 = vmatpush.msra.mxu0 0.0
    %1077 = vmatpush.msra.mxu0 0.0
    %1078 = vmatpush.msra.mxu0 0.0
    %1079 = vmatpush.msra.mxu0 0.0
    %1080 = vmatpush.msra.mxu0 0.0
    %1081 = vmatpush.msra.mxu0 0.0
    %1082 = vmatpush.msra.mxu0 0.0
    %1083 = vmatpush.msra.mxu0 0.0
    %1084 = vmatpush.msra.mxu0 0.0
    %1085 = vmatpush.msra.mxu0 0.0
    %1086 = vmatpush.msra.mxu0 0.0
    %1087 = vmatpush.msra.mxu0 0.0
    %1088 = vmatpush.msra.mxu0 0.0
    %1089 = vmatpush.msra.mxu0 0.0
    %1090 = vmatpush.msra.mxu0 %v1067
    %1091 = vmatpush.msra.mxu0 %v1066
    %1092 = vmatmul.f32.gmra.mxu0 %v1071
    %v1093 = vpop.f32.mrf.mxu0
    %v1094 = vadd.f32 0.0, %v1093
    %1095 = vmatmul.f32.gmra.mxu0 %v1074
    %v1096 = vpop.f32.mrf.mxu0
    %v1097 = vadd.f32 0.0, %v1096
    %1098 = vdwg.mxu0
    %v1100 = vperm.slane %v1068, 0
    %v1102 = vmul.f32 %v1094, %v1100
    %v1103 = vmul.f32 %v1097, %v1100
    %v1104 = vsel %vm204, %v1102, 0.0
    %1105 = vadd.xlane.f32.xlu0 %v1104
    %v1106 = vpop.xlane.xlu0 %1105
    %v1107 = vsel %vm204, %v1103, 0.0
    %1108 = vadd.xlane.f32.xlu0 %v1107
    %v1109 = vpop.xlane.xlu0 %1108
    %v1111 = vperm.slane %v1069, 0
    %v1113 = vmul.f32 %v1094, %v1111
    %v1114 = vmul.f32 %v1097, %v1111
    %v1115 = vsel %vm204, %v1113, 0.0
    %1116 = vadd.xlane.f32.xlu0 %v1115
    %v1117 = vpop.xlane.xlu0 %1116
    %v1118 = vsel %vm204, %v1114, 0.0
    %1119 = vadd.xlane.f32.xlu0 %v1118
    %v1120 = vpop.xlane.xlu0 %1119
    %v1123 = vperm.slane %v1117, %v408
    %v1124 = vperm.slane %v1120, %v410
    %v1125 = vsel %vm412, %v1124, %v1123
    %v1126 = vsel %vm414, %v1125, %v1125
    %v1127 = vsel %vm416, %v1125, %v1126
    %v1128 = vsel %vm418, %v1125, %v1127
    %v1129 = vsel %vm420, %v1125, %v1128
    %v1130 = vsel %vm422, %v1125, %v1129
    %v1131 = vsel %vm424, %v1125, %v1130
    %v1133 = vadd.f32 %v1106, %v1131
    %v1134 = vadd.f32 %v1109, %v1131
    %vm1135 = vcmp.gt.f32.partialorder %v1133, 0.0
    %vm1136 = vcmp.gt.f32.partialorder %v1134, 0.0
    %v1137 = vmul.f32 %v1133, 0.2
    %v1138 = vmul.f32 %v1134, 0.2
    %v1139 = vsel %vm1135, %v1133, %v1137
    %v1140 = vsel %vm1136, %v1134, %v1138
    %v1141 = vsel %vm435, %v1139, -9e+15
    %v1142 = vsel %vm436, %v1140, -9e+15
    %v1143 = vsel %vm331, %v1141, -inf
    %1144 = vmax.xlane.f32.xlu0 %v1143
    %v1145 = vpop.xlane.xlu0 %1144
    %v1146 = vsel %vm331, %v1142, -inf
    %1147 = vmax.xlane.f32.xlu0 %v1146
    %v1148 = vpop.xlane.xlu0 %1147
    %v1149 = vsub.f32 %v1141, %v1145
    %v1150 = vsub.f32 %v1142, %v1148
    %v1151 = vmul.f32 %v1149, 1.442695
    %v1152 = vpow.pop %v1151
    %v1153 = vmul.f32 %v1150, 1.442695
    %v1154 = vpow.pop %v1153
    %v1155 = vsel %vm331, %v1152, 0.0
    %1156 = vadd.xlane.f32.xlu0 %v1155
    %v1157 = vpop.xlane.xlu0 %1156
    %v1158 = vsel %vm331, %v1154, 0.0
    %1159 = vadd.xlane.f32.xlu0 %v1158
    %v1160 = vpop.xlane.xlu0 %1159
    %v1161 = vrcp.pop %v1157
    %v1162 = vrcp.pop %v1160
    %v1163 = vmul.f32 %v1152, %v1161
    %v1164 = vmul.f32 %v1154, %v1162
    %v1166 = vsel %vm331, %v1163, 0
    %v1169 = vsel %vm331, %v1164, 0
    %1171 = vmatpush.msra.mxu0 0.0
    %1172 = vmatpush.msra.mxu0 0.0
    %1173 = vmatpush.msra.mxu0 0.0
    %1174 = vmatpush.msra.mxu0 0.0
    %1175 = vmatpush.msra.mxu0 0.0
    %1176 = vmatpush.msra.mxu0 0.0
    %1177 = vmatpush.msra.mxu0 0.0
    %1178 = vmatpush.msra.mxu0 0.0
    %1179 = vmatpush.msra.mxu0 0.0
    %1180 = vmatpush.msra.mxu0 0.0
    %1181 = vmatpush.msra.mxu0 0.0
    %1182 = vmatpush.msra.mxu0 0.0
    %1183 = vmatpush.msra.mxu0 0.0
    %1184 = vmatpush.msra.mxu0 0.0
    %1185 = vmatpush.msra.mxu0 %v1097
    %1186 = vmatpush.msra.mxu0 %v1094
    %1187 = vmatmul.f32.gmra.mxu0 %v1166
    %v1188 = vpop.f32.mrf.mxu0
    %v1189 = vadd.f32 0.0, %v1188
    %1190 = vmatmul.f32.gmra.mxu0 %v1169
    %v1191 = vpop.f32.mrf.mxu0
    %v1192 = vadd.f32 0.0, %v1191
    %1193 = vdwg.mxu0
    %vm1194 = vcmp.gt.f32.partialorder %v1189, 0.0
    %vm1195 = vcmp.gt.f32.partialorder %v1192, 0.0
    %v1196 = vmin.f32 %v1189, 0.0
    %v1197 = vmin.f32 %v1192, 0.0
    %v1198 = vmul.f32 %v1196, 1.442695
    %v1199 = vpow.pop %v1198
    %v1200 = vmul.f32 %v1197, 1.442695
    %v1201 = vpow.pop %v1200
    %v1202 = vsub.f32 %v1199, 1.0
    %v1203 = vsub.f32 %v1201, 1.0
    %v1204 = vsel %vm1194, %v1189, %v1202
    %v1205 = vsel %vm1195, %v1192, %v1203
    %v1206 = vld [vmem:[%s71] sm:$0xff]
    %v1207 = vld [vmem:[%s71 + $0x8] sm:$0xff]
    %v1208 = vld [vmem:[%s71 + $0x10] sm:$0xff]
    %v1209 = vld [vmem:[%s71 + $0x18] sm:$0xff]
    %v1210 = vld [vmem:[%s73] sm:$0x1]
    %v1211 = vld [vmem:[%s75] sm:$0x1]
    %v1213 = vsel %vm204, %v1204, 0
    %v1216 = vsel %vm204, %v1205, 0
    %1218 = vmatpush.msra.mxu0 0.0
    %1219 = vmatpush.msra.mxu0 0.0
    %1220 = vmatpush.msra.mxu0 0.0
    %1221 = vmatpush.msra.mxu0 0.0
    %1222 = vmatpush.msra.mxu0 0.0
    %1223 = vmatpush.msra.mxu0 0.0
    %1224 = vmatpush.msra.mxu0 0.0
    %1225 = vmatpush.msra.mxu0 0.0
    %1226 = vmatpush.msra.mxu0 0.0
    %1227 = vmatpush.msra.mxu0 0.0
    %1228 = vmatpush.msra.mxu0 0.0
    %1229 = vmatpush.msra.mxu0 0.0
    %1230 = vmatpush.msra.mxu0 %v1209
    %1231 = vmatpush.msra.mxu0 %v1208
    %1232 = vmatpush.msra.mxu0 %v1207
    %1233 = vmatpush.msra.mxu0 %v1206
    %1234 = vmatmul.f32.gmra.mxu0 %v1213
    %v1235 = vpop.f32.mrf.mxu0
    %v1236 = vadd.f32 0.0, %v1235
    %1237 = vmatmul.f32.gmra.mxu0 %v1216
    %v1238 = vpop.f32.mrf.mxu0
    %v1239 = vadd.f32 0.0, %v1238
    %1240 = vdwg.mxu0
    %v1242 = vperm.slane %v1210, 0
    %v1244 = vmul.f32 %v1236, %v1242
    %v1245 = vmul.f32 %v1239, %v1242
    %v1246 = vsel %vm254, %v1244, 0.0
    %1247 = vadd.xlane.f32.xlu0 %v1246
    %v1248 = vpop.xlane.xlu0 %1247
    %v1249 = vsel %vm254, %v1245, 0.0
    %1250 = vadd.xlane.f32.xlu0 %v1249
    %v1251 = vpop.xlane.xlu0 %1250
    %v1253 = vperm.slane %v1211, 0
    %v1255 = vmul.f32 %v1236, %v1253
    %v1256 = vmul.f32 %v1239, %v1253
    %v1257 = vsel %vm254, %v1255, 0.0
    %1258 = vadd.xlane.f32.xlu0 %v1257
    %v1259 = vpop.xlane.xlu0 %1258
    %v1260 = vsel %vm254, %v1256, 0.0
    %1261 = vadd.xlane.f32.xlu0 %v1260
    %v1262 = vpop.xlane.xlu0 %1261
    %v1265 = vperm.slane %v1259, %v408
    %v1266 = vperm.slane %v1262, %v410
    %v1267 = vsel %vm412, %v1266, %v1265
    %v1268 = vsel %vm414, %v1267, %v1267
    %v1269 = vsel %vm416, %v1267, %v1268
    %v1270 = vsel %vm418, %v1267, %v1269
    %v1271 = vsel %vm420, %v1267, %v1270
    %v1272 = vsel %vm422, %v1267, %v1271
    %v1273 = vsel %vm424, %v1267, %v1272
    %v1275 = vadd.f32 %v1248, %v1273
    %v1276 = vadd.f32 %v1251, %v1273
    %vm1277 = vcmp.gt.f32.partialorder %v1275, 0.0
    %vm1278 = vcmp.gt.f32.partialorder %v1276, 0.0
    %v1279 = vmul.f32 %v1275, 0.2
    %v1280 = vmul.f32 %v1276, 0.2
    %v1281 = vsel %vm1277, %v1275, %v1279
    %v1282 = vsel %vm1278, %v1276, %v1280
    %v1283 = vsel %vm435, %v1281, -9e+15
    %v1284 = vsel %vm436, %v1282, -9e+15
    %v1285 = vsel %vm331, %v1283, -inf
    %1286 = vmax.xlane.f32.xlu0 %v1285
    %v1287 = vpop.xlane.xlu0 %1286
    %v1288 = vsel %vm331, %v1284, -inf
    %1289 = vmax.xlane.f32.xlu0 %v1288
    %v1290 = vpop.xlane.xlu0 %1289
    %v1291 = vsub.f32 %v1283, %v1287
    %v1292 = vsub.f32 %v1284, %v1290
    %v1293 = vmul.f32 %v1291, 1.442695
    %v1294 = vpow.pop %v1293
    %v1295 = vmul.f32 %v1292, 1.442695
    %v1296 = vpow.pop %v1295
    %v1297 = vsel %vm331, %v1294, 0.0
    %1298 = vadd.xlane.f32.xlu0 %v1297
    %v1299 = vpop.xlane.xlu0 %1298
    %v1300 = vsel %vm331, %v1296, 0.0
    %1301 = vadd.xlane.f32.xlu0 %v1300
    %v1302 = vpop.xlane.xlu0 %1301
    %v1303 = vrcp.pop %v1299
    %v1304 = vrcp.pop %v1302
    %v1305 = vmul.f32 %v1294, %v1303
    %v1306 = vmul.f32 %v1296, %v1304
    %v1308 = vsel %vm331, %v1305, 0
    %v1311 = vsel %vm331, %v1306, 0
    %1313 = vmatpush.msra.mxu0 0.0
    %1314 = vmatpush.msra.mxu0 0.0
    %1315 = vmatpush.msra.mxu0 0.0
    %1316 = vmatpush.msra.mxu0 0.0
    %1317 = vmatpush.msra.mxu0 0.0
    %1318 = vmatpush.msra.mxu0 0.0
    %1319 = vmatpush.msra.mxu0 0.0
    %1320 = vmatpush.msra.mxu0 0.0
    %1321 = vmatpush.msra.mxu0 0.0
    %1322 = vmatpush.msra.mxu0 0.0
    %1323 = vmatpush.msra.mxu0 0.0
    %1324 = vmatpush.msra.mxu0 0.0
    %1325 = vmatpush.msra.mxu0 0.0
    %1326 = vmatpush.msra.mxu0 0.0
    %1327 = vmatpush.msra.mxu0 %v1239
    %1328 = vmatpush.msra.mxu0 %v1236
    %1329 = vmatmul.f32.gmra.mxu0 %v1308
    %v1330 = vpop.f32.mrf.mxu0
    %v1331 = vadd.f32 0.0, %v1330
    %1332 = vmatmul.f32.gmra.mxu0 %v1311
    %v1333 = vpop.f32.mrf.mxu0
    %v1334 = vadd.f32 0.0, %v1333
    %1335 = vdwg.mxu0
    %vm1336 = vcmp.gt.f32.partialorder %v1331, 0.0
    %vm1337 = vcmp.gt.f32.partialorder %v1334, 0.0
    %v1338 = vmin.f32 %v1331, 0.0
    %v1339 = vmin.f32 %v1334, 0.0
    %v1340 = vmul.f32 %v1338, 1.442695
    %v1341 = vpow.pop %v1340
    %v1342 = vmul.f32 %v1339, 1.442695
    %v1343 = vpow.pop %v1342
    %v1344 = vsub.f32 %v1341, 1.0
    %v1345 = vsub.f32 %v1343, 1.0
    %v1346 = vsel %vm1336, %v1331, %v1344
    %v1347 = vsel %vm1337, %v1334, %v1345
    %v1348 = vld [vmem:[%s77] sm:$0xff]
    %v1349 = vld [vmem:[%s77 + $0x8] sm:$0xff]
    %v1350 = vld [vmem:[%s77 + $0x10] sm:$0xff]
    %v1351 = vld [vmem:[%s77 + $0x18] sm:$0xff]
    %v1352 = vld [vmem:[%s77 + $0x20] sm:$0xff]
    %v1353 = vld [vmem:[%s77 + $0x28] sm:$0xff]
    %v1354 = vld [vmem:[%s77 + $0x30] sm:$0xff]
    %v1355 = vld [vmem:[%s77 + $0x38] sm:$0xff]
    %v1356 = vld [vmem:[%s79] sm:$0x1]
    %v1357 = vld [vmem:[%s81] sm:$0x1]
    %v1359 = vsel %vm254, %v1346, 0
    %v1362 = vsel %vm254, %v1347, 0
    %1364 = vmatpush.msra.mxu0 0.0
    %1365 = vmatpush.msra.mxu0 0.0
    %1366 = vmatpush.msra.mxu0 0.0
    %1367 = vmatpush.msra.mxu0 0.0
    %1368 = vmatpush.msra.mxu0 0.0
    %1369 = vmatpush.msra.mxu0 0.0
    %1370 = vmatpush.msra.mxu0 0.0
    %1371 = vmatpush.msra.mxu0 0.0
    %1372 = vmatpush.msra.mxu0 %v1355
    %1373 = vmatpush.msra.mxu0 %v1354
    %1374 = vmatpush.msra.mxu0 %v1353
    %1375 = vmatpush.msra.mxu0 %v1352
    %1376 = vmatpush.msra.mxu0 %v1351
    %1377 = vmatpush.msra.mxu0 %v1350
    %1378 = vmatpush.msra.mxu0 %v1349
    %1379 = vmatpush.msra.mxu0 %v1348
    %1380 = vmatmul.f32.gmra.mxu0 %v1359
    %v1381 = vpop.f32.mrf.mxu0
    %v1382 = vadd.f32 0.0, %v1381
    %1383 = vmatmul.f32.gmra.mxu0 %v1362
    %v1384 = vpop.f32.mrf.mxu0
    %v1385 = vadd.f32 0.0, %v1384
    %1386 = vdwg.mxu0
    %v1388 = vperm.slane %v1356, 0
    %v1390 = vmul.f32 %v1382, %v1388
    %v1391 = vmul.f32 %v1385, %v1388
    %v1392 = vsel %vm204, %v1390, 0.0
    %1393 = vadd.xlane.f32.xlu0 %v1392
    %v1394 = vpop.xlane.xlu0 %1393
    %v1395 = vsel %vm204, %v1391, 0.0
    %1396 = vadd.xlane.f32.xlu0 %v1395
    %v1397 = vpop.xlane.xlu0 %1396
    %v1399 = vperm.slane %v1357, 0
    %v1401 = vmul.f32 %v1382, %v1399
    %v1402 = vmul.f32 %v1385, %v1399
    %v1403 = vsel %vm204, %v1401, 0.0
    %1404 = vadd.xlane.f32.xlu0 %v1403
    %v1405 = vpop.xlane.xlu0 %1404
    %v1406 = vsel %vm204, %v1402, 0.0
    %1407 = vadd.xlane.f32.xlu0 %v1406
    %v1408 = vpop.xlane.xlu0 %1407
    %v1411 = vperm.slane %v1405, %v408
    %v1412 = vperm.slane %v1408, %v410
    %v1413 = vsel %vm412, %v1412, %v1411
    %v1414 = vsel %vm414, %v1413, %v1413
    %v1415 = vsel %vm416, %v1413, %v1414
    %v1416 = vsel %vm418, %v1413, %v1415
    %v1417 = vsel %vm420, %v1413, %v1416
    %v1418 = vsel %vm422, %v1413, %v1417
    %v1419 = vsel %vm424, %v1413, %v1418
    %v1421 = vadd.f32 %v1394, %v1419
    %v1422 = vadd.f32 %v1397, %v1419
    %vm1423 = vcmp.gt.f32.partialorder %v1421, 0.0
    %vm1424 = vcmp.gt.f32.partialorder %v1422, 0.0
    %v1425 = vmul.f32 %v1421, 0.2
    %v1426 = vmul.f32 %v1422, 0.2
    %v1427 = vsel %vm1423, %v1421, %v1425
    %v1428 = vsel %vm1424, %v1422, %v1426
    %v1429 = vsel %vm435, %v1427, -9e+15
    %v1430 = vsel %vm436, %v1428, -9e+15
    %v1431 = vsel %vm331, %v1429, -inf
    %1432 = vmax.xlane.f32.xlu0 %v1431
    %v1433 = vpop.xlane.xlu0 %1432
    %v1434 = vsel %vm331, %v1430, -inf
    %1435 = vmax.xlane.f32.xlu0 %v1434
    %v1436 = vpop.xlane.xlu0 %1435
    %v1437 = vsub.f32 %v1429, %v1433
    %v1438 = vsub.f32 %v1430, %v1436
    %v1439 = vmul.f32 %v1437, 1.442695
    %v1440 = vpow.pop %v1439
    %v1441 = vmul.f32 %v1438, 1.442695
    %v1442 = vpow.pop %v1441
    %v1443 = vsel %vm331, %v1440, 0.0
    %1444 = vadd.xlane.f32.xlu0 %v1443
    %v1445 = vpop.xlane.xlu0 %1444
    %v1446 = vsel %vm331, %v1442, 0.0
    %1447 = vadd.xlane.f32.xlu0 %v1446
    %v1448 = vpop.xlane.xlu0 %1447
    %v1449 = vrcp.pop %v1445
    %v1450 = vrcp.pop %v1448
    %v1451 = vmul.f32 %v1440, %v1449
    %v1452 = vmul.f32 %v1442, %v1450
    %v1454 = vsel %vm331, %v1451, 0
    %v1457 = vsel %vm331, %v1452, 0
    %1459 = vmatpush.msra.mxu0 0.0
    %1460 = vmatpush.msra.mxu0 0.0
    %1461 = vmatpush.msra.mxu0 0.0
    %1462 = vmatpush.msra.mxu0 0.0
    %1463 = vmatpush.msra.mxu0 0.0
    %1464 = vmatpush.msra.mxu0 0.0
    %1465 = vmatpush.msra.mxu0 0.0
    %1466 = vmatpush.msra.mxu0 0.0
    %1467 = vmatpush.msra.mxu0 0.0
    %1468 = vmatpush.msra.mxu0 0.0
    %1469 = vmatpush.msra.mxu0 0.0
    %1470 = vmatpush.msra.mxu0 0.0
    %1471 = vmatpush.msra.mxu0 0.0
    %1472 = vmatpush.msra.mxu0 0.0
    %1473 = vmatpush.msra.mxu0 %v1385
    %1474 = vmatpush.msra.mxu0 %v1382
    %1475 = vmatmul.f32.gmra.mxu0 %v1454
    %v1476 = vpop.f32.mrf.mxu0
    %v1477 = vadd.f32 0.0, %v1476
    %1478 = vmatmul.f32.gmra.mxu0 %v1457
    %v1479 = vpop.f32.mrf.mxu0
    %v1480 = vadd.f32 0.0, %v1479
    %1481 = vdwg.mxu0
    %1482 = vmatpush.xpose.msra.mxu0 0.0
    %1483 = vmatpush.xpose.msra.mxu0 0.0
    %1484 = vmatpush.xpose.msra.mxu0 0.0
    %1485 = vmatpush.xpose.msra.mxu0 0.0
    %1486 = vmatpush.xpose.msra.mxu0 0.0
    %1487 = vmatpush.xpose.msra.mxu0 0.0
    %1488 = vmatpush.xpose.msra.mxu0 0.0
    %1489 = vmatpush.xpose.msra.mxu0 0.0
    %1490 = vmatpush.xpose.msra.mxu0 0.0
    %1491 = vmatpush.xpose.msra.mxu0 0.0
    %1492 = vmatpush.xpose.msra.mxu0 0.0
    %1493 = vmatpush.xpose.msra.mxu0 0.0
    %1494 = vmatpush.xpose.msra.mxu0 0.0
    %1495 = vmatpush.xpose.msra.mxu0 0.0
    %1496 = vmatpush.xpose.msra.mxu0 %v934
    %1497 = vmatpush.xpose.msra.mxu0 %v931
    %1498 = vmatmul.f32.gmra.mxu0 %v931
    %v1499 = vpop.f32.mrf.mxu0
    %v1500 = vadd.f32 0.0, %v1499
    %1501 = vmatmul.f32.gmra.mxu0 %v934
    %v1502 = vpop.f32.mrf.mxu0
    %v1503 = vadd.f32 0.0, %v1502
    %1504 = vdwg.mxu0
    %v1505 = vxor.u32 %v1500, 2147483648
    %v1506 = vxor.u32 %v1503, 2147483648
    %v1507 = vmul.f32 %v1505, 1.442695
    %v1508 = vpow.pop %v1507
    %v1509 = vmul.f32 %v1506, 1.442695
    %v1510 = vpow.pop %v1509
    %v1511 = vadd.f32 %v1508, 1.0
    %v1512 = vadd.f32 %v1510, 1.0
    %v1513 = vrcp.pop %v1511
    %v1514 = vmul.f32 %v1511, %v1513
    %v1515 = vsub.f32 1.0, %v1514
    %v1516 = vmul.f32 %v1513, %v1515
    %v1517 = vadd.f32 %v1513, %v1516
    %vm1518 = vweird.f32 %v1511
    %vm1519 = vweird.f32 %v1513
    %vm1520 = vmor %vm1518, %vm1519
    %v1521 = vsel %vm1520, %v1513, %v1517
    %v1522 = vand.u32 2147483647, %v1511
    %vm1523 = vcmp.eq.f32.partialorder %v1522, 8.507059e+37
    %v1524 = vand.u32 %v1511, 2147483648
    %v1525 = vor.u32 1.1754944e-38, %v1524
    %v1526 = vsel %vm1523, %v1525, %v1521
    %v1527 = vmul.f32 1.0, %v1526
    %v1528 = vrcp.pop %v1512
    %v1529 = vmul.f32 %v1512, %v1528
    %v1530 = vsub.f32 1.0, %v1529
    %v1531 = vmul.f32 %v1528, %v1530
    %v1532 = vadd.f32 %v1528, %v1531
    %vm1533 = vweird.f32 %v1512
    %vm1534 = vweird.f32 %v1528
    %vm1535 = vmor %vm1533, %vm1534
    %v1536 = vsel %vm1535, %v1528, %v1532
    %v1537 = vand.u32 2147483647, %v1512
    %vm1538 = vcmp.eq.f32.partialorder %v1537, 8.507059e+37
    %v1539 = vand.u32 %v1512, 2147483648
    %v1540 = vor.u32 1.1754944e-38, %v1539
    %v1541 = vsel %vm1538, %v1540, %v1536
    %v1542 = vmul.f32 1.0, %v1541
    %v1543 = vmul.f32 %v356, 0.5
    %v1544 = vmul.f32 %v359, 0.5
    %v1545 = vmul.f32 %v922, 0.5
    %v1546 = vmul.f32 %v925, 0.5
    %v1547 = vadd.f32 %v1543, %v1545
    %v1548 = vadd.f32 %v1544, %v1546
    %v1549 = vld [vmem:[%s21] sm:$0xff]
    %v1550 = vld [vmem:[%s23] sm:$0x1]
    %v1552 = vperm.slane %v1550, 0
    %v1555 = vsel %vm836, %v356, 0
    %v1558 = vsel %vm836, %v359, 0
    %1560 = vmatpush.msra.mxu0 0.0
    %1561 = vmatpush.msra.mxu0 0.0
    %1562 = vmatpush.msra.mxu0 0.0
    %1563 = vmatpush.msra.mxu0 0.0
    %1564 = vmatpush.msra.mxu0 0.0
    %1565 = vmatpush.msra.mxu0 0.0
    %1566 = vmatpush.msra.mxu0 0.0
    %1567 = vmatpush.msra.mxu0 0.0
    %1568 = vmatpush.msra.mxu0 0.0
    %1569 = vmatpush.msra.mxu0 0.0
    %1570 = vmatpush.msra.mxu0 0.0
    %1571 = vmatpush.msra.mxu0 0.0
    %1572 = vmatpush.msra.mxu0 0.0
    %1573 = vmatpush.msra.mxu0 0.0
    %1574 = vmatpush.msra.mxu0 0.0
    %1575 = vmatpush.msra.mxu0 %v1549
    %1576 = vmatmul.f32.gmra.mxu0 %v1555
    %v1577 = vpop.f32.mrf.mxu0
    %v1578 = vadd.f32 %v1552, %v1577
    %1579 = vmatmul.f32.gmra.mxu0 %v1558
    %v1580 = vpop.f32.mrf.mxu0
    %v1581 = vadd.f32 %v1552, %v1580
    %1582 = vdwg.mxu0
    %v1583 = vmax.f32 %v1578, 0.0
    %v1584 = vmax.f32 %v1581, 0.0
    %v1585 = vld [vmem:[%s25] sm:$0xff]
    %v1586 = vld [vmem:[%s25 + $0x8] sm:$0xff]
    %v1587 = vld [vmem:[%s27] sm:$0x1]
    %v1589 = vperm.slane %v1587, 0
    %v1592 = vsel %vm331, %v1583, 0
    %v1595 = vsel %vm331, %v1584, 0
    %1597 = vmatpush.msra.mxu0 0.0
    %1598 = vmatpush.msra.mxu0 0.0
    %1599 = vmatpush.msra.mxu0 0.0
    %1600 = vmatpush.msra.mxu0 0.0
    %1601 = vmatpush.msra.mxu0 0.0
    %1602 = vmatpush.msra.mxu0 0.0
    %1603 = vmatpush.msra.mxu0 0.0
    %1604 = vmatpush.msra.mxu0 0.0
    %1605 = vmatpush.msra.mxu0 0.0
    %1606 = vmatpush.msra.mxu0 0.0
    %1607 = vmatpush.msra.mxu0 0.0
    %1608 = vmatpush.msra.mxu0 0.0
    %1609 = vmatpush.msra.mxu0 0.0
    %1610 = vmatpush.msra.mxu0 0.0
    %1611 = vmatpush.msra.mxu0 %v1586
    %1612 = vmatpush.msra.mxu0 %v1585
    %1613 = vmatmul.f32.gmra.mxu0 %v1592
    %v1614 = vpop.f32.mrf.mxu0
    %v1615 = vadd.f32 %v1589, %v1614
    %1616 = vmatmul.f32.gmra.mxu0 %v1595
    %v1617 = vpop.f32.mrf.mxu0
    %v1618 = vadd.f32 %v1589, %v1617
    %1619 = vdwg.mxu0
    %v1620 = vmax.f32 %v1615, 0.0
    %v1621 = vmax.f32 %v1618, 0.0
    %v1622 = vld [vmem:[%s29] sm:$0xff]
    %v1623 = vld [vmem:[%s29 + $0x8] sm:$0xff]
    %v1624 = vld [vmem:[%s29 + $0x10] sm:$0xff]
    %v1625 = vld [vmem:[%s29 + $0x18] sm:$0xff]
    %v1626 = vld [vmem:[%s31] sm:$0x1]
    %v1628 = vperm.slane %v1626, 0
    %v1631 = vsel %vm204, %v1620, 0
    %v1634 = vsel %vm204, %v1621, 0
    %1636 = vmatpush.msra.mxu0 0.0
    %1637 = vmatpush.msra.mxu0 0.0
    %1638 = vmatpush.msra.mxu0 0.0
    %1639 = vmatpush.msra.mxu0 0.0
    %1640 = vmatpush.msra.mxu0 0.0
    %1641 = vmatpush.msra.mxu0 0.0
    %1642 = vmatpush.msra.mxu0 0.0
    %1643 = vmatpush.msra.mxu0 0.0
    %1644 = vmatpush.msra.mxu0 0.0
    %1645 = vmatpush.msra.mxu0 0.0
    %1646 = vmatpush.msra.mxu0 0.0
    %1647 = vmatpush.msra.mxu0 0.0
    %1648 = vmatpush.msra.mxu0 %v1625
    %1649 = vmatpush.msra.mxu0 %v1624
    %1650 = vmatpush.msra.mxu0 %v1623
    %1651 = vmatpush.msra.mxu0 %v1622
    %1652 = vmatmul.f32.gmra.mxu0 %v1631
    %v1653 = vpop.f32.mrf.mxu0
    %v1654 = vadd.f32 %v1628, %v1653
    %1655 = vmatmul.f32.gmra.mxu0 %v1634
    %v1656 = vpop.f32.mrf.mxu0
    %v1657 = vadd.f32 %v1628, %v1656
    %1658 = vdwg.mxu0
    %v1659 = vmax.f32 %v1654, 0.0
    %v1660 = vmax.f32 %v1657, 0.0
    %v1661 = vld [vmem:[%s33] sm:$0xff]
    %v1662 = vld [vmem:[%s33 + $0x8] sm:$0xff]
    %v1663 = vld [vmem:[%s33 + $0x10] sm:$0xff]
    %v1664 = vld [vmem:[%s33 + $0x18] sm:$0xff]
    %v1665 = vld [vmem:[%s33 + $0x20] sm:$0xff]
    %v1666 = vld [vmem:[%s33 + $0x28] sm:$0xff]
    %v1667 = vld [vmem:[%s33 + $0x30] sm:$0xff]
    %v1668 = vld [vmem:[%s33 + $0x38] sm:$0xff]
    %v1669 = vld [vmem:[%s35] sm:$0x1]
    %v1671 = vperm.slane %v1669, 0
    %v1674 = vsel %vm254, %v1659, 0
    %v1677 = vsel %vm254, %v1660, 0
    %1679 = vmatpush.msra.mxu0 0.0
    %1680 = vmatpush.msra.mxu0 0.0
    %1681 = vmatpush.msra.mxu0 0.0
    %1682 = vmatpush.msra.mxu0 0.0
    %1683 = vmatpush.msra.mxu0 0.0
    %1684 = vmatpush.msra.mxu0 0.0
    %1685 = vmatpush.msra.mxu0 0.0
    %1686 = vmatpush.msra.mxu0 0.0
    %1687 = vmatpush.msra.mxu0 %v1668
    %1688 = vmatpush.msra.mxu0 %v1667
    %1689 = vmatpush.msra.mxu0 %v1666
    %1690 = vmatpush.msra.mxu0 %v1665
    %1691 = vmatpush.msra.mxu0 %v1664
    %1692 = vmatpush.msra.mxu0 %v1663
    %1693 = vmatpush.msra.mxu0 %v1662
    %1694 = vmatpush.msra.mxu0 %v1661
    %1695 = vmatmul.f32.gmra.mxu0 %v1674
    %v1696 = vpop.f32.mrf.mxu0
    %v1697 = vadd.f32 %v1671, %v1696
    %1698 = vmatmul.f32.gmra.mxu0 %v1677
    %v1699 = vpop.f32.mrf.mxu0
    %v1700 = vadd.f32 %v1671, %v1699
    %1701 = vdwg.mxu0
    %1702 = vmatpush.xpose.msra.mxu0 0.0
    %1703 = vmatpush.xpose.msra.mxu0 0.0
    %1704 = vmatpush.xpose.msra.mxu0 0.0
    %1705 = vmatpush.xpose.msra.mxu0 0.0
    %1706 = vmatpush.xpose.msra.mxu0 0.0
    %1707 = vmatpush.xpose.msra.mxu0 0.0
    %1708 = vmatpush.xpose.msra.mxu0 0.0
    %1709 = vmatpush.xpose.msra.mxu0 0.0
    %1710 = vmatpush.xpose.msra.mxu0 0.0
    %1711 = vmatpush.xpose.msra.mxu0 0.0
    %1712 = vmatpush.xpose.msra.mxu0 0.0
    %1713 = vmatpush.xpose.msra.mxu0 0.0
    %1714 = vmatpush.xpose.msra.mxu0 0.0
    %1715 = vmatpush.xpose.msra.mxu0 0.0
    %1716 = vmatpush.xpose.msra.mxu0 %v1558
    %1717 = vmatpush.xpose.msra.mxu0 %v1555
    %1718 = vmatmul.f32.gmra.mxu0 %v1555
    %v1719 = vpop.f32.mrf.mxu0
    %v1720 = vadd.f32 0.0, %v1719
    %1721 = vmatmul.f32.gmra.mxu0 %v1558
    %v1722 = vpop.f32.mrf.mxu0
    %v1723 = vadd.f32 0.0, %v1722
    %1724 = vdwg.mxu0
    %v1725 = vxor.u32 %v1720, 2147483648
    %v1726 = vxor.u32 %v1723, 2147483648
    %v1727 = vmul.f32 %v1725, 1.442695
    %v1728 = vpow.pop %v1727
    %v1729 = vmul.f32 %v1726, 1.442695
    %v1730 = vpow.pop %v1729
    %v1731 = vadd.f32 %v1728, 1.0
    %v1732 = vadd.f32 %v1730, 1.0
    %v1733 = vrcp.pop %v1731
    %v1734 = vmul.f32 %v1731, %v1733
    %v1735 = vsub.f32 1.0, %v1734
    %v1736 = vmul.f32 %v1733, %v1735
    %v1737 = vadd.f32 %v1733, %v1736
    %vm1738 = vweird.f32 %v1731
    %vm1739 = vweird.f32 %v1733
    %vm1740 = vmor %vm1738, %vm1739
    %v1741 = vsel %vm1740, %v1733, %v1737
    %v1742 = vand.u32 2147483647, %v1731
    %vm1743 = vcmp.eq.f32.partialorder %v1742, 8.507059e+37
    %v1744 = vand.u32 %v1731, 2147483648
    %v1745 = vor.u32 1.1754944e-38, %v1744
    %v1746 = vsel %vm1743, %v1745, %v1741
    %v1747 = vmul.f32 1.0, %v1746
    %v1748 = vrcp.pop %v1732
    %v1749 = vmul.f32 %v1732, %v1748
    %v1750 = vsub.f32 1.0, %v1749
    %v1751 = vmul.f32 %v1748, %v1750
    %v1752 = vadd.f32 %v1748, %v1751
    %vm1753 = vweird.f32 %v1732
    %vm1754 = vweird.f32 %v1748
    %vm1755 = vmor %vm1753, %vm1754
    %v1756 = vsel %vm1755, %v1748, %v1752
    %v1757 = vand.u32 2147483647, %v1732
    %vm1758 = vcmp.eq.f32.partialorder %v1757, 8.507059e+37
    %v1759 = vand.u32 %v1732, 2147483648
    %v1760 = vor.u32 1.1754944e-38, %v1759
    %v1761 = vsel %vm1758, %v1760, %v1756
    %v1762 = vmul.f32 1.0, %v1761
    %v1764 = vsel %vm836, %v1547, 0
    %v1767 = vsel %vm836, %v1548, 0
    %1769 = vmatpush.xpose.msra.mxu0 0.0
    %1770 = vmatpush.xpose.msra.mxu0 0.0
    %1771 = vmatpush.xpose.msra.mxu0 0.0
    %1772 = vmatpush.xpose.msra.mxu0 0.0
    %1773 = vmatpush.xpose.msra.mxu0 0.0
    %1774 = vmatpush.xpose.msra.mxu0 0.0
    %1775 = vmatpush.xpose.msra.mxu0 0.0
    %1776 = vmatpush.xpose.msra.mxu0 0.0
    %1777 = vmatpush.xpose.msra.mxu0 0.0
    %1778 = vmatpush.xpose.msra.mxu0 0.0
    %1779 = vmatpush.xpose.msra.mxu0 0.0
    %1780 = vmatpush.xpose.msra.mxu0 0.0
    %1781 = vmatpush.xpose.msra.mxu0 0.0
    %1782 = vmatpush.xpose.msra.mxu0 0.0
    %1783 = vmatpush.xpose.msra.mxu0 %v1767
    %1784 = vmatpush.xpose.msra.mxu0 %v1764
    %1785 = vmatmul.f32.gmra.mxu0 %v1764
    %v1786 = vpop.f32.mrf.mxu0
    %v1787 = vadd.f32 0.0, %v1786
    %1788 = vmatmul.f32.gmra.mxu0 %v1767
    %v1789 = vpop.f32.mrf.mxu0
    %v1790 = vadd.f32 0.0, %v1789
    %1791 = vdwg.mxu0
    %v1792 = vxor.u32 %v1787, 2147483648
    %v1793 = vxor.u32 %v1790, 2147483648
    %v1794 = vmul.f32 %v1792, 1.442695
    %v1795 = vpow.pop %v1794
    %v1796 = vmul.f32 %v1793, 1.442695
    %v1797 = vpow.pop %v1796
    %v1798 = vadd.f32 %v1795, 1.0
    %v1799 = vadd.f32 %v1797, 1.0
    %v1800 = vrcp.pop %v1798
    %v1801 = vmul.f32 %v1798, %v1800
    %v1802 = vsub.f32 1.0, %v1801
    %v1803 = vmul.f32 %v1800, %v1802
    %v1804 = vadd.f32 %v1800, %v1803
    %vm1805 = vweird.f32 %v1798
    %vm1806 = vweird.f32 %v1800
    %vm1807 = vmor %vm1805, %vm1806
    %v1808 = vsel %vm1807, %v1800, %v1804
    %v1809 = vand.u32 2147483647, %v1798
    %vm1810 = vcmp.eq.f32.partialorder %v1809, 8.507059e+37
    %v1811 = vand.u32 %v1798, 2147483648
    %v1812 = vor.u32 1.1754944e-38, %v1811
    %v1813 = vsel %vm1810, %v1812, %v1808
    %v1814 = vmul.f32 1.0, %v1813
    %v1815 = vrcp.pop %v1799
    %v1816 = vmul.f32 %v1799, %v1815
    %v1817 = vsub.f32 1.0, %v1816
    %v1818 = vmul.f32 %v1815, %v1817
    %v1819 = vadd.f32 %v1815, %v1818
    %vm1820 = vweird.f32 %v1799
    %vm1821 = vweird.f32 %v1815
    %vm1822 = vmor %vm1820, %vm1821
    %v1823 = vsel %vm1822, %v1815, %v1819
    %v1824 = vand.u32 2147483647, %v1799
    %vm1825 = vcmp.eq.f32.partialorder %v1824, 8.507059e+37
    %v1826 = vand.u32 %v1799, 2147483648
    %v1827 = vor.u32 1.1754944e-38, %v1826
    %v1828 = vsel %vm1825, %v1827, %v1823
    %v1829 = vmul.f32 1.0, %v1828
    %v1830 = vld [vmem:[%s83] sm:$0xf]
    %v1831 = vmul.f32 %v356, %v356
    %v1832 = vmul.f32 %v359, %v359
    %v1833 = vsel %vm836, %v1831, 0.0
    %1834 = vadd.xlane.f32.xlu0 %v1833
    %v1835 = vpop.xlane.xlu0 %1834
    %v1836 = vsel %vm836, %v1832, 0.0
    %1837 = vadd.xlane.f32.xlu0 %v1836
    %v1838 = vpop.xlane.xlu0 %1837
    %v1839 = vmul.f32 %v1830, %v1830
    %vm1840 = vcmask 60416
    %v1841 = vsel %vm1840, %v1839, 0.0
    %1842 = vadd.xlane.f32.xlu0 %v1841
    %v1843 = vpop.xlane.xlu0 %1842
    %v1845 = vsel %vm836, %v1830, 0
    %1847 = vmatpush.xpose.msra.mxu0 0.0
    %1848 = vmatpush.xpose.msra.mxu0 0.0
    %1849 = vmatpush.xpose.msra.mxu0 0.0
    %1850 = vmatpush.xpose.msra.mxu0 0.0
    %1851 = vmatpush.xpose.msra.mxu0 0.0
    %1852 = vmatpush.xpose.msra.mxu0 0.0
    %1853 = vmatpush.xpose.msra.mxu0 0.0
    %1854 = vmatpush.xpose.msra.mxu0 0.0
    %1855 = vmatpush.xpose.msra.mxu0 0.0
    %1856 = vmatpush.xpose.msra.mxu0 0.0
    %1857 = vmatpush.xpose.msra.mxu0 0.0
    %1858 = vmatpush.xpose.msra.mxu0 0.0
    %1859 = vmatpush.xpose.msra.mxu0 0.0
    %1860 = vmatpush.xpose.msra.mxu0 0.0
    %1861 = vmatpush.xpose.msra.mxu0 0.0
    %1862 = vmatpush.xpose.msra.mxu0 %v1845
    %1863 = vmatmul.f32.gmra.mxu0 %v1555
    %v1864 = vpop.f32.mrf.mxu0
    %v1865 = vadd.f32 0.0, %v1864
    %1866 = vmatmul.f32.gmra.mxu0 %v1558
    %v1867 = vpop.f32.mrf.mxu0
    %v1868 = vadd.f32 0.0, %v1867
    %1869 = vdwg.mxu0
    %v1871 = vperm.slane %v1843, %v408
    %v1872 = vsel %vm414, %v1871, %v1871
    %v1873 = vsel %vm416, %v1871, %v1872
    %v1874 = vsel %vm418, %v1871, %v1873
    %v1875 = vsel %vm420, %v1871, %v1874
    %v1876 = vsel %vm422, %v1871, %v1875
    %v1877 = vsel %vm424, %v1871, %v1876
    %v1879 = vadd.f32 %v1835, %v1877
    %v1880 = vadd.f32 %v1838, %v1877
    %v1881 = vmul.f32 %v1865, 2.0
    %v1882 = vmul.f32 %v1868, 2.0
    %v1883 = vsub.f32 %v1879, %v1881
    %v1884 = vsub.f32 %v1880, %v1882
    %v1885 = vmax.f32 %v1883, 0.0
    %v1886 = vmax.f32 %v1884, 0.0
    %v1887 = vadd.f32 %v1885, 1.0
    %v1888 = vadd.f32 %v1886, 1.0
    %v1889 = vrcp.pop %v1887
    %v1890 = vrcp.pop %v1888
    %vm1891 = vcmask 31744
    %v1892 = vsel %vm1891, %v1889, 0.0
    %1893 = vadd.xlane.f32.xlu0 %v1892
    %v1894 = vpop.xlane.xlu0 %1893
    %v1895 = vsel %vm1891, %v1890, 0.0
    %1896 = vadd.xlane.f32.xlu0 %v1895
    %v1897 = vpop.xlane.xlu0 %1896
    %v1898 = vrcp.pop %v1894
    %v1899 = vrcp.pop %v1897
    %v1900 = vmul.f32 %v1889, %v1898
    %v1901 = vmul.f32 %v1890, %v1899
    %v1902 = vmul.f32 %v1547, %v1547
    %v1903 = vmul.f32 %v1548, %v1548
    %v1904 = vsel %vm836, %v1902, 0.0
    %1905 = vadd.xlane.f32.xlu0 %v1904
    %v1906 = vpop.xlane.xlu0 %1905
    %v1907 = vsel %vm836, %v1903, 0.0
    %1908 = vadd.xlane.f32.xlu0 %v1907
    %v1909 = vpop.xlane.xlu0 %1908
    %1910 = vmatpush.xpose.msra.mxu0 0.0
    %1911 = vmatpush.xpose.msra.mxu0 0.0
    %1912 = vmatpush.xpose.msra.mxu0 0.0
    %1913 = vmatpush.xpose.msra.mxu0 0.0
    %1914 = vmatpush.xpose.msra.mxu0 0.0
    %1915 = vmatpush.xpose.msra.mxu0 0.0
    %1916 = vmatpush.xpose.msra.mxu0 0.0
    %1917 = vmatpush.xpose.msra.mxu0 0.0
    %1918 = vmatpush.xpose.msra.mxu0 0.0
    %1919 = vmatpush.xpose.msra.mxu0 0.0
    %1920 = vmatpush.xpose.msra.mxu0 0.0
    %1921 = vmatpush.xpose.msra.mxu0 0.0
    %1922 = vmatpush.xpose.msra.mxu0 0.0
    %1923 = vmatpush.xpose.msra.mxu0 0.0
    %1924 = vmatpush.xpose.msra.mxu0 0.0
    %1925 = vmatpush.xpose.msra.mxu0 %v1845
    %1926 = vmatmul.f32.gmra.mxu0 %v1764
    %v1927 = vpop.f32.mrf.mxu0
    %v1928 = vadd.f32 0.0, %v1927
    %1929 = vmatmul.f32.gmra.mxu0 %v1767
    %v1930 = vpop.f32.mrf.mxu0
    %v1931 = vadd.f32 0.0, %v1930
    %1932 = vdwg.mxu0
    %v1933 = vadd.f32 %v1906, %v1877
    %v1934 = vadd.f32 %v1909, %v1877
    %v1935 = vmul.f32 %v1928, 2.0
    %v1936 = vmul.f32 %v1931, 2.0
    %v1937 = vsub.f32 %v1933, %v1935
    %v1938 = vsub.f32 %v1934, %v1936
    %v1939 = vmax.f32 %v1937, 0.0
    %v1940 = vmax.f32 %v1938, 0.0
    %v1941 = vadd.f32 %v1939, 1.0
    %v1942 = vadd.f32 %v1940, 1.0
    %v1943 = vrcp.pop %v1941
    %v1944 = vrcp.pop %v1942
    %v1945 = vsel %vm1891, %v1943, 0.0
    %1946 = vadd.xlane.f32.xlu0 %v1945
    %v1947 = vpop.xlane.xlu0 %1946
    %v1948 = vsel %vm1891, %v1944, 0.0
    %1949 = vadd.xlane.f32.xlu0 %v1948
    %v1950 = vpop.xlane.xlu0 %1949
    %v1951 = vrcp.pop %v1947
    %v1952 = vrcp.pop %v1950
    %v1953 = vmul.f32 %v1943, %v1951
    %v1954 = vmul.f32 %v1944, %v1952
    %1955 = vst.msk [vmem:[#allocation2] sm:$0xff] %vm204, %v1697
    %1956 = vst.msk [vmem:[#allocation2 + $0x8] sm:$0xff] %vm204, %v1700
    %1957 = vst.msk [vmem:[#allocation4] sm:$0xff] %vm331, %v1747
    %1958 = vst.msk [vmem:[#allocation4 + $0x8] sm:$0xff] %vm331, %v1762
    %1959 = vst.msk [vmem:[#allocation6] sm:$0xff] %vm204, %v1477
    %1960 = vst.msk [vmem:[#allocation6 + $0x8] sm:$0xff] %vm204, %v1480
    %1961 = vst.msk [vmem:[#allocation7] sm:$0xff] %vm331, %v1527
    %1962 = vst.msk [vmem:[#allocation7 + $0x8] sm:$0xff] %vm331, %v1542
    %1963 = vst.msk [vmem:[#allocation9] sm:$0xff] %vm331, %v1814
    %1964 = vst.msk [vmem:[#allocation9 + $0x8] sm:$0xff] %vm331, %v1829
    %1965 = vst.msk [vmem:[%s95] sm:$0xff] %vm836, %v356
    %1966 = vst.msk [vmem:[%s95 + $0x8] sm:$0xff] %vm836, %v359
    %1967 = vst.msk [vmem:[%s97] sm:$0xff] %vm836, %v922
    %1968 = vst.msk [vmem:[%s97 + $0x8] sm:$0xff] %vm836, %v925
    %1969 = vst.msk [vmem:[%s99] sm:$0xff] %vm836, %v1547
    %1970 = vst.msk [vmem:[%s99 + $0x8] sm:$0xff] %vm836, %v1548
    %1971 = vst.msk [vmem:[%s101] sm:$0xff] %vm1891, %v1900
    %1972 = vst.msk [vmem:[%s101 + $0x8] sm:$0xff] %vm1891, %v1901
    %1973 = vst.msk [vmem:[%s103] sm:$0xff] %vm1891, %v1953
    %1974 = vst.msk [vmem:[%s103 + $0x8] sm:$0xff] %vm1891, %v1954
    // Predicated region
    $region170: #{combine_forward.1} parent=1 // pred_check
      _
    $region171: #{combine_forward.1} parent=1 // pred_check_branch
      %1976 = sbr.rel (0) target = $region173
    $region172: #{combine_forward.1} parent=1 // pred_region
      %1978 = vsyncadd [#allocation3], 0
      %s1979 = sshll.u32 [#allocation2], 4
      %s1980 = int_to_ptr.vmem [resolvable:$true] %s1979
      %s1981 = sshll.u32 %s85, 4
      %s1982 = int_to_ptr.hbm [resolvable:$true] %s1981
      %1987 = dma.vmem_to_hbm [thread:$0]  %s1980, 256, %s1982, [#allocation3], 128, 128, 8
    $region173: #{combine_forward.1} parent=1 // pred_fallthru
      _
    // Predicated region
    $region174: #{combine_forward.1} parent=1 // pred_check
      _
    $region175: #{combine_forward.1} parent=1 // pred_check_branch
      %1989 = sbr.rel (0) target = $region177
    $region176: #{combine_forward.1} parent=1 // pred_region
      %1991 = vsyncadd [#allocation5], 0
      %s1992 = sshll.u32 [#allocation4], 4
      %s1993 = int_to_ptr.vmem [resolvable:$true] %s1992
      %s1994 = sshll.u32 %s87, 4
      %s1995 = int_to_ptr.hbm [resolvable:$true] %s1994
      %2000 = dma.vmem_to_hbm [thread:$0]  %s1993, 256, %s1995, [#allocation5], 128, 128, 8
    $region177: #{combine_forward.1} parent=1 // pred_fallthru
      _
    // Predicated region
    $region178: #{combine_forward.1} parent=1 // pred_check
      _
    $region179: #{combine_forward.1} parent=1 // pred_check_branch
      %2002 = sbr.rel (0) target = $region181
    $region180: #{combine_forward.1} parent=1 // pred_region
      %2004 = vsyncadd [#allocation5], 0
      %s2005 = sshll.u32 [#allocation6], 4
      %s2006 = int_to_ptr.vmem [resolvable:$true] %s2005
      %s2007 = sshll.u32 %s89, 4
      %s2008 = int_to_ptr.hbm [resolvable:$true] %s2007
      %2013 = dma.vmem_to_hbm [thread:$0]  %s2006, 256, %s2008, [#allocation5], 128, 128, 8
    $region181: #{combine_forward.1} parent=1 // pred_fallthru
      _
    // Predicated region
    $region182: #{combine_forward.1} parent=1 // pred_check
      _
    $region183: #{combine_forward.1} parent=1 // pred_check_branch
      %2015 = sbr.rel (0) target = $region185
    $region184: #{combine_forward.1} parent=1 // pred_region
      %2017 = vsyncadd [#allocation8], 0
      %s2018 = sshll.u32 [#allocation7], 4
      %s2019 = int_to_ptr.vmem [resolvable:$true] %s2018
      %s2020 = sshll.u32 %s91, 4
      %s2021 = int_to_ptr.hbm [resolvable:$true] %s2020
      %2026 = dma.vmem_to_hbm [thread:$0]  %s2019, 256, %s2021, [#allocation8], 128, 128, 8
    $region185: #{combine_forward.1} parent=1 // pred_fallthru
      _
    // Predicated region
    $region186: #{combine_forward.1} parent=1 // pred_check
      _
    $region187: #{combine_forward.1} parent=1 // pred_check_branch
      %2028 = sbr.rel (0) target = $region189
    $region188: #{combine_forward.1} parent=1 // pred_region
      %2030 = vsyncadd [#allocation8], 0
      %s2031 = sshll.u32 [#allocation9], 4
      %s2032 = int_to_ptr.vmem [resolvable:$true] %s2031
      %s2033 = sshll.u32 %s93, 4
      %s2034 = int_to_ptr.hbm [resolvable:$true] %s2033
      %2039 = dma.vmem_to_hbm [thread:$0]  %s2032, 256, %s2034, [#allocation8], 128, 128, 8
    $region189: #{combine_forward.1} parent=1 // pred_fallthru
      _
    // Predicated region
    $region190: #{combine_forward.1} parent=1 // pred_check
      _
    $region191: #{combine_forward.1} parent=1 // pred_check_branch
      %2041 = sbr.rel (0) target = $region193
    $region192: #{combine_forward.1} parent=1 // pred_region
      _
    $region193: #{combine_forward.1} parent=1 // pred_fallthru
      _
    // Predicated region
    $region194: #{combine_forward.1} parent=1 // pred_check
      _
    $region195: #{combine_forward.1} parent=1 // pred_check_branch
      %2043 = sbr.rel (0) target = $region197
    $region196: #{combine_forward.1} parent=1 // pred_region
      _
    $region197: #{combine_forward.1} parent=1 // pred_fallthru
      _
    // Predicated region
    $region198: #{combine_forward.1} parent=1 // pred_check
      _
    $region199: #{combine_forward.1} parent=1 // pred_check_branch
      %2045 = sbr.rel (0) target = $region201
    $region200: #{combine_forward.1} parent=1 // pred_region
      _
    $region201: #{combine_forward.1} parent=1 // pred_fallthru
      _
    // Predicated region
    $region202: #{combine_forward.1} parent=1 // pred_check
      _
    $region203: #{combine_forward.1} parent=1 // pred_check_branch
      %2047 = sbr.rel (0) target = $region205
    $region204: #{combine_forward.1} parent=1 // pred_region
      _
    $region205: #{combine_forward.1} parent=1 // pred_fallthru
      _
    // Predicated region
    $region206: #{combine_forward.1} parent=1 // pred_check
      _
    $region207: #{combine_forward.1} parent=1 // pred_check_branch
      %2049 = sbr.rel (0) target = $region209
    $region208: #{combine_forward.1} parent=1 // pred_region
      _
    $region209: #{combine_forward.1} parent=1 // pred_fallthru
      _
    // Predicated region
    $region210: #{combine_forward.1} parent=1 // pred_check
      _
    $region211: #{combine_forward.1} parent=1 // pred_check_branch
      %2051 = sbr.rel (0) target = $region213
    $region212: #{combine_forward.1} parent=1 // pred_region
      %2053 = dma.done [#allocation3], 256
    $region213: #{combine_forward.1} parent=1 // pred_fallthru
      _
    // Predicated region
    $region214: #{combine_forward.1} parent=1 // pred_check
      _
    $region215: #{combine_forward.1} parent=1 // pred_check_branch
      %2055 = sbr.rel (0) target = $region217
    $region216: #{combine_forward.1} parent=1 // pred_region
      %2057 = dma.done [#allocation5], 256
    $region217: #{combine_forward.1} parent=1 // pred_fallthru
      _
    // Predicated region
    $region218: #{combine_forward.1} parent=1 // pred_check
      _
    $region219: #{combine_forward.1} parent=1 // pred_check_branch
      %2059 = sbr.rel (0) target = $region221
    $region220: #{combine_forward.1} parent=1 // pred_region
      %2061 = dma.done [#allocation5], 256
    $region221: #{combine_forward.1} parent=1 // pred_fallthru
      _
    // Predicated region
    $region222: #{combine_forward.1} parent=1 // pred_check
      _
    $region223: #{combine_forward.1} parent=1 // pred_check_branch
      %2063 = sbr.rel (0) target = $region225
    $region224: #{combine_forward.1} parent=1 // pred_region
      %2065 = dma.done [#allocation8], 256
    $region225: #{combine_forward.1} parent=1 // pred_fallthru
      _
    // Predicated region
    $region226: #{combine_forward.1} parent=1 // pred_check
      _
    $region227: #{combine_forward.1} parent=1 // pred_check_branch
      %2067 = sbr.rel (0) target = $region229
    $region228: #{combine_forward.1} parent=1 // pred_region
      %2069 = dma.done [#allocation8], 256
    $region229: #{combine_forward.1} parent=1 // pred_fallthru
      _
    // Predicated region
    $region230: #{combine_forward.1} parent=1 // pred_check
      _
    $region231: #{combine_forward.1} parent=1 // pred_check_branch
      %2071 = sbr.rel (0) target = $region233
    $region232: #{combine_forward.1} parent=1 // pred_region
      _
    $region233: #{combine_forward.1} parent=1 // pred_fallthru
      _
    // Predicated region
    $region234: #{combine_forward.1} parent=1 // pred_check
      _
    $region235: #{combine_forward.1} parent=1 // pred_check_branch
      %2073 = sbr.rel (0) target = $region237
    $region236: #{combine_forward.1} parent=1 // pred_region
      _
    $region237: #{combine_forward.1} parent=1 // pred_fallthru
      _
    // Predicated region
    $region238: #{combine_forward.1} parent=1 // pred_check
      _
    $region239: #{combine_forward.1} parent=1 // pred_check_branch
      %2075 = sbr.rel (0) target = $region241
    $region240: #{combine_forward.1} parent=1 // pred_region
      _
    $region241: #{combine_forward.1} parent=1 // pred_fallthru
      _
    // Predicated region
    $region242: #{combine_forward.1} parent=1 // pred_check
      _
    $region243: #{combine_forward.1} parent=1 // pred_check_branch
      %2077 = sbr.rel (0) target = $region245
    $region244: #{combine_forward.1} parent=1 // pred_region
      _
    $region245: #{combine_forward.1} parent=1 // pred_fallthru
      _
    // Predicated region
    $region246: #{combine_forward.1} parent=1 // pred_check
      _
    $region247: #{combine_forward.1} parent=1 // pred_check_branch
      %2079 = sbr.rel (0) target = $region249
    $region248: #{combine_forward.1} parent=1 // pred_region
      _
    $region249: #{combine_forward.1} parent=1 // pred_fallthru
      _
    %2080 = vsyncpa [#allocation3], 1
    %2081 = vsyncpa [#allocation5], 1
    %2082 = vsyncpa [#allocation8], 1

</llo_original>
